<compile_context>
chip_gen: v7x
topology: tpu7x:2x2x1
jax: 0.10.0
libtpu: 0.0.40
codegen_flags: <defaults>
</compile_context>

<pallas_src>
import functools

import jax
import jax.numpy as jnp
from jax import lax
from jax.experimental import pallas as pl
from jax.experimental.pallas import tpu as pltpu


# ----------------------------- kernels -------------------------------------


def _gn_silu_conv_kernel(*refs, H, W, G, eps, has_time, has_res):
    """Fused: x [+ time] -> GroupNorm -> SiLU -> 3x3 conv (pad=1) [-> + residual].

    refs (in order):
      x_ref     : (1, H, W, Ci)
      t_ref     : (1, Ci)              [only if has_time]
      M_ref     : (Ci, G)  one-hot channel->group
      MT_ref    : (G, Ci)  one-hot group->channel
      gamma_ref : (1, Ci)
      beta_ref  : (1, Ci)
      w_ref     : (3, 3, Ci, Co)
      b_ref     : (1, Co)
      res_ref   : (1, H, W, Co)        [only if has_res]
      o_ref     : (1, H, W, Co)
      xp_ref    : VMEM scratch (H+2, W+2, Ci)   -- zero-padded activation
      acc_ref   : VMEM scratch (H*W, Co) f32    -- conv accumulator
    """
    it = iter(refs)
    x_ref = next(it)
    t_ref = next(it) if has_time else None
    M_ref = next(it)
    MT_ref = next(it)
    gamma_ref = next(it)
    beta_ref = next(it)
    w_ref = next(it)
    b_ref = next(it)
    res_ref = next(it) if has_res else None
    o_ref = next(it)
    xp_ref = next(it)
    acc_ref = next(it)

    Ci = x_ref.shape[3]
    Co = w_ref.shape[3]
    Cg = Ci // G

    # ---- (optional) time add + GroupNorm stats (f32) ----
    x = x_ref[0].astype(jnp.float32).reshape(H * W, Ci)
    if has_time:
        x = x + t_ref[...].astype(jnp.float32)                # (1, Ci) broadcast

    s = jnp.sum(x, axis=0, keepdims=True)                      # (1, Ci)
    sq = jnp.sum(x * x, axis=0, keepdims=True)                 # (1, Ci)
    cnt = jnp.float32(H * W * Cg)
    mean_g = jnp.dot(s, M_ref[...], preferred_element_type=jnp.float32) / cnt   # (1, G)
    ex2_g = jnp.dot(sq, M_ref[...], preferred_element_type=jnp.float32) / cnt
    var_g = jnp.maximum(ex2_g - mean_g * mean_g, 0.0)          # clamp (E[x^2]-E[x]^2)
    mean_c = jnp.dot(mean_g, MT_ref[...], preferred_element_type=jnp.float32)   # (1, Ci)
    var_c = jnp.dot(var_g, MT_ref[...], preferred_element_type=jnp.float32)
    inv = lax.rsqrt(var_c + eps)

    y = (x - mean_c) * inv * gamma_ref[...].astype(jnp.float32) \
        + beta_ref[...].astype(jnp.float32)
    y = y * jax.nn.sigmoid(y)                                   # SiLU

    # ---- zero-pad fused in VMEM (no HBM round trip) ----
    xp_ref[...] = jnp.zeros_like(xp_ref)
    xp_ref[1:H + 1, 1:W + 1, :] = y.reshape(H, W, Ci).astype(xp_ref.dtype)

    # ---- 3x3 conv as 9 shifted MXU matmuls, f32 accumulation in VMEM scratch ----
    acc_ref[...] = jnp.zeros_like(acc_ref)
    for dh in range(3):
        for dw in range(3):
            patch = xp_ref[dh:dh + H, dw:dw + W, :].reshape(H * W, Ci)
            acc_ref[...] += jnp.dot(patch, w_ref[dh, dw, :, :],
                                    preferred_element_type=jnp.float32)

    out = acc_ref[...] + b_ref[...].astype(jnp.float32)
    if has_res:
        out = out + res_ref[0].astype(jnp.float32).reshape(H * W, Co)
    o_ref[0] = out.reshape(H, W, Co).astype(o_ref.dtype)


def _time_linear_kernel(t_ref, w_ref, b_ref, o_ref):
    """SiLU(time) @ W + b.  t_ref: (N, Dt), w_ref: (Dt, Co), b_ref: (1, Co)."""
    t = t_ref[...].astype(jnp.float32)
    t = (t * jax.nn.sigmoid(t)).astype(w_ref.dtype)
    y = jnp.dot(t, w_ref[...], preferred_element_type=jnp.float32)
    o_ref[...] = (y + b_ref[...].astype(jnp.float32)).astype(o_ref.dtype)


def _conv1x1_kernel(x_ref, w_ref, b_ref, o_ref, *, H, W):
    """1x1 conv (per-pixel channel matmul).  x_ref: (1,H,W,Ci), w_ref: (Ci,Co)."""
    Ci = x_ref.shape[3]
    Co = w_ref.shape[1]
    x = x_ref[0].reshape(H * W, Ci)
    y = jnp.dot(x, w_ref[...], preferred_element_type=jnp.float32)
    y = y + b_ref[...].astype(jnp.float32)
    o_ref[0] = y.reshape(H, W, Co).astype(o_ref.dtype)


# ----------------------------- wrappers ------------------------------------


def gn_silu_conv3x3(x, gamma, beta, w, b, *, t_emb=None, res=None, groups=32, eps=1e-5):
    """Fused [+time] -> GroupNorm(groups) -> SiLU -> conv3x3(pad=1) [-> +res]."""
    N, H, W, Ci = x.shape
    Co = w.shape[3]
    G = groups
    Cg = Ci // G

    # Host-side one-hot group matrices (tiny constants; hoisted out of the kernel).
    ch = jnp.arange(Ci, dtype=jnp.int32) // Cg
    gr = jnp.arange(G, dtype=jnp.int32)
    M = (ch[:, None] == gr[None, :]).astype(jnp.float32)        # (Ci, G)
    MT = jnp.transpose(M)                                       # (G, Ci)

    has_time = t_emb is not None
    has_res = res is not None

    kernel = functools.partial(_gn_silu_conv_kernel, H=H, W=W, G=G, eps=eps,
                               has_time=has_time, has_res=has_res)

    inputs = [x]
    in_specs = [pl.BlockSpec((1, H, W, Ci), lambda n: (n, 0, 0, 0))]
    if has_time:
        inputs.append(t_emb)
        in_specs.append(pl.BlockSpec((1, Ci), lambda n: (n, 0)))
    inputs += [M, MT, gamma, beta, w, b]
    in_specs += [
        pl.BlockSpec((Ci, G), lambda n: (0, 0)),
        pl.BlockSpec((G, Ci), lambda n: (0, 0)),
        pl.BlockSpec((1, Ci), lambda n: (0, 0)),
        pl.BlockSpec((1, Ci), lambda n: (0, 0)),
        pl.BlockSpec((3, 3, Ci, Co), lambda n: (0, 0, 0, 0)),
        pl.BlockSpec((1, Co), lambda n: (0, 0)),
    ]
    if has_res:
        inputs.append(res)
        in_specs.append(pl.BlockSpec((1, H, W, Co), lambda n: (n, 0, 0, 0)))

    itemsize = jnp.dtype(x.dtype).itemsize
    flops = N * (2 * H * W * 9 * Ci * Co + 12 * H * W * Ci)
    bytes_accessed = itemsize * (x.size + N * H * W * Co + w.size
                                 + (res.size if has_res else 0)
                                 + (t_emb.size if has_time else 0)
                                 + 2 * Ci + Co + 2 * Ci * G)
    cost = pl.CostEstimate(flops=int(flops),
                           transcendentals=int(N * H * W * Ci),
                           bytes_accessed=int(bytes_accessed))

    return pl.pallas_call(
        kernel,
        out_shape=jax.ShapeDtypeStruct((N, H, W, Co), x.dtype),
        grid=(N,),
        in_specs=in_specs,
        out_specs=pl.BlockSpec((1, H, W, Co), lambda n: (n, 0, 0, 0)),
        scratch_shapes=[
            pltpu.VMEM((H + 2, W + 2, Ci), x.dtype),     # zero-padded activation
            pltpu.VMEM((H * W, Co), jnp.float32),        # conv accumulator
        ],
        compiler_params=pltpu.CompilerParams(dimension_semantics=("parallel",)),
        cost_estimate=cost,
    )(*inputs)


def time_linear(t, w, b):
    N = t.shape[0]
    Co = w.shape[1]
    return pl.pallas_call(
        _time_linear_kernel,
        out_shape=jax.ShapeDtypeStruct((N, Co), t.dtype),
    )(t, w, b)


def conv1x1(x, w, b):
    N, H, W, Ci = x.shape
    Co = w.shape[1]
    kernel = functools.partial(_conv1x1_kernel, H=H, W=W)
    itemsize = jnp.dtype(x.dtype).itemsize
    cost = pl.CostEstimate(flops=int(2 * N * H * W * Ci * Co),
                           transcendentals=0,
                           bytes_accessed=int(itemsize * (x.size + N * H * W * Co
                                                          + Ci * Co + Co)))
    return pl.pallas_call(
        kernel,
        out_shape=jax.ShapeDtypeStruct((N, H, W, Co), x.dtype),
        grid=(N,),
        in_specs=[
            pl.BlockSpec((1, H, W, Ci), lambda n: (n, 0, 0, 0)),
            pl.BlockSpec((Ci, Co), lambda n: (0, 0)),
            pl.BlockSpec((1, Co), lambda n: (0, 0)),
        ],
        out_specs=pl.BlockSpec((1, H, W, Co), lambda n: (n, 0, 0, 0)),
        compiler_params=pltpu.CompilerParams(dimension_semantics=("parallel",)),
        cost_estimate=cost,
    )(x, w, b)


def unet_residual_block(feature_nchw, time, params, *, groups=32, eps=1e-5):
    """Mirrors UNET_ResidualBlock.forward.  feature_nchw: (N,Cin,H,W), time: (N,n_time)."""
    x = jnp.transpose(feature_nchw, (0, 2, 3, 1))               # NCHW -> NHWC
    N, H, W, Cin = x.shape
    Cout = params["conv_feature_w"].shape[3]

    # Stage 1 (fused): GN1 -> SiLU -> conv_feature (pad fused, no zero residual/time read)
    f = gn_silu_conv3x3(x, params["gn1_gamma"], params["gn1_beta"],
                        params["conv_feature_w"], params["conv_feature_b"],
                        groups=groups, eps=eps)

    # time embedding: SiLU(time) @ W + b
    t_emb = time_linear(time, params["linear_time_w"], params["linear_time_b"])  # (N, Cout)

    # residual path
    if Cin == Cout:
        res = x
    else:
        res = conv1x1(x, params["res_w"], params["res_b"])

    # Stage 2 (fused): (+time) -> GN2 -> SiLU -> conv_merged -> + residual
    out = gn_silu_conv3x3(f, params["gn2_gamma"], params["gn2_beta"],
                          params["conv_merged_w"], params["conv_merged_b"],
                          t_emb=t_emb, res=res, groups=groups, eps=eps)
    return jnp.transpose(out, (0, 3, 1, 2))                     # NHWC -> NCHW


# ----------------------------- reference -----------------------------------


def ref_forward(feature_nchw, time, params):
    x = jnp.transpose(feature_nchw, (0, 2, 3, 1))

    def gn(v, gamma, beta, G=32, eps=1e-5):
        N, H, W, C = v.shape
        Cg = C // G
        vr = v.reshape(N, H, W, G, Cg)
        mean = vr.mean(axis=(1, 2, 4), keepdims=True)
        var = vr.var(axis=(1, 2, 4), keepdims=True)
        y = ((vr - mean) / jnp.sqrt(var + eps)).reshape(N, H, W, C)
        return y * gamma.reshape(1, 1, 1, C) + beta.reshape(1, 1, 1, C)

    def silu(v):
        return v * jax.nn.sigmoid(v)

    def conv3(v, w, b):
        y = lax.conv_general_dilated(v, w, (1, 1), ((1, 1), (1, 1)),
                                     dimension_numbers=("NHWC", "HWIO", "NHWC"))
        return y + b.reshape(1, 1, 1, -1)

    h = silu(gn(x, params["gn1_gamma"], params["gn1_beta"]))
    f = conv3(h, params["conv_feature_w"], params["conv_feature_b"])
    t = silu(time) @ params["linear_time_w"] + params["linear_time_b"]
    m = f + t[:, None, None, :]
    m = silu(gn(m, params["gn2_gamma"], params["gn2_beta"]))
    m = conv3(m, params["conv_merged_w"], params["conv_merged_b"])
    Cin, Cout = x.shape[-1], params["conv_feature_w"].shape[3]
    res = x if Cin == Cout else x @ params["res_w"] + params["res_b"].reshape(1, 1, 1, -1)
    return jnp.transpose(m + res, (0, 3, 1, 2))


# ----------------------------- main ----------------------------------------


if __name__ == "__main__":
    # Small shapes consistent with the module: GroupNorm(32, C) needs C % 32 == 0.
    N, Cin, Cout, H, W, n_time = 2, 32, 64, 16, 16, 128

    keys = jax.random.split(jax.random.PRNGKey(0), 14)
    params = dict(
        gn1_gamma=1.0 + 0.1 * jax.random.normal(keys[0], (1, Cin), jnp.float32),
        gn1_beta=0.1 * jax.random.normal(keys[1], (1, Cin), jnp.float32),
        conv_feature_w=0.1 * jax.random.normal(keys[2], (3, 3, Cin, Cout), jnp.float32),
        conv_feature_b=0.05 * jax.random.normal(keys[3], (1, Cout), jnp.float32),
        linear_time_w=0.05 * jax.random.normal(keys[4], (n_time, Cout), jnp.float32),
        linear_time_b=0.05 * jax.random.normal(keys[5], (1, Cout), jnp.float32),
        gn2_gamma=1.0 + 0.1 * jax.random.normal(keys[6], (1, Cout), jnp.float32),
        gn2_beta=0.1 * jax.random.normal(keys[7], (1, Cout), jnp.float32),
        conv_merged_w=0.1 * jax.random.normal(keys[8], (3, 3, Cout, Cout), jnp.float32),
        conv_merged_b=0.05 * jax.random.normal(keys[9], (1, Cout), jnp.float32),
        res_w=0.1 * jax.random.normal(keys[10], (Cin, Cout), jnp.float32),
        res_b=0.05 * jax.random.normal(keys[11], (1, Cout), jnp.float32),
    )
    feature = jax.random.normal(keys[12], (N, Cin, H, W), jnp.float32)   # NCHW like PyTorch
    time = jax.random.normal(keys[13], (N, n_time), jnp.float32)

    out = jax.block_until_ready(unet_residual_block(feature, time, params))
    assert out.shape == (N, Cout, H, W), out.shape

    ref = jax.block_until_ready(ref_forward(feature, time, params))
    err = float(jnp.max(jnp.abs(out - ref)))
    assert err < 2e-3, f"max abs error too large: {err}"

    print("KERNEL_OK")
</pallas_src>

<mosaic_0001>
module attributes {stable_mosaic.version = 11 : i64} {
  func.func @_gn_silu_conv_kernel(%arg0: i32, %arg1: memref<1x16x16x32xf32, #tpu.memory_space<vmem>>, %arg2: memref<32x32xf32, #tpu.memory_space<vmem>>, %arg3: memref<32x32xf32, #tpu.memory_space<vmem>>, %arg4: memref<1x32xf32, #tpu.memory_space<vmem>>, %arg5: memref<1x32xf32, #tpu.memory_space<vmem>>, %arg6: memref<3x3x32x64xf32, #tpu.memory_space<vmem>>, %arg7: memref<1x64xf32, #tpu.memory_space<vmem>>, %arg8: memref<1x16x16x64xf32, #tpu.memory_space<vmem>>, %arg9: memref<18x18x32xf32, #tpu.memory_space<vmem>>, %arg10: memref<256x64xf32, #tpu.memory_space<vmem>>) attributes {dimension_semantics = [#tpu.dimension_semantics<parallel>], iteration_bounds = array<i64: 2>, scalar_prefetch = 0 : i64, scratch_operands = 2 : i64, tpu.core_type = #tpu.core_type<tc>, window_params = [{transform_indices = @transform_0, window_bounds = array<i64: 1, 16, 16, 32>}, {pipeline_mode = #tpu.pipeline_mode<synchronous>, transform_indices = @transform_1, window_bounds = array<i64: 32, 32>}, {pipeline_mode = #tpu.pipeline_mode<synchronous>, transform_indices = @transform_2, window_bounds = array<i64: 32, 32>}, {pipeline_mode = #tpu.pipeline_mode<synchronous>, transform_indices = @transform_3, window_bounds = array<i64: 1, 32>}, {pipeline_mode = #tpu.pipeline_mode<synchronous>, transform_indices = @transform_4, window_bounds = array<i64: 1, 32>}, {pipeline_mode = #tpu.pipeline_mode<synchronous>, transform_indices = @transform_5, window_bounds = array<i64: 3, 3, 32, 64>}, {pipeline_mode = #tpu.pipeline_mode<synchronous>, transform_indices = @transform_6, window_bounds = array<i64: 1, 64>}, {transform_indices = @transform_7, window_bounds = array<i64: 1, 16, 16, 64>}]} {
    %c0 = arith.constant 0 : index
    %c0_0 = arith.constant 0 : index
    %c0_1 = arith.constant 0 : index
    %c0_2 = arith.constant 0 : index
    %0 = vector.load %arg1[%c0, %c0_0, %c0_1, %c0_2] : memref<1x16x16x32xf32, #tpu.memory_space<vmem>>, vector<1x16x16x32xf32>
    %1 = vector.shape_cast %0 : vector<1x16x16x32xf32> to vector<16x16x32xf32>
    %2 = vector.shape_cast %1 : vector<16x16x32xf32> to vector<256x32xf32>
    %cst = arith.constant dense<0.000000e+00> : vector<32xf32>
    %3 = vector.multi_reduction <add>, %2, %cst [0] : vector<256x32xf32> to vector<32xf32>
    %4 = vector.shape_cast %3 : vector<32xf32> to vector<1x32xf32>
    %5 = arith.mulf %2, %2 : vector<256x32xf32>
    %cst_3 = arith.constant dense<0.000000e+00> : vector<32xf32>
    %6 = vector.multi_reduction <add>, %5, %cst_3 [0] : vector<256x32xf32> to vector<32xf32>
    %7 = vector.shape_cast %6 : vector<32xf32> to vector<1x32xf32>
    %c0_4 = arith.constant 0 : index
    %c0_5 = arith.constant 0 : index
    %8 = vector.load %arg2[%c0_4, %c0_5] : memref<32x32xf32, #tpu.memory_space<vmem>>, vector<32x32xf32>
    %cst_6 = arith.constant dense<0.000000e+00> : vector<1x32xf32>
    %9 = tpu.matmul %4, %8, %cst_6 {dimension_numbers = #tpu.dot_dimension_numbers<[1], [0], [0], [1], [0, 0, 1, 1], [], []>} : vector<1x32xf32>, vector<32x32xf32>, vector<1x32xf32> -> vector<1x32xf32>
    %cst_7 = arith.constant 2.560000e+02 : f32
    %10 = vector.broadcast %cst_7 : f32 to vector<1x32xf32>
    %11 = arith.divf %9, %10 : vector<1x32xf32>
    %c0_8 = arith.constant 0 : index
    %c0_9 = arith.constant 0 : index
    %12 = vector.load %arg2[%c0_8, %c0_9] : memref<32x32xf32, #tpu.memory_space<vmem>>, vector<32x32xf32>
    %cst_10 = arith.constant dense<0.000000e+00> : vector<1x32xf32>
    %13 = tpu.matmul %7, %12, %cst_10 {dimension_numbers = #tpu.dot_dimension_numbers<[1], [0], [0], [1], [0, 0, 1, 1], [], []>} : vector<1x32xf32>, vector<32x32xf32>, vector<1x32xf32> -> vector<1x32xf32>
    %cst_11 = arith.constant 2.560000e+02 : f32
    %14 = vector.broadcast %cst_11 : f32 to vector<1x32xf32>
    %15 = arith.divf %13, %14 : vector<1x32xf32>
    %16 = arith.mulf %11, %11 : vector<1x32xf32>
    %17 = arith.subf %15, %16 : vector<1x32xf32>
    %cst_12 = arith.constant 0.000000e+00 : f32
    %18 = vector.broadcast %cst_12 : f32 to vector<1x32xf32>
    %19 = arith.maximumf %17, %18 : vector<1x32xf32>
    %c0_13 = arith.constant 0 : index
    %c0_14 = arith.constant 0 : index
    %20 = vector.load %arg3[%c0_13, %c0_14] : memref<32x32xf32, #tpu.memory_space<vmem>>, vector<32x32xf32>
    %cst_15 = arith.constant dense<0.000000e+00> : vector<1x32xf32>
    %21 = tpu.matmul %11, %20, %cst_15 {dimension_numbers = #tpu.dot_dimension_numbers<[1], [0], [0], [1], [0, 0, 1, 1], [], []>} : vector<1x32xf32>, vector<32x32xf32>, vector<1x32xf32> -> vector<1x32xf32>
    %c0_16 = arith.constant 0 : index
    %c0_17 = arith.constant 0 : index
    %22 = vector.load %arg3[%c0_16, %c0_17] : memref<32x32xf32, #tpu.memory_space<vmem>>, vector<32x32xf32>
    %cst_18 = arith.constant dense<0.000000e+00> : vector<1x32xf32>
    %23 = tpu.matmul %19, %22, %cst_18 {dimension_numbers = #tpu.dot_dimension_numbers<[1], [0], [0], [1], [0, 0, 1, 1], [], []>} : vector<1x32xf32>, vector<32x32xf32>, vector<1x32xf32> -> vector<1x32xf32>
    %cst_19 = arith.constant 9.99999974E-6 : f32
    %24 = vector.broadcast %cst_19 : f32 to vector<1x32xf32>
    %25 = arith.addf %23, %24 : vector<1x32xf32>
    %26 = math.rsqrt %25 : vector<1x32xf32>
    %27 = vector.broadcast %21 : vector<1x32xf32> to vector<256x32xf32>
    %28 = arith.subf %2, %27 : vector<256x32xf32>
    %29 = vector.broadcast %26 : vector<1x32xf32> to vector<256x32xf32>
    %30 = arith.mulf %28, %29 : vector<256x32xf32>
    %c0_20 = arith.constant 0 : index
    %c0_21 = arith.constant 0 : index
    %31 = vector.load %arg4[%c0_20, %c0_21] : memref<1x32xf32, #tpu.memory_space<vmem>>, vector<1x32xf32>
    %32 = vector.broadcast %31 : vector<1x32xf32> to vector<256x32xf32>
    %33 = arith.mulf %30, %32 : vector<256x32xf32>
    %c0_22 = arith.constant 0 : index
    %c0_23 = arith.constant 0 : index
    %34 = vector.load %arg5[%c0_22, %c0_23] : memref<1x32xf32, #tpu.memory_space<vmem>>, vector<1x32xf32>
    %35 = vector.broadcast %34 : vector<1x32xf32> to vector<256x32xf32>
    %36 = arith.addf %33, %35 : vector<256x32xf32>
    %37 = arith.negf %36 : vector<256x32xf32>
    %38 = math.exp %37 : vector<256x32xf32>
    %cst_24 = arith.constant 1.000000e+00 : f32
    %39 = vector.broadcast %cst_24 : f32 to vector<256x32xf32>
    %40 = arith.addf %39, %38 : vector<256x32xf32>
    %41 = arith.divf %39, %40 : vector<256x32xf32>
    %42 = arith.mulf %36, %41 : vector<256x32xf32>
    %cst_25 = arith.constant 0.000000e+00 : f32
    %43 = vector.broadcast %cst_25 : f32 to vector<18x18x32xf32>
    %c0_26 = arith.constant 0 : index
    %c0_27 = arith.constant 0 : index
    %c0_28 = arith.constant 0 : index
    %44 = vector.load %arg9[%c0_26, %c0_27, %c0_28] : memref<18x18x32xf32, #tpu.memory_space<vmem>>, vector<18x18x32xf32>
    tpu.vector_store %arg9[%c0_26, %c0_27, %c0_28], %43 {strides = array<i32>} : memref<18x18x32xf32, #tpu.memory_space<vmem>>, vector<18x18x32xf32>,
    %45 = vector.shape_cast %42 : vector<256x32xf32> to vector<16x16x32xf32>
    %c1 = arith.constant 1 : index
    %c1_29 = arith.constant 1 : index
    %c0_30 = arith.constant 0 : index
    %46 = vector.load %arg9[%c1, %c1_29, %c0_30] : memref<18x18x32xf32, #tpu.memory_space<vmem>>, vector<16x16x32xf32>
    tpu.vector_store %arg9[%c1, %c1_29, %c0_30], %45 {strides = array<i32>} : memref<18x18x32xf32, #tpu.memory_space<vmem>>, vector<16x16x32xf32>,
    %cst_31 = arith.constant 0.000000e+00 : f32
    %47 = vector.broadcast %cst_31 : f32 to vector<256x64xf32>
    %c0_32 = arith.constant 0 : index
    %c0_33 = arith.constant 0 : index
    %48 = vector.load %arg10[%c0_32, %c0_33] : memref<256x64xf32, #tpu.memory_space<vmem>>, vector<256x64xf32>
    tpu.vector_store %arg10[%c0_32, %c0_33], %47 {strides = array<i32>} : memref<256x64xf32, #tpu.memory_space<vmem>>, vector<256x64xf32>,
    %c0_34 = arith.constant 0 : index
    %c0_35 = arith.constant 0 : index
    %c0_36 = arith.constant 0 : index
    %49 = vector.load %arg9[%c0_34, %c0_35, %c0_36] : memref<18x18x32xf32, #tpu.memory_space<vmem>>, vector<16x16x32xf32>
    %50 = vector.shape_cast %49 : vector<16x16x32xf32> to vector<256x32xf32>
    %c0_37 = arith.constant 0 : index
    %c0_38 = arith.constant 0 : index
    %51 = vector.load %arg10[%c0_37, %c0_38] : memref<256x64xf32, #tpu.memory_space<vmem>>, vector<256x64xf32>
    %c0_39 = arith.constant 0 : index
    %c0_40 = arith.constant 0 : index
    %c0_41 = arith.constant 0 : index
    %c0_42 = arith.constant 0 : index
    %52 = vector.load %arg6[%c0_39, %c0_40, %c0_41, %c0_42] : memref<3x3x32x64xf32, #tpu.memory_space<vmem>>, vector<1x1x32x64xf32>
    %53 = vector.shape_cast %52 : vector<1x1x32x64xf32> to vector<32x64xf32>
    %cst_43 = arith.constant dense<0.000000e+00> : vector<256x64xf32>
    %54 = tpu.matmul %50, %53, %cst_43 {dimension_numbers = #tpu.dot_dimension_numbers<[1], [0], [0], [1], [0, 0, 1, 1], [], []>} : vector<256x32xf32>, vector<32x64xf32>, vector<256x64xf32> -> vector<256x64xf32>
    %55 = arith.addf %51, %54 : vector<256x64xf32>
    %c0_44 = arith.constant 0 : index
    %c0_45 = arith.constant 0 : index
    %56 = vector.load %arg10[%c0_44, %c0_45] : memref<256x64xf32, #tpu.memory_space<vmem>>, vector<256x64xf32>
    tpu.vector_store %arg10[%c0_44, %c0_45], %55 {strides = array<i32>} : memref<256x64xf32, #tpu.memory_space<vmem>>, vector<256x64xf32>,
    %c0_46 = arith.constant 0 : index
    %c1_47 = arith.constant 1 : index
    %c0_48 = arith.constant 0 : index
    %57 = vector.load %arg9[%c0_46, %c1_47, %c0_48] : memref<18x18x32xf32, #tpu.memory_space<vmem>>, vector<16x16x32xf32>
    %58 = vector.shape_cast %57 : vector<16x16x32xf32> to vector<256x32xf32>
    %c0_49 = arith.constant 0 : index
    %c0_50 = arith.constant 0 : index
    %59 = vector.load %arg10[%c0_49, %c0_50] : memref<256x64xf32, #tpu.memory_space<vmem>>, vector<256x64xf32>
    %c0_51 = arith.constant 0 : index
    %c1_52 = arith.constant 1 : index
    %c0_53 = arith.constant 0 : index
    %c0_54 = arith.constant 0 : index
    %60 = vector.load %arg6[%c0_51, %c1_52, %c0_53, %c0_54] : memref<3x3x32x64xf32, #tpu.memory_space<vmem>>, vector<1x1x32x64xf32>
    %61 = vector.shape_cast %60 : vector<1x1x32x64xf32> to vector<32x64xf32>
    %cst_55 = arith.constant dense<0.000000e+00> : vector<256x64xf32>
    %62 = tpu.matmul %58, %61, %cst_55 {dimension_numbers = #tpu.dot_dimension_numbers<[1], [0], [0], [1], [0, 0, 1, 1], [], []>} : vector<256x32xf32>, vector<32x64xf32>, vector<256x64xf32> -> vector<256x64xf32>
    %63 = arith.addf %59, %62 : vector<256x64xf32>
    %c0_56 = arith.constant 0 : index
    %c0_57 = arith.constant 0 : index
    %64 = vector.load %arg10[%c0_56, %c0_57] : memref<256x64xf32, #tpu.memory_space<vmem>>, vector<256x64xf32>
    tpu.vector_store %arg10[%c0_56, %c0_57], %63 {strides = array<i32>} : memref<256x64xf32, #tpu.memory_space<vmem>>, vector<256x64xf32>,
    %c0_58 = arith.constant 0 : index
    %c2 = arith.constant 2 : index
    %c0_59 = arith.constant 0 : index
    %65 = vector.load %arg9[%c0_58, %c2, %c0_59] : memref<18x18x32xf32, #tpu.memory_space<vmem>>, vector<16x16x32xf32>
    %66 = vector.shape_cast %65 : vector<16x16x32xf32> to vector<256x32xf32>
    %c0_60 = arith.constant 0 : index
    %c0_61 = arith.constant 0 : index
    %67 = vector.load %arg10[%c0_60, %c0_61] : memref<256x64xf32, #tpu.memory_space<vmem>>, vector<256x64xf32>
    %c0_62 = arith.constant 0 : index
    %c2_63 = arith.constant 2 : index
    %c0_64 = arith.constant 0 : index
    %c0_65 = arith.constant 0 : index
    %68 = vector.load %arg6[%c0_62, %c2_63, %c0_64, %c0_65] : memref<3x3x32x64xf32, #tpu.memory_space<vmem>>, vector<1x1x32x64xf32>
    %69 = vector.shape_cast %68 : vector<1x1x32x64xf32> to vector<32x64xf32>
    %cst_66 = arith.constant dense<0.000000e+00> : vector<256x64xf32>
    %70 = tpu.matmul %66, %69, %cst_66 {dimension_numbers = #tpu.dot_dimension_numbers<[1], [0], [0], [1], [0, 0, 1, 1], [], []>} : vector<256x32xf32>, vector<32x64xf32>, vector<256x64xf32> -> vector<256x64xf32>
    %71 = arith.addf %67, %70 : vector<256x64xf32>
    %c0_67 = arith.constant 0 : index
    %c0_68 = arith.constant 0 : index
    %72 = vector.load %arg10[%c0_67, %c0_68] : memref<256x64xf32, #tpu.memory_space<vmem>>, vector<256x64xf32>
    tpu.vector_store %arg10[%c0_67, %c0_68], %71 {strides = array<i32>} : memref<256x64xf32, #tpu.memory_space<vmem>>, vector<256x64xf32>,
    %c1_69 = arith.constant 1 : index
    %c0_70 = arith.constant 0 : index
    %c0_71 = arith.constant 0 : index
    %73 = vector.load %arg9[%c1_69, %c0_70, %c0_71] : memref<18x18x32xf32, #tpu.memory_space<vmem>>, vector<16x16x32xf32>
    %74 = vector.shape_cast %73 : vector<16x16x32xf32> to vector<256x32xf32>
    %c0_72 = arith.constant 0 : index
    %c0_73 = arith.constant 0 : index
    %75 = vector.load %arg10[%c0_72, %c0_73] : memref<256x64xf32, #tpu.memory_space<vmem>>, vector<256x64xf32>
    %c1_74 = arith.constant 1 : index
    %c0_75 = arith.constant 0 : index
    %c0_76 = arith.constant 0 : index
    %c0_77 = arith.constant 0 : index
    %76 = vector.load %arg6[%c1_74, %c0_75, %c0_76, %c0_77] : memref<3x3x32x64xf32, #tpu.memory_space<vmem>>, vector<1x1x32x64xf32>
    %77 = vector.shape_cast %76 : vector<1x1x32x64xf32> to vector<32x64xf32>
    %cst_78 = arith.constant dense<0.000000e+00> : vector<256x64xf32>
    %78 = tpu.matmul %74, %77, %cst_78 {dimension_numbers = #tpu.dot_dimension_numbers<[1], [0], [0], [1], [0, 0, 1, 1], [], []>} : vector<256x32xf32>, vector<32x64xf32>, vector<256x64xf32> -> vector<256x64xf32>
    %79 = arith.addf %75, %78 : vector<256x64xf32>
    %c0_79 = arith.constant 0 : index
    %c0_80 = arith.constant 0 : index
    %80 = vector.load %arg10[%c0_79, %c0_80] : memref<256x64xf32, #tpu.memory_space<vmem>>, vector<256x64xf32>
    tpu.vector_store %arg10[%c0_79, %c0_80], %79 {strides = array<i32>} : memref<256x64xf32, #tpu.memory_space<vmem>>, vector<256x64xf32>,
    %c1_81 = arith.constant 1 : index
    %c1_82 = arith.constant 1 : index
    %c0_83 = arith.constant 0 : index
    %81 = vector.load %arg9[%c1_81, %c1_82, %c0_83] : memref<18x18x32xf32, #tpu.memory_space<vmem>>, vector<16x16x32xf32>
    %82 = vector.shape_cast %81 : vector<16x16x32xf32> to vector<256x32xf32>
    %c0_84 = arith.constant 0 : index
    %c0_85 = arith.constant 0 : index
    %83 = vector.load %arg10[%c0_84, %c0_85] : memref<256x64xf32, #tpu.memory_space<vmem>>, vector<256x64xf32>
    %c1_86 = arith.constant 1 : index
    %c1_87 = arith.constant 1 : index
    %c0_88 = arith.constant 0 : index
    %c0_89 = arith.constant 0 : index
    %84 = vector.load %arg6[%c1_86, %c1_87, %c0_88, %c0_89] : memref<3x3x32x64xf32, #tpu.memory_space<vmem>>, vector<1x1x32x64xf32>
    %85 = vector.shape_cast %84 : vector<1x1x32x64xf32> to vector<32x64xf32>
    %cst_90 = arith.constant dense<0.000000e+00> : vector<256x64xf32>
    %86 = tpu.matmul %82, %85, %cst_90 {dimension_numbers = #tpu.dot_dimension_numbers<[1], [0], [0], [1], [0, 0, 1, 1], [], []>} : vector<256x32xf32>, vector<32x64xf32>, vector<256x64xf32> -> vector<256x64xf32>
    %87 = arith.addf %83, %86 : vector<256x64xf32>
    %c0_91 = arith.constant 0 : index
    %c0_92 = arith.constant 0 : index
    %88 = vector.load %arg10[%c0_91, %c0_92] : memref<256x64xf32, #tpu.memory_space<vmem>>, vector<256x64xf32>
    tpu.vector_store %arg10[%c0_91, %c0_92], %87 {strides = array<i32>} : memref<256x64xf32, #tpu.memory_space<vmem>>, vector<256x64xf32>,
    %c1_93 = arith.constant 1 : index
    %c2_94 = arith.constant 2 : index
    %c0_95 = arith.constant 0 : index
    %89 = vector.load %arg9[%c1_93, %c2_94, %c0_95] : memref<18x18x32xf32, #tpu.memory_space<vmem>>, vector<16x16x32xf32>
    %90 = vector.shape_cast %89 : vector<16x16x32xf32> to vector<256x32xf32>
    %c0_96 = arith.constant 0 : index
    %c0_97 = arith.constant 0 : index
    %91 = vector.load %arg10[%c0_96, %c0_97] : memref<256x64xf32, #tpu.memory_space<vmem>>, vector<256x64xf32>
    %c1_98 = arith.constant 1 : index
    %c2_99 = arith.constant 2 : index
    %c0_100 = arith.constant 0 : index
    %c0_101 = arith.constant 0 : index
    %92 = vector.load %arg6[%c1_98, %c2_99, %c0_100, %c0_101] : memref<3x3x32x64xf32, #tpu.memory_space<vmem>>, vector<1x1x32x64xf32>
    %93 = vector.shape_cast %92 : vector<1x1x32x64xf32> to vector<32x64xf32>
    %cst_102 = arith.constant dense<0.000000e+00> : vector<256x64xf32>
    %94 = tpu.matmul %90, %93, %cst_102 {dimension_numbers = #tpu.dot_dimension_numbers<[1], [0], [0], [1], [0, 0, 1, 1], [], []>} : vector<256x32xf32>, vector<32x64xf32>, vector<256x64xf32> -> vector<256x64xf32>
    %95 = arith.addf %91, %94 : vector<256x64xf32>
    %c0_103 = arith.constant 0 : index
    %c0_104 = arith.constant 0 : index
    %96 = vector.load %arg10[%c0_103, %c0_104] : memref<256x64xf32, #tpu.memory_space<vmem>>, vector<256x64xf32>
    tpu.vector_store %arg10[%c0_103, %c0_104], %95 {strides = array<i32>} : memref<256x64xf32, #tpu.memory_space<vmem>>, vector<256x64xf32>,
    %c2_105 = arith.constant 2 : index
    %c0_106 = arith.constant 0 : index
    %c0_107 = arith.constant 0 : index
    %97 = vector.load %arg9[%c2_105, %c0_106, %c0_107] : memref<18x18x32xf32, #tpu.memory_space<vmem>>, vector<16x16x32xf32>
    %98 = vector.shape_cast %97 : vector<16x16x32xf32> to vector<256x32xf32>
    %c0_108 = arith.constant 0 : index
    %c0_109 = arith.constant 0 : index
    %99 = vector.load %arg10[%c0_108, %c0_109] : memref<256x64xf32, #tpu.memory_space<vmem>>, vector<256x64xf32>
    %c2_110 = arith.constant 2 : index
    %c0_111 = arith.constant 0 : index
    %c0_112 = arith.constant 0 : index
    %c0_113 = arith.constant 0 : index
    %100 = vector.load %arg6[%c2_110, %c0_111, %c0_112, %c0_113] : memref<3x3x32x64xf32, #tpu.memory_space<vmem>>, vector<1x1x32x64xf32>
    %101 = vector.shape_cast %100 : vector<1x1x32x64xf32> to vector<32x64xf32>
    %cst_114 = arith.constant dense<0.000000e+00> : vector<256x64xf32>
    %102 = tpu.matmul %98, %101, %cst_114 {dimension_numbers = #tpu.dot_dimension_numbers<[1], [0], [0], [1], [0, 0, 1, 1], [], []>} : vector<256x32xf32>, vector<32x64xf32>, vector<256x64xf32> -> vector<256x64xf32>
    %103 = arith.addf %99, %102 : vector<256x64xf32>
    %c0_115 = arith.constant 0 : index
    %c0_116 = arith.constant 0 : index
    %104 = vector.load %arg10[%c0_115, %c0_116] : memref<256x64xf32, #tpu.memory_space<vmem>>, vector<256x64xf32>
    tpu.vector_store %arg10[%c0_115, %c0_116], %103 {strides = array<i32>} : memref<256x64xf32, #tpu.memory_space<vmem>>, vector<256x64xf32>,
    %c2_117 = arith.constant 2 : index
    %c1_118 = arith.constant 1 : index
    %c0_119 = arith.constant 0 : index
    %105 = vector.load %arg9[%c2_117, %c1_118, %c0_119] : memref<18x18x32xf32, #tpu.memory_space<vmem>>, vector<16x16x32xf32>
    %106 = vector.shape_cast %105 : vector<16x16x32xf32> to vector<256x32xf32>
    %c0_120 = arith.constant 0 : index
    %c0_121 = arith.constant 0 : index
    %107 = vector.load %arg10[%c0_120, %c0_121] : memref<256x64xf32, #tpu.memory_space<vmem>>, vector<256x64xf32>
    %c2_122 = arith.constant 2 : index
    %c1_123 = arith.constant 1 : index
    %c0_124 = arith.constant 0 : index
    %c0_125 = arith.constant 0 : index
    %108 = vector.load %arg6[%c2_122, %c1_123, %c0_124, %c0_125] : memref<3x3x32x64xf32, #tpu.memory_space<vmem>>, vector<1x1x32x64xf32>
    %109 = vector.shape_cast %108 : vector<1x1x32x64xf32> to vector<32x64xf32>
    %cst_126 = arith.constant dense<0.000000e+00> : vector<256x64xf32>
    %110 = tpu.matmul %106, %109, %cst_126 {dimension_numbers = #tpu.dot_dimension_numbers<[1], [0], [0], [1], [0, 0, 1, 1], [], []>} : vector<256x32xf32>, vector<32x64xf32>, vector<256x64xf32> -> vector<256x64xf32>
    %111 = arith.addf %107, %110 : vector<256x64xf32>
    %c0_127 = arith.constant 0 : index
    %c0_128 = arith.constant 0 : index
    %112 = vector.load %arg10[%c0_127, %c0_128] : memref<256x64xf32, #tpu.memory_space<vmem>>, vector<256x64xf32>
    tpu.vector_store %arg10[%c0_127, %c0_128], %111 {strides = array<i32>} : memref<256x64xf32, #tpu.memory_space<vmem>>, vector<256x64xf32>,
    %c2_129 = arith.constant 2 : index
    %c2_130 = arith.constant 2 : index
    %c0_131 = arith.constant 0 : index
    %113 = vector.load %arg9[%c2_129, %c2_130, %c0_131] : memref<18x18x32xf32, #tpu.memory_space<vmem>>, vector<16x16x32xf32>
    %114 = vector.shape_cast %113 : vector<16x16x32xf32> to vector<256x32xf32>
    %c0_132 = arith.constant 0 : index
    %c0_133 = arith.constant 0 : index
    %115 = vector.load %arg10[%c0_132, %c0_133] : memref<256x64xf32, #tpu.memory_space<vmem>>, vector<256x64xf32>
    %c2_134 = arith.constant 2 : index
    %c2_135 = arith.constant 2 : index
    %c0_136 = arith.constant 0 : index
    %c0_137 = arith.constant 0 : index
    %116 = vector.load %arg6[%c2_134, %c2_135, %c0_136, %c0_137] : memref<3x3x32x64xf32, #tpu.memory_space<vmem>>, vector<1x1x32x64xf32>
    %117 = vector.shape_cast %116 : vector<1x1x32x64xf32> to vector<32x64xf32>
    %cst_138 = arith.constant dense<0.000000e+00> : vector<256x64xf32>
    %118 = tpu.matmul %114, %117, %cst_138 {dimension_numbers = #tpu.dot_dimension_numbers<[1], [0], [0], [1], [0, 0, 1, 1], [], []>} : vector<256x32xf32>, vector<32x64xf32>, vector<256x64xf32> -> vector<256x64xf32>
    %119 = arith.addf %115, %118 : vector<256x64xf32>
    %c0_139 = arith.constant 0 : index
    %c0_140 = arith.constant 0 : index
    %120 = vector.load %arg10[%c0_139, %c0_140] : memref<256x64xf32, #tpu.memory_space<vmem>>, vector<256x64xf32>
    tpu.vector_store %arg10[%c0_139, %c0_140], %119 {strides = array<i32>} : memref<256x64xf32, #tpu.memory_space<vmem>>, vector<256x64xf32>,
    %c0_141 = arith.constant 0 : index
    %c0_142 = arith.constant 0 : index
    %121 = vector.load %arg10[%c0_141, %c0_142] : memref<256x64xf32, #tpu.memory_space<vmem>>, vector<256x64xf32>
    %c0_143 = arith.constant 0 : index
    %c0_144 = arith.constant 0 : index
    %122 = vector.load %arg7[%c0_143, %c0_144] : memref<1x64xf32, #tpu.memory_space<vmem>>, vector<1x64xf32>
    %123 = vector.broadcast %122 : vector<1x64xf32> to vector<256x64xf32>
    %124 = arith.addf %121, %123 : vector<256x64xf32>
    %125 = vector.shape_cast %124 : vector<256x64xf32> to vector<16x16x64xf32>
    %c0_145 = arith.constant 0 : index
    %c0_146 = arith.constant 0 : index
    %c0_147 = arith.constant 0 : index
    %c0_148 = arith.constant 0 : index
    %126 = vector.load %arg8[%c0_145, %c0_146, %c0_147, %c0_148] : memref<1x16x16x64xf32, #tpu.memory_space<vmem>>, vector<1x16x16x64xf32>
    %127 = vector.shape_cast %126 : vector<1x16x16x64xf32> to vector<16x16x64xf32>
    %128 = vector.shape_cast %125 : vector<16x16x64xf32> to vector<1x16x16x64xf32>
    tpu.vector_store %arg8[%c0_145, %c0_146, %c0_147, %c0_148], %128 {strides = array<i32>} : memref<1x16x16x64xf32, #tpu.memory_space<vmem>>, vector<1x16x16x64xf32>,
    return
  }
  func.func @transform_0(%arg0: i32) -> (i32, i32, i32, i32) {
    %c0_i32 = arith.constant 0 : i32
    %c0_i32_0 = arith.constant 0 : i32
    %c0_i32_1 = arith.constant 0 : i32
    %c0_i32_2 = arith.constant 0 : i32
    return %arg0, %c0_i32, %c0_i32_0, %c0_i32_1 : i32, i32, i32, i32
  }
  func.func @transform_1(%arg0: i32) -> (i32, i32) {
    %c0_i32 = arith.constant 0 : i32
    %c0_i32_0 = arith.constant 0 : i32
    %c0_i32_1 = arith.constant 0 : i32
    return %c0_i32, %c0_i32_0 : i32, i32
  }
  func.func @transform_2(%arg0: i32) -> (i32, i32) {
    %c0_i32 = arith.constant 0 : i32
    %c0_i32_0 = arith.constant 0 : i32
    %c0_i32_1 = arith.constant 0 : i32
    return %c0_i32, %c0_i32_0 : i32, i32
  }
  func.func @transform_3(%arg0: i32) -> (i32, i32) {
    %c0_i32 = arith.constant 0 : i32
    %c0_i32_0 = arith.constant 0 : i32
    %c0_i32_1 = arith.constant 0 : i32
    return %c0_i32, %c0_i32_0 : i32, i32
  }
  func.func @transform_4(%arg0: i32) -> (i32, i32) {
    %c0_i32 = arith.constant 0 : i32
    %c0_i32_0 = arith.constant 0 : i32
    %c0_i32_1 = arith.constant 0 : i32
    return %c0_i32, %c0_i32_0 : i32, i32
  }
  func.func @transform_5(%arg0: i32) -> (i32, i32, i32, i32) {
    %c0_i32 = arith.constant 0 : i32
    %c0_i32_0 = arith.constant 0 : i32
    %c0_i32_1 = arith.constant 0 : i32
    %c0_i32_2 = arith.constant 0 : i32
    %c0_i32_3 = arith.constant 0 : i32
    return %c0_i32, %c0_i32_0, %c0_i32_1, %c0_i32_2 : i32, i32, i32, i32
  }
  func.func @transform_6(%arg0: i32) -> (i32, i32) {
    %c0_i32 = arith.constant 0 : i32
    %c0_i32_0 = arith.constant 0 : i32
    %c0_i32_1 = arith.constant 0 : i32
    return %c0_i32, %c0_i32_0 : i32, i32
  }
  func.func @transform_7(%arg0: i32) -> (i32, i32, i32, i32) {
    %c0_i32 = arith.constant 0 : i32
    %c0_i32_0 = arith.constant 0 : i32
    %c0_i32_1 = arith.constant 0 : i32
    %c0_i32_2 = arith.constant 0 : i32
    return %arg0, %c0_i32, %c0_i32_0, %c0_i32_1 : i32, i32, i32, i32
  }
}

</mosaic_0001>

<llo_original>
// kernel: tpu_custom_call.1
$region0: #{tpu_custom_call.1}
  #allocation0 [shape = 'u32[]', space=smem, size = 0x4, offset = 0x4, fixed_abs, tag = 'smem constant byte address 0x4 - core index']
  #allocation1 [shape = 'u32[144,128]{1,0:T(1,128)}', space=vmem, size = 0x12000, scoped, tag = 'internal scratch']
  #allocation2 [shape = 'f32[18,18,32]{2,1,0:T(8,128)}', space=vmem, size = 0x36000, scoped, tag = 'scratch operand']
  #allocation3 [shape = 'f32[256,64]{1,0:T(8,128)}', space=vmem, size = 0x20000, scoped, tag = 'scratch operand']
  %s0 = inlined_call_operand.hbm [shape: f32[2,16,16,32], index: 0, kind: input, shape index: {}]
  %s1 = inlined_call_operand.hbm [shape: f32[32,32], index: 1, kind: input, shape index: {}]
  %s2 = inlined_call_operand.hbm [shape: f32[32,32], index: 2, kind: input, shape index: {}]
  %s3 = inlined_call_operand.vmem [shape: f32[1,32], index: 3, kind: input, shape index: {}]
  %s4 = inlined_call_operand.vmem [shape: f32[1,32], index: 4, kind: input, shape index: {}]
  %s5 = inlined_call_operand.hbm [shape: f32[3,3,32,64], index: 5, kind: input, shape index: {}]
  %s6 = inlined_call_operand.vmem [shape: f32[1,64], index: 6, kind: input, shape index: {}]
  %s7 = inlined_call_operand.hbm [shape: f32[2,16,16,64], index: 7, kind: output, shape index: {}]
  %s8 = sld [smem:[#allocation0]]
  $region77: #{tpu_custom_call.1} parent=0
    _
  %s10 = ssub.s32 1, %s8
  %s11 = scalar_select 0, %s10, %s8
  $region1: #{tpu_custom_call.1} parent=0
    #allocation4 [shape = 'u8[262144]{0}', space=vmem, size = 0x40000, scoped, tag = 'input window, operand 0']
    #allocation5 [shape = 's32[2]{0}', space=sflag, size = 0x8, scoped, tag = 'scoped memory for tpu_custom_call.1']
    #allocation6 [shape = 's32[2]{0}', space=sflag, size = 0x8, scoped, tag = 'scoped memory for tpu_custom_call.1']
    #allocation7 [shape = 'u8[16384]{0}', space=vmem, size = 0x4000, scoped, tag = 'input window, operand 1, single buffered']
    #allocation8 [shape = 's32[1]{0}', space=sflag, size = 0x4, scoped, tag = 'scoped memory for tpu_custom_call.1']
    #allocation9 [shape = 'u8[16384]{0}', space=vmem, size = 0x4000, scoped, tag = 'input window, operand 2, single buffered']
    #allocation10 [shape = 'u8[147456]{0}', space=vmem, size = 0x24000, scoped, tag = 'input window, operand 5, single buffered']
    #allocation11 [shape = 's32[1]{0}', space=sflag, size = 0x4, scoped, tag = 'scoped memory for tpu_custom_call.1']
    #allocation12 [shape = 'u8[262144]{0}', space=vmem, size = 0x40000, scoped, tag = 'output window, operand 0']
    %12 = vsyncpa [#allocation5], 0
    %s13 = scalar_lea.sflag [#allocation5], 1
    %14 = vsyncpa %s13, 0
    %15 = vsyncpa [#allocation8], 0
    %16 = vsyncpa [#allocation11], 0
    %17 = vsyncpa [#allocation6], 0
    %s18 = scalar_lea.sflag [#allocation6], 1
    %19 = vsyncpa %s18, 0
    loop: start=0, step=1, limit=4
    $region2: #{tpu_custom_call.1} parent=1 // loop_pre_header
      _
    $region3: #{tpu_custom_call.1} parent=1 // loop_header
      %s21 = sphi 0, %s25
      %p22 = scmp.ge.s32.totalorder %s21, 4
      %s31 = sphi 0, %s33
      %s34 = sphi 0, %s31
      %s35 = sphi 0, %s34
      %s51 = sphi 0, %s35
      %s55 = sphi 0, %s55
      %s57 = sphi 0, %s55
      %s58 = sphi 0, %s57
      %s72 = sphi 0, %s58
      %s76 = sphi 0, %s76
      %s78 = sphi 0, %s76
      %s79 = sphi 0, %s78
      %s93 = sphi 0, %s79
      %s97 = sphi 0, %s97
      %s99 = sphi 0, %s97
      %s100 = sphi 0, %s99
      %s114 = sphi 0, %s100
      %s118 = sphi 0, %s118
      %s120 = sphi 0, %s118
      %s121 = sphi 0, %s120
      %s135 = sphi 0, %s121
      %s139 = sphi 0, %s139
      %s141 = sphi 0, %s139
      %s142 = sphi 0, %s141
      %s156 = sphi 0, %s142
      %s160 = sphi 0, %s160
      %s162 = sphi 0, %s160
      %s163 = sphi 0, %s162
      %s177 = sphi 0, %s163
      %s183 = sphi 0, %s185
      %s186 = sphi 0, %s183
      %s187 = sphi 0, %s186
      %s203 = sphi 0, %s187
    $region4: #{tpu_custom_call.1} parent=1 // loop_header_branch
      %24 = sbr.rel (%p22) target = $region8
    $region5: #{tpu_custom_call.1} parent=1 // loop_body
      %s26 = ssub.s32 %s21, 1
      %s27 = ssub.s32 %s21, 2
      %s28 = sadd.s32 %s21, 1
      %s29 = ssub.s32 %s21, %s28
      %p30 = scmp.eq.s32.totalorder %s29, 0
      %s32 = sadd.s32 %s31, 1
      %s33 = scalar_select %p30, %s31, %s32
      %p36 = pneg %p30
      %p37 = scmp.eq.s32.totalorder %s21, 1
      %p38 = por %p36, %p37
      %p39 = scmp.ne.s32.totalorder %s31, %s34
      %p40 = scmp.eq.s32.totalorder %s21, 0
      %p41 = por %p39, %p40
      %p42 = scmp.ne.s32.totalorder %s31, %s34
      %p43 = scmp.eq.s32.totalorder %s26, 1
      %p44 = por %p42, %p43
      %p45 = scmp.ne.s32.totalorder %s34, %s35
      %p46 = scmp.eq.s32.totalorder %s26, 0
      %p47 = por %p45, %p46
      %p48 = scmp.ne.s32.totalorder %s34, %s35
      %p49 = scmp.eq.s32.totalorder %s27, 1
      %p50 = por %p48, %p49
      %p52 = scmp.ne.s32.totalorder %s35, %s51
      %p53 = scmp.eq.s32.totalorder %s27, 0
      %p54 = por %p52, %p53
      %s56 = sadd.s32 %s55, 1
      %p59 = scmp.eq.s32.totalorder %s21, 1
      %p60 = scmp.ne.s32.totalorder %s55, %s57
      %p61 = scmp.eq.s32.totalorder %s21, 0
      %p62 = por %p60, %p61
      %p63 = scmp.ne.s32.totalorder %s55, %s57
      %p64 = scmp.eq.s32.totalorder %s26, 1
      %p65 = por %p63, %p64
      %p66 = scmp.ne.s32.totalorder %s57, %s58
      %p67 = scmp.eq.s32.totalorder %s26, 0
      %p68 = por %p66, %p67
      %p69 = scmp.ne.s32.totalorder %s57, %s58
      %p70 = scmp.eq.s32.totalorder %s27, 1
      %p71 = por %p69, %p70
      %p73 = scmp.ne.s32.totalorder %s58, %s72
      %p74 = scmp.eq.s32.totalorder %s27, 0
      %p75 = por %p73, %p74
      %s77 = sadd.s32 %s76, 1
      %p80 = scmp.eq.s32.totalorder %s21, 1
      %p81 = scmp.ne.s32.totalorder %s76, %s78
      %p82 = scmp.eq.s32.totalorder %s21, 0
      %p83 = por %p81, %p82
      %p84 = scmp.ne.s32.totalorder %s76, %s78
      %p85 = scmp.eq.s32.totalorder %s26, 1
      %p86 = por %p84, %p85
      %p87 = scmp.ne.s32.totalorder %s78, %s79
      %p88 = scmp.eq.s32.totalorder %s26, 0
      %p89 = por %p87, %p88
      %p90 = scmp.ne.s32.totalorder %s78, %s79
      %p91 = scmp.eq.s32.totalorder %s27, 1
      %p92 = por %p90, %p91
      %p94 = scmp.ne.s32.totalorder %s79, %s93
      %p95 = scmp.eq.s32.totalorder %s27, 0
      %p96 = por %p94, %p95
      %s98 = sadd.s32 %s97, 1
      %p101 = scmp.eq.s32.totalorder %s21, 1
      %p102 = scmp.ne.s32.totalorder %s97, %s99
      %p103 = scmp.eq.s32.totalorder %s21, 0
      %p104 = por %p102, %p103
      %p105 = scmp.ne.s32.totalorder %s97, %s99
      %p106 = scmp.eq.s32.totalorder %s26, 1
      %p107 = por %p105, %p106
      %p108 = scmp.ne.s32.totalorder %s99, %s100
      %p109 = scmp.eq.s32.totalorder %s26, 0
      %p110 = por %p108, %p109
      %p111 = scmp.ne.s32.totalorder %s99, %s100
      %p112 = scmp.eq.s32.totalorder %s27, 1
      %p113 = por %p111, %p112
      %p115 = scmp.ne.s32.totalorder %s100, %s114
      %p116 = scmp.eq.s32.totalorder %s27, 0
      %p117 = por %p115, %p116
      %s119 = sadd.s32 %s118, 1
      %p122 = scmp.eq.s32.totalorder %s21, 1
      %p123 = scmp.ne.s32.totalorder %s118, %s120
      %p124 = scmp.eq.s32.totalorder %s21, 0
      %p125 = por %p123, %p124
      %p126 = scmp.ne.s32.totalorder %s118, %s120
      %p127 = scmp.eq.s32.totalorder %s26, 1
      %p128 = por %p126, %p127
      %p129 = scmp.ne.s32.totalorder %s120, %s121
      %p130 = scmp.eq.s32.totalorder %s26, 0
      %p131 = por %p129, %p130
      %p132 = scmp.ne.s32.totalorder %s120, %s121
      %p133 = scmp.eq.s32.totalorder %s27, 1
      %p134 = por %p132, %p133
      %p136 = scmp.ne.s32.totalorder %s121, %s135
      %p137 = scmp.eq.s32.totalorder %s27, 0
      %p138 = por %p136, %p137
      %s140 = sadd.s32 %s139, 1
      %p143 = scmp.eq.s32.totalorder %s21, 1
      %p144 = scmp.ne.s32.totalorder %s139, %s141
      %p145 = scmp.eq.s32.totalorder %s21, 0
      %p146 = por %p144, %p145
      %p147 = scmp.ne.s32.totalorder %s139, %s141
      %p148 = scmp.eq.s32.totalorder %s26, 1
      %p149 = por %p147, %p148
      %p150 = scmp.ne.s32.totalorder %s141, %s142
      %p151 = scmp.eq.s32.totalorder %s26, 0
      %p152 = por %p150, %p151
      %p153 = scmp.ne.s32.totalorder %s141, %s142
      %p154 = scmp.eq.s32.totalorder %s27, 1
      %p155 = por %p153, %p154
      %p157 = scmp.ne.s32.totalorder %s142, %s156
      %p158 = scmp.eq.s32.totalorder %s27, 0
      %p159 = por %p157, %p158
      %s161 = sadd.s32 %s160, 1
      %p164 = scmp.eq.s32.totalorder %s21, 1
      %p165 = scmp.ne.s32.totalorder %s160, %s162
      %p166 = scmp.eq.s32.totalorder %s21, 0
      %p167 = por %p165, %p166
      %p168 = scmp.ne.s32.totalorder %s160, %s162
      %p169 = scmp.eq.s32.totalorder %s26, 1
      %p170 = por %p168, %p169
      %p171 = scmp.ne.s32.totalorder %s162, %s163
      %p172 = scmp.eq.s32.totalorder %s26, 0
      %p173 = por %p171, %p172
      %p174 = scmp.ne.s32.totalorder %s162, %s163
      %p175 = scmp.eq.s32.totalorder %s27, 1
      %p176 = por %p174, %p175
      %p178 = scmp.ne.s32.totalorder %s163, %s177
      %p179 = scmp.eq.s32.totalorder %s27, 0
      %p180 = por %p178, %p179
      %s181 = ssub.s32 %s21, %s28
      %p182 = scmp.eq.s32.totalorder %s181, 0
      %s184 = sadd.s32 %s183, 1
      %s185 = scalar_select %p182, %s183, %s184
      %p188 = pneg %p182
      %p189 = scmp.eq.s32.totalorder %s21, 1
      %p190 = por %p188, %p189
      %p191 = scmp.ne.s32.totalorder %s183, %s186
      %p192 = scmp.eq.s32.totalorder %s21, 0
      %p193 = por %p191, %p192
      %p194 = scmp.ne.s32.totalorder %s183, %s186
      %p195 = scmp.eq.s32.totalorder %s26, 1
      %p196 = por %p194, %p195
      %p197 = scmp.ne.s32.totalorder %s186, %s187
      %p198 = scmp.eq.s32.totalorder %s26, 0
      %p199 = por %p197, %p198
      %p200 = scmp.ne.s32.totalorder %s186, %s187
      %p201 = scmp.eq.s32.totalorder %s27, 1
      %p202 = por %p200, %p201
      %p204 = scmp.ne.s32.totalorder %s187, %s203
      %p205 = scmp.eq.s32.totalorder %s27, 0
      %p206 = por %p204, %p205
      %p207 = scmp.le.s32.totalorder 1, %s21
      %p208 = scmp.lt.s32.totalorder %s21, 3
      %p209 = pnand %p207, %p208
      %p210 = pneg %p209
      // Predicated region
      $region9: #{tpu_custom_call.1} parent=5 // pred_check
        _
      $region10: #{tpu_custom_call.1} parent=5 // pred_check_branch
        %212 = sbr.rel (%p209) target = $region12
      $region11: #{tpu_custom_call.1} parent=5 // pred_region
        %s213 = ssub.s32 %s21, 1
        // Predicated region
        $region13: #{tpu_custom_call.1} parent=11 // pred_check
          %p214 = pneg %p68
        $region14: #{tpu_custom_call.1} parent=11 // pred_check_branch
          %216 = sbr.rel (%p214) target = $region16
        $region15: #{tpu_custom_call.1} parent=11 // pred_region
          %s218 = ssub.s32 512, 512
          %219 = vsyncadd [#allocation8], %s218
          %s220 = sshll.u32 [#allocation7], 4
          %s221 = int_to_ptr.vmem [resolvable:$true] %s220
          %226 = dma.hbm_to_vmem [thread:$0]  %s1, 512, %s221, [#allocation8], 128, 128, 8
        $region16: #{tpu_custom_call.1} parent=11 // pred_fallthru
          _
        // Predicated region
        $region17: #{tpu_custom_call.1} parent=11 // pred_check
          %p227 = pneg %p89
        $region18: #{tpu_custom_call.1} parent=11 // pred_check_branch
          %229 = sbr.rel (%p227) target = $region20
        $region19: #{tpu_custom_call.1} parent=11 // pred_region
          %s231 = ssub.s32 512, 512
          %232 = vsyncadd [#allocation8], %s231
          %s233 = sshll.u32 [#allocation9], 4
          %s234 = int_to_ptr.vmem [resolvable:$true] %s233
          %239 = dma.hbm_to_vmem [thread:$0]  %s2, 512, %s234, [#allocation8], 128, 128, 8
        $region20: #{tpu_custom_call.1} parent=11 // pred_fallthru
          _
        // Predicated region
        $region21: #{tpu_custom_call.1} parent=11 // pred_check
          %p240 = pneg %p110
        $region22: #{tpu_custom_call.1} parent=11 // pred_check_branch
          %242 = sbr.rel (%p240) target = $region24
        $region23: #{tpu_custom_call.1} parent=11 // pred_region
          _
        $region24: #{tpu_custom_call.1} parent=11 // pred_fallthru
          _
        // Predicated region
        $region25: #{tpu_custom_call.1} parent=11 // pred_check
          %p243 = pneg %p131
        $region26: #{tpu_custom_call.1} parent=11 // pred_check_branch
          %245 = sbr.rel (%p243) target = $region28
        $region27: #{tpu_custom_call.1} parent=11 // pred_region
          _
        $region28: #{tpu_custom_call.1} parent=11 // pred_fallthru
          _
        // Predicated region
        $region29: #{tpu_custom_call.1} parent=11 // pred_check
          %p246 = pneg %p152
        $region30: #{tpu_custom_call.1} parent=11 // pred_check_branch
          %248 = sbr.rel (%p246) target = $region32
        $region31: #{tpu_custom_call.1} parent=11 // pred_region
          %s250 = ssub.s32 4608, 4608
          %251 = vsyncadd [#allocation11], %s250
          %s252 = sshll.u32 [#allocation10], 4
          %s253 = int_to_ptr.vmem [resolvable:$true] %s252
          %258 = dma.hbm_to_vmem [thread:$0]  %s5, 4608, %s253, [#allocation11], 128, 128, 8
        $region32: #{tpu_custom_call.1} parent=11 // pred_fallthru
          _
        // Predicated region
        $region33: #{tpu_custom_call.1} parent=11 // pred_check
          %p259 = pneg %p173
        $region34: #{tpu_custom_call.1} parent=11 // pred_check_branch
          %261 = sbr.rel (%p259) target = $region36
        $region35: #{tpu_custom_call.1} parent=11 // pred_region
          _
        $region36: #{tpu_custom_call.1} parent=11 // pred_fallthru
          _
      $region12: #{tpu_custom_call.1} parent=5 // pred_fallthru
        _
      %p262 = scmp.lt.s32.totalorder %s21, 2
      // Predicated region
      $region37: #{tpu_custom_call.1} parent=5 // pred_check
        %p263 = pneg %p262
      $region38: #{tpu_custom_call.1} parent=5 // pred_check_branch
        %265 = sbr.rel (%p263) target = $region40
      $region39: #{tpu_custom_call.1} parent=5 // pred_region
        // Predicated region
        $region41: #{tpu_custom_call.1} parent=39 // pred_check
          %p266 = pneg %p41
        $region42: #{tpu_custom_call.1} parent=39 // pred_check_branch
          %268 = sbr.rel (%p266) target = $region44
        $region43: #{tpu_custom_call.1} parent=39 // pred_region
          %s269 = sand.u32 %s31, 1
          %s270 = scalar_lea.sflag [#allocation5], %s269
          %s271 = sand.u32 %s31, 1
          %s272 = smul.addr %s271, 256
          %s273 = scalar_lea.vmem [#allocation4], %s272
          %s275 = ssub.s32 4096, 4096
          %276 = vsyncadd %s270, %s275
          %s277 = smul.addr %s21, 32
          %s278 = smul.addr %s277, 128
          %s279 = scalar_lea.hbm %s0, %s278
          %s280 = sshll.u32 %s273, 4
          %s281 = int_to_ptr.vmem [resolvable:$true] %s280
          %286 = dma.hbm_to_vmem [thread:$0]  %s279, 4096, %s281, %s270, 128, 128, 8
        $region44: #{tpu_custom_call.1} parent=39 // pred_fallthru
          _
      $region40: #{tpu_custom_call.1} parent=5 // pred_fallthru
        _
      %p287 = scmp.le.s32.totalorder 1, %s21
      %p288 = scmp.lt.s32.totalorder %s21, 3
      %p289 = pnand %p287, %p288
      %p290 = pneg %p289
      // Predicated region
      $region45: #{tpu_custom_call.1} parent=5 // pred_check
        _
      $region46: #{tpu_custom_call.1} parent=5 // pred_check_branch
        %292 = sbr.rel (%p289) target = $region48
      $region47: #{tpu_custom_call.1} parent=5 // pred_region
        %s293 = ssub.s32 %s21, 1
        %s294 = sand.u32 %s34, 1
        %s295 = scalar_lea.sflag [#allocation5], %s294
        %s296 = sand.u32 %s34, 1
        %s297 = smul.addr %s296, 256
        %s298 = scalar_lea.vmem [#allocation4], %s297
        // Predicated region
        $region49: #{tpu_custom_call.1} parent=47 // pred_check
          %p299 = pneg %p47
        $region50: #{tpu_custom_call.1} parent=47 // pred_check_branch
          %301 = sbr.rel (%p299) target = $region52
        $region51: #{tpu_custom_call.1} parent=47 // pred_region
          %302 = dma.done %s295, 4096
        $region52: #{tpu_custom_call.1} parent=47 // pred_fallthru
          _
        // Predicated region
        $region53: #{tpu_custom_call.1} parent=47 // pred_check
          %p303 = pneg %p68
        $region54: #{tpu_custom_call.1} parent=47 // pred_check_branch
          %305 = sbr.rel (%p303) target = $region56
        $region55: #{tpu_custom_call.1} parent=47 // pred_region
          %306 = dma.done [#allocation8], 512
        $region56: #{tpu_custom_call.1} parent=47 // pred_fallthru
          _
        // Predicated region
        $region57: #{tpu_custom_call.1} parent=47 // pred_check
          %p307 = pneg %p89
        $region58: #{tpu_custom_call.1} parent=47 // pred_check_branch
          %309 = sbr.rel (%p307) target = $region60
        $region59: #{tpu_custom_call.1} parent=47 // pred_region
          %310 = dma.done [#allocation8], 512
        $region60: #{tpu_custom_call.1} parent=47 // pred_fallthru
          _
        // Predicated region
        $region61: #{tpu_custom_call.1} parent=47 // pred_check
          %p311 = pneg %p152
        $region62: #{tpu_custom_call.1} parent=47 // pred_check_branch
          %313 = sbr.rel (%p311) target = $region64
        $region63: #{tpu_custom_call.1} parent=47 // pred_region
          %314 = dma.done [#allocation11], 4608
        $region64: #{tpu_custom_call.1} parent=47 // pred_fallthru
          _
        %s315 = sand.u32 %s34, 1
        %s316 = scalar_lea.sflag [#allocation5], %s315
        %s317 = sand.u32 %s34, 1
        %s318 = smul.addr %s317, 256
        %s319 = scalar_lea.vmem [#allocation4], %s318
        %p320 = pneg %p47
        %p321 = pneg %p44
        %p322 = pneg %p68
        %p323 = pneg %p65
        %p324 = pneg %p89
        %p325 = pneg %p86
        %p326 = pneg %p110
        %p327 = pneg %p107
        %p328 = pneg %p131
        %p329 = pneg %p128
        %p330 = pneg %p152
        %p331 = pneg %p149
        %p332 = pneg %p173
        %p333 = pneg %p170
        %p334 = pneg %p199
        %p335 = pneg %p196
        %s336 = sand.u32 %s186, 1
        %s337 = scalar_lea.sflag [#allocation6], %s336
        %s338 = sand.u32 %s186, 1
        %s339 = smul.addr %s338, 256
        %s340 = scalar_lea.vmem [#allocation12], %s339
        %v341 = vld [vmem:[%s298] sm:$0xff]
        %v342 = vld [vmem:[%s298 + $0x8] sm:$0xff]
        %v343 = vld [vmem:[%s298 + $0x10] sm:$0xff]
        %v344 = vld [vmem:[%s298 + $0x18] sm:$0xff]
        %v345 = vld [vmem:[%s298 + $0x20] sm:$0xff]
        %v346 = vld [vmem:[%s298 + $0x28] sm:$0xff]
        %v347 = vld [vmem:[%s298 + $0x30] sm:$0xff]
        %v348 = vld [vmem:[%s298 + $0x38] sm:$0xff]
        %v349 = vld [vmem:[%s298 + $0x40] sm:$0xff]
        %v350 = vld [vmem:[%s298 + $0x48] sm:$0xff]
        %v351 = vld [vmem:[%s298 + $0x50] sm:$0xff]
        %v352 = vld [vmem:[%s298 + $0x58] sm:$0xff]
        %v353 = vld [vmem:[%s298 + $0x60] sm:$0xff]
        %v354 = vld [vmem:[%s298 + $0x68] sm:$0xff]
        %v355 = vld [vmem:[%s298 + $0x70] sm:$0xff]
        %v356 = vld [vmem:[%s298 + $0x78] sm:$0xff]
        %v357 = vld [vmem:[%s298 + $0x80] sm:$0xff]
        %v358 = vld [vmem:[%s298 + $0x88] sm:$0xff]
        %v359 = vld [vmem:[%s298 + $0x90] sm:$0xff]
        %v360 = vld [vmem:[%s298 + $0x98] sm:$0xff]
        %v361 = vld [vmem:[%s298 + $0xa0] sm:$0xff]
        %v362 = vld [vmem:[%s298 + $0xa8] sm:$0xff]
        %v363 = vld [vmem:[%s298 + $0xb0] sm:$0xff]
        %v364 = vld [vmem:[%s298 + $0xb8] sm:$0xff]
        %v365 = vld [vmem:[%s298 + $0xc0] sm:$0xff]
        %v366 = vld [vmem:[%s298 + $0xc8] sm:$0xff]
        %v367 = vld [vmem:[%s298 + $0xd0] sm:$0xff]
        %v368 = vld [vmem:[%s298 + $0xd8] sm:$0xff]
        %v369 = vld [vmem:[%s298 + $0xe0] sm:$0xff]
        %v370 = vld [vmem:[%s298 + $0xe8] sm:$0xff]
        %v371 = vld [vmem:[%s298 + $0xf0] sm:$0xff]
        %v372 = vld [vmem:[%s298 + $0xf8] sm:$0xff]
        %vm373 = vcmask 261120
        %v374 = vsel %vm373, %v341, 0.0
        %v375 = vsel %vm373, %v342, 0.0
        %v376 = vadd.f32 %v374, %v375
        %v377 = vsel %vm373, %v343, 0.0
        %v378 = vadd.f32 %v376, %v377
        %v379 = vsel %vm373, %v344, 0.0
        %v380 = vadd.f32 %v378, %v379
        %v381 = vsel %vm373, %v345, 0.0
        %v382 = vadd.f32 %v380, %v381
        %v383 = vsel %vm373, %v346, 0.0
        %v384 = vadd.f32 %v382, %v383
        %v385 = vsel %vm373, %v347, 0.0
        %v386 = vadd.f32 %v384, %v385
        %v387 = vsel %vm373, %v348, 0.0
        %v388 = vadd.f32 %v386, %v387
        %v389 = vsel %vm373, %v349, 0.0
        %v390 = vadd.f32 %v388, %v389
        %v391 = vsel %vm373, %v350, 0.0
        %v392 = vadd.f32 %v390, %v391
        %v393 = vsel %vm373, %v351, 0.0
        %v394 = vadd.f32 %v392, %v393
        %v395 = vsel %vm373, %v352, 0.0
        %v396 = vadd.f32 %v394, %v395
        %v397 = vsel %vm373, %v353, 0.0
        %v398 = vadd.f32 %v396, %v397
        %v399 = vsel %vm373, %v354, 0.0
        %v400 = vadd.f32 %v398, %v399
        %v401 = vsel %vm373, %v355, 0.0
        %v402 = vadd.f32 %v400, %v401
        %v403 = vsel %vm373, %v356, 0.0
        %v404 = vadd.f32 %v402, %v403
        %v405 = vsel %vm373, %v357, 0.0
        %v406 = vadd.f32 %v404, %v405
        %v407 = vsel %vm373, %v358, 0.0
        %v408 = vadd.f32 %v406, %v407
        %v409 = vsel %vm373, %v359, 0.0
        %v410 = vadd.f32 %v408, %v409
        %v411 = vsel %vm373, %v360, 0.0
        %v412 = vadd.f32 %v410, %v411
        %v413 = vsel %vm373, %v361, 0.0
        %v414 = vadd.f32 %v412, %v413
        %v415 = vsel %vm373, %v362, 0.0
        %v416 = vadd.f32 %v414, %v415
        %v417 = vsel %vm373, %v363, 0.0
        %v418 = vadd.f32 %v416, %v417
        %v419 = vsel %vm373, %v364, 0.0
        %v420 = vadd.f32 %v418, %v419
        %v421 = vsel %vm373, %v365, 0.0
        %v422 = vadd.f32 %v420, %v421
        %v423 = vsel %vm373, %v366, 0.0
        %v424 = vadd.f32 %v422, %v423
        %v425 = vsel %vm373, %v367, 0.0
        %v426 = vadd.f32 %v424, %v425
        %v427 = vsel %vm373, %v368, 0.0
        %v428 = vadd.f32 %v426, %v427
        %v429 = vsel %vm373, %v369, 0.0
        %v430 = vadd.f32 %v428, %v429
        %v431 = vsel %vm373, %v370, 0.0
        %v432 = vadd.f32 %v430, %v431
        %v433 = vsel %vm373, %v371, 0.0
        %v434 = vadd.f32 %v432, %v433
        %v435 = vsel %vm373, %v372, 0.0
        %v436 = vadd.f32 %v434, %v435
        %v437 = vrot.slane %v436, 4
        %v438 = vadd.f32 %v436, %v437
        %v439 = vrot.slane %v438, 2
        %v440 = vadd.f32 %v438, %v439
        %v441 = vrot.slane %v440, 1
        %v442 = vadd.f32 %v440, %v441
        %v443 = vmul.f32 %v341, %v341
        %v444 = vmul.f32 %v342, %v342
        %v445 = vmul.f32 %v343, %v343
        %v446 = vmul.f32 %v344, %v344
        %v447 = vmul.f32 %v345, %v345
        %v448 = vmul.f32 %v346, %v346
        %v449 = vmul.f32 %v347, %v347
        %v450 = vmul.f32 %v348, %v348
        %v451 = vmul.f32 %v349, %v349
        %v452 = vmul.f32 %v350, %v350
        %v453 = vmul.f32 %v351, %v351
        %v454 = vmul.f32 %v352, %v352
        %v455 = vmul.f32 %v353, %v353
        %v456 = vmul.f32 %v354, %v354
        %v457 = vmul.f32 %v355, %v355
        %v458 = vmul.f32 %v356, %v356
        %v459 = vmul.f32 %v357, %v357
        %v460 = vmul.f32 %v358, %v358
        %v461 = vmul.f32 %v359, %v359
        %v462 = vmul.f32 %v360, %v360
        %v463 = vmul.f32 %v361, %v361
        %v464 = vmul.f32 %v362, %v362
        %v465 = vmul.f32 %v363, %v363
        %v466 = vmul.f32 %v364, %v364
        %v467 = vmul.f32 %v365, %v365
        %v468 = vmul.f32 %v366, %v366
        %v469 = vmul.f32 %v367, %v367
        %v470 = vmul.f32 %v368, %v368
        %v471 = vmul.f32 %v369, %v369
        %v472 = vmul.f32 %v370, %v370
        %v473 = vmul.f32 %v371, %v371
        %v474 = vmul.f32 %v372, %v372
        %v475 = vsel %vm373, %v443, 0.0
        %v476 = vsel %vm373, %v444, 0.0
        %v477 = vadd.f32 %v475, %v476
        %v478 = vsel %vm373, %v445, 0.0
        %v479 = vadd.f32 %v477, %v478
        %v480 = vsel %vm373, %v446, 0.0
        %v481 = vadd.f32 %v479, %v480
        %v482 = vsel %vm373, %v447, 0.0
        %v483 = vadd.f32 %v481, %v482
        %v484 = vsel %vm373, %v448, 0.0
        %v485 = vadd.f32 %v483, %v484
        %v486 = vsel %vm373, %v449, 0.0
        %v487 = vadd.f32 %v485, %v486
        %v488 = vsel %vm373, %v450, 0.0
        %v489 = vadd.f32 %v487, %v488
        %v490 = vsel %vm373, %v451, 0.0
        %v491 = vadd.f32 %v489, %v490
        %v492 = vsel %vm373, %v452, 0.0
        %v493 = vadd.f32 %v491, %v492
        %v494 = vsel %vm373, %v453, 0.0
        %v495 = vadd.f32 %v493, %v494
        %v496 = vsel %vm373, %v454, 0.0
        %v497 = vadd.f32 %v495, %v496
        %v498 = vsel %vm373, %v455, 0.0
        %v499 = vadd.f32 %v497, %v498
        %v500 = vsel %vm373, %v456, 0.0
        %v501 = vadd.f32 %v499, %v500
        %v502 = vsel %vm373, %v457, 0.0
        %v503 = vadd.f32 %v501, %v502
        %v504 = vsel %vm373, %v458, 0.0
        %v505 = vadd.f32 %v503, %v504
        %v506 = vsel %vm373, %v459, 0.0
        %v507 = vadd.f32 %v505, %v506
        %v508 = vsel %vm373, %v460, 0.0
        %v509 = vadd.f32 %v507, %v508
        %v510 = vsel %vm373, %v461, 0.0
        %v511 = vadd.f32 %v509, %v510
        %v512 = vsel %vm373, %v462, 0.0
        %v513 = vadd.f32 %v511, %v512
        %v514 = vsel %vm373, %v463, 0.0
        %v515 = vadd.f32 %v513, %v514
        %v516 = vsel %vm373, %v464, 0.0
        %v517 = vadd.f32 %v515, %v516
        %v518 = vsel %vm373, %v465, 0.0
        %v519 = vadd.f32 %v517, %v518
        %v520 = vsel %vm373, %v466, 0.0
        %v521 = vadd.f32 %v519, %v520
        %v522 = vsel %vm373, %v467, 0.0
        %v523 = vadd.f32 %v521, %v522
        %v524 = vsel %vm373, %v468, 0.0
        %v525 = vadd.f32 %v523, %v524
        %v526 = vsel %vm373, %v469, 0.0
        %v527 = vadd.f32 %v525, %v526
        %v528 = vsel %vm373, %v470, 0.0
        %v529 = vadd.f32 %v527, %v528
        %v530 = vsel %vm373, %v471, 0.0
        %v531 = vadd.f32 %v529, %v530
        %v532 = vsel %vm373, %v472, 0.0
        %v533 = vadd.f32 %v531, %v532
        %v534 = vsel %vm373, %v473, 0.0
        %v535 = vadd.f32 %v533, %v534
        %v536 = vsel %vm373, %v474, 0.0
        %v537 = vadd.f32 %v535, %v536
        %v538 = vrot.slane %v537, 4
        %v539 = vadd.f32 %v537, %v538
        %v540 = vrot.slane %v539, 2
        %v541 = vadd.f32 %v539, %v540
        %v542 = vrot.slane %v541, 1
        %v543 = vadd.f32 %v541, %v542
        %v544 = vld [vmem:[#allocation7] sm:$0xff]
        %v545 = vld [vmem:[#allocation7 + $0x8] sm:$0xff]
        %v546 = vld [vmem:[#allocation7 + $0x10] sm:$0xff]
        %v547 = vld [vmem:[#allocation7 + $0x18] sm:$0xff]
        %v549 = vsel %vm373, %v442, 0
        %551 = vmatprep.subr.mxu0 0.0
        %552 = vmatpush1.msra.mxu0 %v544
        %553 = vmatprep.subr.mxu0 0.0
        %554 = vmatpush1.msra.mxu0 %v545
        %555 = vmatprep.subr.mxu0 0.0
        %556 = vmatpush1.msra.mxu0 %v546
        %557 = vmatprep.subr.mxu0 0.0
        %558 = vmatpush1.msra.mxu0 %v547
        %559 = vmatprep.subr.mxu0 0.0
        %560 = vmatpush1.msra.mxu0 0.0
        %561 = vmatprep.subr.mxu0 0.0
        %562 = vmatpush1.msra.mxu0 0.0
        %563 = vmatprep.subr.mxu0 0.0
        %564 = vmatpush1.msra.mxu0 0.0
        %565 = vmatprep.subr.mxu0 0.0
        %566 = vmatpush1.msra.mxu0 0.0
        %567 = vmatprep.subr.mxu0 0.0
        %568 = vmatpush1.msra.mxu0 0.0
        %569 = vmatprep.subr.mxu0 0.0
        %570 = vmatpush1.msra.mxu0 0.0
        %571 = vmatprep.subr.mxu0 0.0
        %572 = vmatpush1.msra.mxu0 0.0
        %573 = vmatprep.subr.mxu0 0.0
        %574 = vmatpush1.msra.mxu0 0.0
        %575 = vmatprep.subr.mxu0 0.0
        %576 = vmatpush1.msra.mxu0 0.0
        %577 = vmatprep.subr.mxu0 0.0
        %578 = vmatpush1.msra.mxu0 0.0
        %579 = vmatprep.subr.mxu0 0.0
        %580 = vmatpush1.msra.mxu0 0.0
        %581 = vmatprep.subr.mxu0 0.0
        %582 = vmatpush1.msra.mxu0 0.0
        %583 = vmatprep.subr.mxu0 0.0
        %584 = vmatpush1.msra.mxu0 0.0
        %585 = vmatprep.subr.mxu0 0.0
        %586 = vmatpush1.msra.mxu0 0.0
        %587 = vmatprep.subr.mxu0 0.0
        %588 = vmatpush1.msra.mxu0 0.0
        %589 = vmatprep.subr.mxu0 0.0
        %590 = vmatpush1.msra.mxu0 0.0
        %591 = vmatprep.subr.mxu0 0.0
        %592 = vmatpush1.msra.mxu0 0.0
        %593 = vmatprep.subr.mxu0 0.0
        %594 = vmatpush1.msra.mxu0 0.0
        %595 = vmatprep.subr.mxu0 0.0
        %596 = vmatpush1.msra.mxu0 0.0
        %597 = vmatprep.subr.mxu0 0.0
        %598 = vmatpush1.msra.mxu0 0.0
        %599 = vmatprep.subr.mxu0 0.0
        %600 = vmatpush1.msra.mxu0 0.0
        %601 = vmatprep.subr.mxu0 0.0
        %602 = vmatpush1.msra.mxu0 0.0
        %603 = vmatprep.subr.mxu0 0.0
        %604 = vmatpush1.msra.mxu0 0.0
        %605 = vmatprep.subr.mxu0 0.0
        %606 = vmatpush1.msra.mxu0 0.0
        %607 = vmatprep.subr.mxu0 0.0
        %608 = vmatpush1.msra.mxu0 0.0
        %609 = vmatprep.subr.mxu0 0.0
        %610 = vmatpush1.msra.mxu0 0.0
        %611 = vmatprep.subr.mxu0 0.0
        %612 = vmatpush1.msra.mxu0 0.0
        %613 = vmatprep.subr.mxu0 0.0
        %614 = vmatpush1.msra.mxu0 0.0
        %615 = vmatprep.mubr.f32.mxu0 0.0
        %616 = vmatmul.mubr.f32.gmra.mrb[0].mxu0 %v549
        %v617 = vpop.f32.mrb[0].mxu0
        %v618 = vadd.f32 0.0, %v617
        %v619 = vpop.f32.mrb[0].mxu0
        %620 = vdwg.mxu0
        %v621 = vrcp.pop 256.0
        %v622 = vmul.f32 %v618, %v621
        %v624 = vsel %vm373, %v543, 0
        %626 = vmatprep.subr.mxu0 0.0
        %627 = vmatpush1.msra.mxu0 %v544
        %628 = vmatprep.subr.mxu0 0.0
        %629 = vmatpush1.msra.mxu0 %v545
        %630 = vmatprep.subr.mxu0 0.0
        %631 = vmatpush1.msra.mxu0 %v546
        %632 = vmatprep.subr.mxu0 0.0
        %633 = vmatpush1.msra.mxu0 %v547
        %634 = vmatprep.subr.mxu0 0.0
        %635 = vmatpush1.msra.mxu0 0.0
        %636 = vmatprep.subr.mxu0 0.0
        %637 = vmatpush1.msra.mxu0 0.0
        %638 = vmatprep.subr.mxu0 0.0
        %639 = vmatpush1.msra.mxu0 0.0
        %640 = vmatprep.subr.mxu0 0.0
        %641 = vmatpush1.msra.mxu0 0.0
        %642 = vmatprep.subr.mxu0 0.0
        %643 = vmatpush1.msra.mxu0 0.0
        %644 = vmatprep.subr.mxu0 0.0
        %645 = vmatpush1.msra.mxu0 0.0
        %646 = vmatprep.subr.mxu0 0.0
        %647 = vmatpush1.msra.mxu0 0.0
        %648 = vmatprep.subr.mxu0 0.0
        %649 = vmatpush1.msra.mxu0 0.0
        %650 = vmatprep.subr.mxu0 0.0
        %651 = vmatpush1.msra.mxu0 0.0
        %652 = vmatprep.subr.mxu0 0.0
        %653 = vmatpush1.msra.mxu0 0.0
        %654 = vmatprep.subr.mxu0 0.0
        %655 = vmatpush1.msra.mxu0 0.0
        %656 = vmatprep.subr.mxu0 0.0
        %657 = vmatpush1.msra.mxu0 0.0
        %658 = vmatprep.subr.mxu0 0.0
        %659 = vmatpush1.msra.mxu0 0.0
        %660 = vmatprep.subr.mxu0 0.0
        %661 = vmatpush1.msra.mxu0 0.0
        %662 = vmatprep.subr.mxu0 0.0
        %663 = vmatpush1.msra.mxu0 0.0
        %664 = vmatprep.subr.mxu0 0.0
        %665 = vmatpush1.msra.mxu0 0.0
        %666 = vmatprep.subr.mxu0 0.0
        %667 = vmatpush1.msra.mxu0 0.0
        %668 = vmatprep.subr.mxu0 0.0
        %669 = vmatpush1.msra.mxu0 0.0
        %670 = vmatprep.subr.mxu0 0.0
        %671 = vmatpush1.msra.mxu0 0.0
        %672 = vmatprep.subr.mxu0 0.0
        %673 = vmatpush1.msra.mxu0 0.0
        %674 = vmatprep.subr.mxu0 0.0
        %675 = vmatpush1.msra.mxu0 0.0
        %676 = vmatprep.subr.mxu0 0.0
        %677 = vmatpush1.msra.mxu0 0.0
        %678 = vmatprep.subr.mxu0 0.0
        %679 = vmatpush1.msra.mxu0 0.0
        %680 = vmatprep.subr.mxu0 0.0
        %681 = vmatpush1.msra.mxu0 0.0
        %682 = vmatprep.subr.mxu0 0.0
        %683 = vmatpush1.msra.mxu0 0.0
        %684 = vmatprep.subr.mxu0 0.0
        %685 = vmatpush1.msra.mxu0 0.0
        %686 = vmatprep.subr.mxu0 0.0
        %687 = vmatpush1.msra.mxu0 0.0
        %688 = vmatprep.subr.mxu0 0.0
        %689 = vmatpush1.msra.mxu0 0.0
        %690 = vmatprep.mubr.f32.mxu0 0.0
        %691 = vmatmul.mubr.f32.gmra.mrb[0].mxu0 %v624
        %v692 = vpop.f32.mrb[0].mxu0
        %v693 = vadd.f32 0.0, %v692
        %v694 = vpop.f32.mrb[0].mxu0
        %695 = vdwg.mxu0
        %v696 = vmul.f32 %v693, %v621
        %v697 = vmul.f32 %v622, %v622
        %v698 = vsub.f32 %v696, %v697
        %v699 = vmax.f32 %v698, 0.0
        %v700 = vld [vmem:[#allocation9] sm:$0xff]
        %v701 = vld [vmem:[#allocation9 + $0x8] sm:$0xff]
        %v702 = vld [vmem:[#allocation9 + $0x10] sm:$0xff]
        %v703 = vld [vmem:[#allocation9 + $0x18] sm:$0xff]
        %v705 = vsel %vm373, %v622, 0
        %707 = vmatprep.subr.mxu0 0.0
        %708 = vmatpush1.msra.mxu0 %v700
        %709 = vmatprep.subr.mxu0 0.0
        %710 = vmatpush1.msra.mxu0 %v701
        %711 = vmatprep.subr.mxu0 0.0
        %712 = vmatpush1.msra.mxu0 %v702
        %713 = vmatprep.subr.mxu0 0.0
        %714 = vmatpush1.msra.mxu0 %v703
        %715 = vmatprep.subr.mxu0 0.0
        %716 = vmatpush1.msra.mxu0 0.0
        %717 = vmatprep.subr.mxu0 0.0
        %718 = vmatpush1.msra.mxu0 0.0
        %719 = vmatprep.subr.mxu0 0.0
        %720 = vmatpush1.msra.mxu0 0.0
        %721 = vmatprep.subr.mxu0 0.0
        %722 = vmatpush1.msra.mxu0 0.0
        %723 = vmatprep.subr.mxu0 0.0
        %724 = vmatpush1.msra.mxu0 0.0
        %725 = vmatprep.subr.mxu0 0.0
        %726 = vmatpush1.msra.mxu0 0.0
        %727 = vmatprep.subr.mxu0 0.0
        %728 = vmatpush1.msra.mxu0 0.0
        %729 = vmatprep.subr.mxu0 0.0
        %730 = vmatpush1.msra.mxu0 0.0
        %731 = vmatprep.subr.mxu0 0.0
        %732 = vmatpush1.msra.mxu0 0.0
        %733 = vmatprep.subr.mxu0 0.0
        %734 = vmatpush1.msra.mxu0 0.0
        %735 = vmatprep.subr.mxu0 0.0
        %736 = vmatpush1.msra.mxu0 0.0
        %737 = vmatprep.subr.mxu0 0.0
        %738 = vmatpush1.msra.mxu0 0.0
        %739 = vmatprep.subr.mxu0 0.0
        %740 = vmatpush1.msra.mxu0 0.0
        %741 = vmatprep.subr.mxu0 0.0
        %742 = vmatpush1.msra.mxu0 0.0
        %743 = vmatprep.subr.mxu0 0.0
        %744 = vmatpush1.msra.mxu0 0.0
        %745 = vmatprep.subr.mxu0 0.0
        %746 = vmatpush1.msra.mxu0 0.0
        %747 = vmatprep.subr.mxu0 0.0
        %748 = vmatpush1.msra.mxu0 0.0
        %749 = vmatprep.subr.mxu0 0.0
        %750 = vmatpush1.msra.mxu0 0.0
        %751 = vmatprep.subr.mxu0 0.0
        %752 = vmatpush1.msra.mxu0 0.0
        %753 = vmatprep.subr.mxu0 0.0
        %754 = vmatpush1.msra.mxu0 0.0
        %755 = vmatprep.subr.mxu0 0.0
        %756 = vmatpush1.msra.mxu0 0.0
        %757 = vmatprep.subr.mxu0 0.0
        %758 = vmatpush1.msra.mxu0 0.0
        %759 = vmatprep.subr.mxu0 0.0
        %760 = vmatpush1.msra.mxu0 0.0
        %761 = vmatprep.subr.mxu0 0.0
        %762 = vmatpush1.msra.mxu0 0.0
        %763 = vmatprep.subr.mxu0 0.0
        %764 = vmatpush1.msra.mxu0 0.0
        %765 = vmatprep.subr.mxu0 0.0
        %766 = vmatpush1.msra.mxu0 0.0
        %767 = vmatprep.subr.mxu0 0.0
        %768 = vmatpush1.msra.mxu0 0.0
        %769 = vmatprep.subr.mxu0 0.0
        %770 = vmatpush1.msra.mxu0 0.0
        %771 = vmatprep.mubr.f32.mxu0 0.0
        %772 = vmatmul.mubr.f32.gmra.mrb[0].mxu0 %v705
        %v773 = vpop.f32.mrb[0].mxu0
        %v774 = vadd.f32 0.0, %v773
        %v775 = vpop.f32.mrb[0].mxu0
        %776 = vdwg.mxu0
        %v778 = vsel %vm373, %v699, 0
        %780 = vmatprep.subr.mxu0 0.0
        %781 = vmatpush1.msra.mxu0 %v700
        %782 = vmatprep.subr.mxu0 0.0
        %783 = vmatpush1.msra.mxu0 %v701
        %784 = vmatprep.subr.mxu0 0.0
        %785 = vmatpush1.msra.mxu0 %v702
        %786 = vmatprep.subr.mxu0 0.0
        %787 = vmatpush1.msra.mxu0 %v703
        %788 = vmatprep.subr.mxu0 0.0
        %789 = vmatpush1.msra.mxu0 0.0
        %790 = vmatprep.subr.mxu0 0.0
        %791 = vmatpush1.msra.mxu0 0.0
        %792 = vmatprep.subr.mxu0 0.0
        %793 = vmatpush1.msra.mxu0 0.0
        %794 = vmatprep.subr.mxu0 0.0
        %795 = vmatpush1.msra.mxu0 0.0
        %796 = vmatprep.subr.mxu0 0.0
        %797 = vmatpush1.msra.mxu0 0.0
        %798 = vmatprep.subr.mxu0 0.0
        %799 = vmatpush1.msra.mxu0 0.0
        %800 = vmatprep.subr.mxu0 0.0
        %801 = vmatpush1.msra.mxu0 0.0
        %802 = vmatprep.subr.mxu0 0.0
        %803 = vmatpush1.msra.mxu0 0.0
        %804 = vmatprep.subr.mxu0 0.0
        %805 = vmatpush1.msra.mxu0 0.0
        %806 = vmatprep.subr.mxu0 0.0
        %807 = vmatpush1.msra.mxu0 0.0
        %808 = vmatprep.subr.mxu0 0.0
        %809 = vmatpush1.msra.mxu0 0.0
        %810 = vmatprep.subr.mxu0 0.0
        %811 = vmatpush1.msra.mxu0 0.0
        %812 = vmatprep.subr.mxu0 0.0
        %813 = vmatpush1.msra.mxu0 0.0
        %814 = vmatprep.subr.mxu0 0.0
        %815 = vmatpush1.msra.mxu0 0.0
        %816 = vmatprep.subr.mxu0 0.0
        %817 = vmatpush1.msra.mxu0 0.0
        %818 = vmatprep.subr.mxu0 0.0
        %819 = vmatpush1.msra.mxu0 0.0
        %820 = vmatprep.subr.mxu0 0.0
        %821 = vmatpush1.msra.mxu0 0.0
        %822 = vmatprep.subr.mxu0 0.0
        %823 = vmatpush1.msra.mxu0 0.0
        %824 = vmatprep.subr.mxu0 0.0
        %825 = vmatpush1.msra.mxu0 0.0
        %826 = vmatprep.subr.mxu0 0.0
        %827 = vmatpush1.msra.mxu0 0.0
        %828 = vmatprep.subr.mxu0 0.0
        %829 = vmatpush1.msra.mxu0 0.0
        %830 = vmatprep.subr.mxu0 0.0
        %831 = vmatpush1.msra.mxu0 0.0
        %832 = vmatprep.subr.mxu0 0.0
        %833 = vmatpush1.msra.mxu0 0.0
        %834 = vmatprep.subr.mxu0 0.0
        %835 = vmatpush1.msra.mxu0 0.0
        %836 = vmatprep.subr.mxu0 0.0
        %837 = vmatpush1.msra.mxu0 0.0
        %838 = vmatprep.subr.mxu0 0.0
        %839 = vmatpush1.msra.mxu0 0.0
        %840 = vmatprep.subr.mxu0 0.0
        %841 = vmatpush1.msra.mxu0 0.0
        %842 = vmatprep.subr.mxu0 0.0
        %843 = vmatpush1.msra.mxu0 0.0
        %844 = vmatprep.mubr.f32.mxu0 0.0
        %845 = vmatmul.mubr.f32.gmra.mrb[0].mxu0 %v778
        %v846 = vpop.f32.mrb[0].mxu0
        %v847 = vadd.f32 1e-05, %v846
        %v848 = vpop.f32.mrb[0].mxu0
        %849 = vdwg.mxu0
        %v850 = vrsqrt.pop %v847
        %v851 = vlaneseq
        %v852 = vshrl.u32 %v851, 7
        %v853 = vsub.s32 0, %v852
        %v854 = vrot.slane %v774, %v853
        %v855 = vsub.f32 %v341, %v854
        %v856 = vsub.f32 %v342, %v854
        %v857 = vsub.f32 %v343, %v854
        %v858 = vsub.f32 %v344, %v854
        %v859 = vsub.f32 %v345, %v854
        %v860 = vsub.f32 %v346, %v854
        %v861 = vsub.f32 %v347, %v854
        %v862 = vsub.f32 %v348, %v854
        %v863 = vsub.f32 %v349, %v854
        %v864 = vsub.f32 %v350, %v854
        %v865 = vsub.f32 %v351, %v854
        %v866 = vsub.f32 %v352, %v854
        %v867 = vsub.f32 %v353, %v854
        %v868 = vsub.f32 %v354, %v854
        %v869 = vsub.f32 %v355, %v854
        %v870 = vsub.f32 %v356, %v854
        %v871 = vsub.f32 %v357, %v854
        %v872 = vsub.f32 %v358, %v854
        %v873 = vsub.f32 %v359, %v854
        %v874 = vsub.f32 %v360, %v854
        %v875 = vsub.f32 %v361, %v854
        %v876 = vsub.f32 %v362, %v854
        %v877 = vsub.f32 %v363, %v854
        %v878 = vsub.f32 %v364, %v854
        %v879 = vsub.f32 %v365, %v854
        %v880 = vsub.f32 %v366, %v854
        %v881 = vsub.f32 %v367, %v854
        %v882 = vsub.f32 %v368, %v854
        %v883 = vsub.f32 %v369, %v854
        %v884 = vsub.f32 %v370, %v854
        %v885 = vsub.f32 %v371, %v854
        %v886 = vsub.f32 %v372, %v854
        %v887 = vlaneseq
        %v888 = vshrl.u32 %v887, 7
        %v889 = vsub.s32 0, %v888
        %v890 = vrot.slane %v850, %v889
        %v891 = vmul.f32 %v855, %v890
        %v892 = vmul.f32 %v856, %v890
        %v893 = vmul.f32 %v857, %v890
        %v894 = vmul.f32 %v858, %v890
        %v895 = vmul.f32 %v859, %v890
        %v896 = vmul.f32 %v860, %v890
        %v897 = vmul.f32 %v861, %v890
        %v898 = vmul.f32 %v862, %v890
        %v899 = vmul.f32 %v863, %v890
        %v900 = vmul.f32 %v864, %v890
        %v901 = vmul.f32 %v865, %v890
        %v902 = vmul.f32 %v866, %v890
        %v903 = vmul.f32 %v867, %v890
        %v904 = vmul.f32 %v868, %v890
        %v905 = vmul.f32 %v869, %v890
        %v906 = vmul.f32 %v870, %v890
        %v907 = vmul.f32 %v871, %v890
        %v908 = vmul.f32 %v872, %v890
        %v909 = vmul.f32 %v873, %v890
        %v910 = vmul.f32 %v874, %v890
        %v911 = vmul.f32 %v875, %v890
        %v912 = vmul.f32 %v876, %v890
        %v913 = vmul.f32 %v877, %v890
        %v914 = vmul.f32 %v878, %v890
        %v915 = vmul.f32 %v879, %v890
        %v916 = vmul.f32 %v880, %v890
        %v917 = vmul.f32 %v881, %v890
        %v918 = vmul.f32 %v882, %v890
        %v919 = vmul.f32 %v883, %v890
        %v920 = vmul.f32 %v884, %v890
        %v921 = vmul.f32 %v885, %v890
        %v922 = vmul.f32 %v886, %v890
        %v923 = vld [vmem:[%s3] sm:$0x1]
        %v925 = vlaneseq
        %v926 = vshrl.u32 %v925, 7
        %v927 = vsub.s32 0, %v926
        %v928 = vrot.slane %v923, %v927
        %v930 = vmul.f32 %v891, %v928
        %v931 = vmul.f32 %v892, %v928
        %v932 = vmul.f32 %v893, %v928
        %v933 = vmul.f32 %v894, %v928
        %v934 = vmul.f32 %v895, %v928
        %v935 = vmul.f32 %v896, %v928
        %v936 = vmul.f32 %v897, %v928
        %v937 = vmul.f32 %v898, %v928
        %v938 = vmul.f32 %v899, %v928
        %v939 = vmul.f32 %v900, %v928
        %v940 = vmul.f32 %v901, %v928
        %v941 = vmul.f32 %v902, %v928
        %v942 = vmul.f32 %v903, %v928
        %v943 = vmul.f32 %v904, %v928
        %v944 = vmul.f32 %v905, %v928
        %v945 = vmul.f32 %v906, %v928
        %v946 = vmul.f32 %v907, %v928
        %v947 = vmul.f32 %v908, %v928
        %v948 = vmul.f32 %v909, %v928
        %v949 = vmul.f32 %v910, %v928
        %v950 = vmul.f32 %v911, %v928
        %v951 = vmul.f32 %v912, %v928
        %v952 = vmul.f32 %v913, %v928
        %v953 = vmul.f32 %v914, %v928
        %v954 = vmul.f32 %v915, %v928
        %v955 = vmul.f32 %v916, %v928
        %v956 = vmul.f32 %v917, %v928
        %v957 = vmul.f32 %v918, %v928
        %v958 = vmul.f32 %v919, %v928
        %v959 = vmul.f32 %v920, %v928
        %v960 = vmul.f32 %v921, %v928
        %v961 = vmul.f32 %v922, %v928
        %v962 = vld [vmem:[%s4] sm:$0x1]
        %v964 = vlaneseq
        %v965 = vshrl.u32 %v964, 7
        %v966 = vsub.s32 0, %v965
        %v967 = vrot.slane %v962, %v966
        %v969 = vadd.f32 %v930, %v967
        %v970 = vadd.f32 %v931, %v967
        %v971 = vadd.f32 %v932, %v967
        %v972 = vadd.f32 %v933, %v967
        %v973 = vadd.f32 %v934, %v967
        %v974 = vadd.f32 %v935, %v967
        %v975 = vadd.f32 %v936, %v967
        %v976 = vadd.f32 %v937, %v967
        %v977 = vadd.f32 %v938, %v967
        %v978 = vadd.f32 %v939, %v967
        %v979 = vadd.f32 %v940, %v967
        %v980 = vadd.f32 %v941, %v967
        %v981 = vadd.f32 %v942, %v967
        %v982 = vadd.f32 %v943, %v967
        %v983 = vadd.f32 %v944, %v967
        %v984 = vadd.f32 %v945, %v967
        %v985 = vadd.f32 %v946, %v967
        %v986 = vadd.f32 %v947, %v967
        %v987 = vadd.f32 %v948, %v967
        %v988 = vadd.f32 %v949, %v967
        %v989 = vadd.f32 %v950, %v967
        %v990 = vadd.f32 %v951, %v967
        %v991 = vadd.f32 %v952, %v967
        %v992 = vadd.f32 %v953, %v967
        %v993 = vadd.f32 %v954, %v967
        %v994 = vadd.f32 %v955, %v967
        %v995 = vadd.f32 %v956, %v967
        %v996 = vadd.f32 %v957, %v967
        %v997 = vadd.f32 %v958, %v967
        %v998 = vadd.f32 %v959, %v967
        %v999 = vadd.f32 %v960, %v967
        %v1000 = vadd.f32 %v961, %v967
        %v1001 = vxor.u32 %v969, 2147483648
        %v1002 = vxor.u32 %v970, 2147483648
        %v1003 = vxor.u32 %v971, 2147483648
        %v1004 = vxor.u32 %v972, 2147483648
        %v1005 = vxor.u32 %v973, 2147483648
        %v1006 = vxor.u32 %v974, 2147483648
        %v1007 = vxor.u32 %v975, 2147483648
        %v1008 = vxor.u32 %v976, 2147483648
        %v1009 = vxor.u32 %v977, 2147483648
        %v1010 = vxor.u32 %v978, 2147483648
        %v1011 = vxor.u32 %v979, 2147483648
        %v1012 = vxor.u32 %v980, 2147483648
        %v1013 = vxor.u32 %v981, 2147483648
        %v1014 = vxor.u32 %v982, 2147483648
        %v1015 = vxor.u32 %v983, 2147483648
        %v1016 = vxor.u32 %v984, 2147483648
        %v1017 = vxor.u32 %v985, 2147483648
        %v1018 = vxor.u32 %v986, 2147483648
        %v1019 = vxor.u32 %v987, 2147483648
        %v1020 = vxor.u32 %v988, 2147483648
        %v1021 = vxor.u32 %v989, 2147483648
        %v1022 = vxor.u32 %v990, 2147483648
        %v1023 = vxor.u32 %v991, 2147483648
        %v1024 = vxor.u32 %v992, 2147483648
        %v1025 = vxor.u32 %v993, 2147483648
        %v1026 = vxor.u32 %v994, 2147483648
        %v1027 = vxor.u32 %v995, 2147483648
        %v1028 = vxor.u32 %v996, 2147483648
        %v1029 = vxor.u32 %v997, 2147483648
        %v1030 = vxor.u32 %v998, 2147483648
        %v1031 = vxor.u32 %v999, 2147483648
        %v1032 = vxor.u32 %v1000, 2147483648
        %v1033 = vmul.f32 %v1001, 1.442695
        %v1034 = vpow.pop %v1033
        %v1035 = vmul.f32 %v1002, 1.442695
        %v1036 = vpow.pop %v1035
        %v1037 = vmul.f32 %v1003, 1.442695
        %v1038 = vpow.pop %v1037
        %v1039 = vmul.f32 %v1004, 1.442695
        %v1040 = vpow.pop %v1039
        %v1041 = vmul.f32 %v1005, 1.442695
        %v1042 = vpow.pop %v1041
        %v1043 = vmul.f32 %v1006, 1.442695
        %v1044 = vpow.pop %v1043
        %v1045 = vmul.f32 %v1007, 1.442695
        %v1046 = vpow.pop %v1045
        %v1047 = vmul.f32 %v1008, 1.442695
        %v1048 = vpow.pop %v1047
        %v1049 = vmul.f32 %v1009, 1.442695
        %v1050 = vpow.pop %v1049
        %v1051 = vmul.f32 %v1010, 1.442695
        %v1052 = vpow.pop %v1051
        %v1053 = vmul.f32 %v1011, 1.442695
        %v1054 = vpow.pop %v1053
        %v1055 = vmul.f32 %v1012, 1.442695
        %v1056 = vpow.pop %v1055
        %v1057 = vmul.f32 %v1013, 1.442695
        %v1058 = vpow.pop %v1057
        %v1059 = vmul.f32 %v1014, 1.442695
        %v1060 = vpow.pop %v1059
        %v1061 = vmul.f32 %v1015, 1.442695
        %v1062 = vpow.pop %v1061
        %v1063 = vmul.f32 %v1016, 1.442695
        %v1064 = vpow.pop %v1063
        %v1065 = vmul.f32 %v1017, 1.442695
        %v1066 = vpow.pop %v1065
        %v1067 = vmul.f32 %v1018, 1.442695
        %v1068 = vpow.pop %v1067
        %v1069 = vmul.f32 %v1019, 1.442695
        %v1070 = vpow.pop %v1069
        %v1071 = vmul.f32 %v1020, 1.442695
        %v1072 = vpow.pop %v1071
        %v1073 = vmul.f32 %v1021, 1.442695
        %v1074 = vpow.pop %v1073
        %v1075 = vmul.f32 %v1022, 1.442695
        %v1076 = vpow.pop %v1075
        %v1077 = vmul.f32 %v1023, 1.442695
        %v1078 = vpow.pop %v1077
        %v1079 = vmul.f32 %v1024, 1.442695
        %v1080 = vpow.pop %v1079
        %v1081 = vmul.f32 %v1025, 1.442695
        %v1082 = vpow.pop %v1081
        %v1083 = vmul.f32 %v1026, 1.442695
        %v1084 = vpow.pop %v1083
        %v1085 = vmul.f32 %v1027, 1.442695
        %v1086 = vpow.pop %v1085
        %v1087 = vmul.f32 %v1028, 1.442695
        %v1088 = vpow.pop %v1087
        %v1089 = vmul.f32 %v1029, 1.442695
        %v1090 = vpow.pop %v1089
        %v1091 = vmul.f32 %v1030, 1.442695
        %v1092 = vpow.pop %v1091
        %v1093 = vmul.f32 %v1031, 1.442695
        %v1094 = vpow.pop %v1093
        %v1095 = vmul.f32 %v1032, 1.442695
        %v1096 = vpow.pop %v1095
        %v1097 = vadd.f32 %v1034, 1.0
        %v1098 = vadd.f32 %v1036, 1.0
        %v1099 = vadd.f32 %v1038, 1.0
        %v1100 = vadd.f32 %v1040, 1.0
        %v1101 = vadd.f32 %v1042, 1.0
        %v1102 = vadd.f32 %v1044, 1.0
        %v1103 = vadd.f32 %v1046, 1.0
        %v1104 = vadd.f32 %v1048, 1.0
        %v1105 = vadd.f32 %v1050, 1.0
        %v1106 = vadd.f32 %v1052, 1.0
        %v1107 = vadd.f32 %v1054, 1.0
        %v1108 = vadd.f32 %v1056, 1.0
        %v1109 = vadd.f32 %v1058, 1.0
        %v1110 = vadd.f32 %v1060, 1.0
        %v1111 = vadd.f32 %v1062, 1.0
        %v1112 = vadd.f32 %v1064, 1.0
        %v1113 = vadd.f32 %v1066, 1.0
        %v1114 = vadd.f32 %v1068, 1.0
        %v1115 = vadd.f32 %v1070, 1.0
        %v1116 = vadd.f32 %v1072, 1.0
        %v1117 = vadd.f32 %v1074, 1.0
        %v1118 = vadd.f32 %v1076, 1.0
        %v1119 = vadd.f32 %v1078, 1.0
        %v1120 = vadd.f32 %v1080, 1.0
        %v1121 = vadd.f32 %v1082, 1.0
        %v1122 = vadd.f32 %v1084, 1.0
        %v1123 = vadd.f32 %v1086, 1.0
        %v1124 = vadd.f32 %v1088, 1.0
        %v1125 = vadd.f32 %v1090, 1.0
        %v1126 = vadd.f32 %v1092, 1.0
        %v1127 = vadd.f32 %v1094, 1.0
        %v1128 = vadd.f32 %v1096, 1.0
        %v1129 = vrcp.pop %v1097
        %v1130 = vmul.f32 1.0, %v1129
        %v1131 = vrcp.pop %v1098
        %v1132 = vmul.f32 1.0, %v1131
        %v1133 = vrcp.pop %v1099
        %v1134 = vmul.f32 1.0, %v1133
        %v1135 = vrcp.pop %v1100
        %v1136 = vmul.f32 1.0, %v1135
        %v1137 = vrcp.pop %v1101
        %v1138 = vmul.f32 1.0, %v1137
        %v1139 = vrcp.pop %v1102
        %v1140 = vmul.f32 1.0, %v1139
        %v1141 = vrcp.pop %v1103
        %v1142 = vmul.f32 1.0, %v1141
        %v1143 = vrcp.pop %v1104
        %v1144 = vmul.f32 1.0, %v1143
        %v1145 = vrcp.pop %v1105
        %v1146 = vmul.f32 1.0, %v1145
        %v1147 = vrcp.pop %v1106
        %v1148 = vmul.f32 1.0, %v1147
        %v1149 = vrcp.pop %v1107
        %v1150 = vmul.f32 1.0, %v1149
        %v1151 = vrcp.pop %v1108
        %v1152 = vmul.f32 1.0, %v1151
        %v1153 = vrcp.pop %v1109
        %v1154 = vmul.f32 1.0, %v1153
        %v1155 = vrcp.pop %v1110
        %v1156 = vmul.f32 1.0, %v1155
        %v1157 = vrcp.pop %v1111
        %v1158 = vmul.f32 1.0, %v1157
        %v1159 = vrcp.pop %v1112
        %v1160 = vmul.f32 1.0, %v1159
        %v1161 = vrcp.pop %v1113
        %v1162 = vmul.f32 1.0, %v1161
        %v1163 = vrcp.pop %v1114
        %v1164 = vmul.f32 1.0, %v1163
        %v1165 = vrcp.pop %v1115
        %v1166 = vmul.f32 1.0, %v1165
        %v1167 = vrcp.pop %v1116
        %v1168 = vmul.f32 1.0, %v1167
        %v1169 = vrcp.pop %v1117
        %v1170 = vmul.f32 1.0, %v1169
        %v1171 = vrcp.pop %v1118
        %v1172 = vmul.f32 1.0, %v1171
        %v1173 = vrcp.pop %v1119
        %v1174 = vmul.f32 1.0, %v1173
        %v1175 = vrcp.pop %v1120
        %v1176 = vmul.f32 1.0, %v1175
        %v1177 = vrcp.pop %v1121
        %v1178 = vmul.f32 1.0, %v1177
        %v1179 = vrcp.pop %v1122
        %v1180 = vmul.f32 1.0, %v1179
        %v1181 = vrcp.pop %v1123
        %v1182 = vmul.f32 1.0, %v1181
        %v1183 = vrcp.pop %v1124
        %v1184 = vmul.f32 1.0, %v1183
        %v1185 = vrcp.pop %v1125
        %v1186 = vmul.f32 1.0, %v1185
        %v1187 = vrcp.pop %v1126
        %v1188 = vmul.f32 1.0, %v1187
        %v1189 = vrcp.pop %v1127
        %v1190 = vmul.f32 1.0, %v1189
        %v1191 = vrcp.pop %v1128
        %v1192 = vmul.f32 1.0, %v1191
        %v1193 = vmul.f32 %v969, %v1130
        %v1194 = vmul.f32 %v970, %v1132
        %v1195 = vmul.f32 %v971, %v1134
        %v1196 = vmul.f32 %v972, %v1136
        %v1197 = vmul.f32 %v973, %v1138
        %v1198 = vmul.f32 %v974, %v1140
        %v1199 = vmul.f32 %v975, %v1142
        %v1200 = vmul.f32 %v976, %v1144
        %v1201 = vmul.f32 %v977, %v1146
        %v1202 = vmul.f32 %v978, %v1148
        %v1203 = vmul.f32 %v979, %v1150
        %v1204 = vmul.f32 %v980, %v1152
        %v1205 = vmul.f32 %v981, %v1154
        %v1206 = vmul.f32 %v982, %v1156
        %v1207 = vmul.f32 %v983, %v1158
        %v1208 = vmul.f32 %v984, %v1160
        %v1209 = vmul.f32 %v985, %v1162
        %v1210 = vmul.f32 %v986, %v1164
        %v1211 = vmul.f32 %v987, %v1166
        %v1212 = vmul.f32 %v988, %v1168
        %v1213 = vmul.f32 %v989, %v1170
        %v1214 = vmul.f32 %v990, %v1172
        %v1215 = vmul.f32 %v991, %v1174
        %v1216 = vmul.f32 %v992, %v1176
        %v1217 = vmul.f32 %v993, %v1178
        %v1218 = vmul.f32 %v994, %v1180
        %v1219 = vmul.f32 %v995, %v1182
        %v1220 = vmul.f32 %v996, %v1184
        %v1221 = vmul.f32 %v997, %v1186
        %v1222 = vmul.f32 %v998, %v1188
        %v1223 = vmul.f32 %v999, %v1190
        %v1224 = vmul.f32 %v1000, %v1192
        %1225 = vst.msk [vmem:[#allocation2] sm:$0xff] %vm373, 0.0
        %1226 = vst.msk [vmem:[#allocation2 + $0x8] sm:$0xff] %vm373, 0.0
        %vm1227 = vcmask 254976
        %1228 = vst.msk [vmem:[#allocation2 + $0x10] sm:$0x3] %vm1227, 0.0
        %1229 = vst.msk [vmem:[#allocation2 + $0x18] sm:$0xff] %vm373, 0.0
        %1230 = vst.msk [vmem:[#allocation2 + $0x20] sm:$0xff] %vm373, 0.0
        %1231 = vst.msk [vmem:[#allocation2 + $0x28] sm:$0x3] %vm1227, 0.0
        %1232 = vst.msk [vmem:[#allocation2 + $0x30] sm:$0xff] %vm373, 0.0
        %1233 = vst.msk [vmem:[#allocation2 + $0x38] sm:$0xff] %vm373, 0.0
        %1234 = vst.msk [vmem:[#allocation2 + $0x40] sm:$0x3] %vm1227, 0.0
        %1235 = vst.msk [vmem:[#allocation2 + $0x48] sm:$0xff] %vm373, 0.0
        %1236 = vst.msk [vmem:[#allocation2 + $0x50] sm:$0xff] %vm373, 0.0
        %1237 = vst.msk [vmem:[#allocation2 + $0x58] sm:$0x3] %vm1227, 0.0
        %1238 = vst.msk [vmem:[#allocation2 + $0x60] sm:$0xff] %vm373, 0.0
        %1239 = vst.msk [vmem:[#allocation2 + $0x68] sm:$0xff] %vm373, 0.0
        %1240 = vst.msk [vmem:[#allocation2 + $0x70] sm:$0x3] %vm1227, 0.0
        %1241 = vst.msk [vmem:[#allocation2 + $0x78] sm:$0xff] %vm373, 0.0
        %1242 = vst.msk [vmem:[#allocation2 + $0x80] sm:$0xff] %vm373, 0.0
        %1243 = vst.msk [vmem:[#allocation2 + $0x88] sm:$0x3] %vm1227, 0.0
        %1244 = vst.msk [vmem:[#allocation2 + $0x90] sm:$0xff] %vm373, 0.0
        %1245 = vst.msk [vmem:[#allocation2 + $0x98] sm:$0xff] %vm373, 0.0
        %1246 = vst.msk [vmem:[#allocation2 + $0xa0] sm:$0x3] %vm1227, 0.0
        %1247 = vst.msk [vmem:[#allocation2 + $0xa8] sm:$0xff] %vm373, 0.0
        %1248 = vst.msk [vmem:[#allocation2 + $0xb0] sm:$0xff] %vm373, 0.0
        %1249 = vst.msk [vmem:[#allocation2 + $0xb8] sm:$0x3] %vm1227, 0.0
        %1250 = vst.msk [vmem:[#allocation2 + $0xc0] sm:$0xff] %vm373, 0.0
        %1251 = vst.msk [vmem:[#allocation2 + $0xc8] sm:$0xff] %vm373, 0.0
        %1252 = vst.msk [vmem:[#allocation2 + $0xd0] sm:$0x3] %vm1227, 0.0
        %1253 = vst.msk [vmem:[#allocation2 + $0xd8] sm:$0xff] %vm373, 0.0
        %1254 = vst.msk [vmem:[#allocation2 + $0xe0] sm:$0xff] %vm373, 0.0
        %1255 = vst.msk [vmem:[#allocation2 + $0xe8] sm:$0x3] %vm1227, 0.0
        %1256 = vst.msk [vmem:[#allocation2 + $0xf0] sm:$0xff] %vm373, 0.0
        %1257 = vst.msk [vmem:[#allocation2 + $0xf8] sm:$0xff] %vm373, 0.0
        %1258 = vst.msk [vmem:[#allocation2 + $0x100] sm:$0x3] %vm1227, 0.0
        %1259 = vst.msk [vmem:[#allocation2 + $0x108] sm:$0xff] %vm373, 0.0
        %1260 = vst.msk [vmem:[#allocation2 + $0x110] sm:$0xff] %vm373, 0.0
        %1261 = vst.msk [vmem:[#allocation2 + $0x118] sm:$0x3] %vm1227, 0.0
        %1262 = vst.msk [vmem:[#allocation2 + $0x120] sm:$0xff] %vm373, 0.0
        %1263 = vst.msk [vmem:[#allocation2 + $0x128] sm:$0xff] %vm373, 0.0
        %1264 = vst.msk [vmem:[#allocation2 + $0x130] sm:$0x3] %vm1227, 0.0
        %1265 = vst.msk [vmem:[#allocation2 + $0x138] sm:$0xff] %vm373, 0.0
        %1266 = vst.msk [vmem:[#allocation2 + $0x140] sm:$0xff] %vm373, 0.0
        %1267 = vst.msk [vmem:[#allocation2 + $0x148] sm:$0x3] %vm1227, 0.0
        %1268 = vst.msk [vmem:[#allocation2 + $0x150] sm:$0xff] %vm373, 0.0
        %1269 = vst.msk [vmem:[#allocation2 + $0x158] sm:$0xff] %vm373, 0.0
        %1270 = vst.msk [vmem:[#allocation2 + $0x160] sm:$0x3] %vm1227, 0.0
        %1271 = vst.msk [vmem:[#allocation2 + $0x168] sm:$0xff] %vm373, 0.0
        %1272 = vst.msk [vmem:[#allocation2 + $0x170] sm:$0xff] %vm373, 0.0
        %1273 = vst.msk [vmem:[#allocation2 + $0x178] sm:$0x3] %vm1227, 0.0
        %1274 = vst.msk [vmem:[#allocation2 + $0x180] sm:$0xff] %vm373, 0.0
        %1275 = vst.msk [vmem:[#allocation2 + $0x188] sm:$0xff] %vm373, 0.0
        %1276 = vst.msk [vmem:[#allocation2 + $0x190] sm:$0x3] %vm1227, 0.0
        %1277 = vst.msk [vmem:[#allocation2 + $0x198] sm:$0xff] %vm373, 0.0
        %1278 = vst.msk [vmem:[#allocation2 + $0x1a0] sm:$0xff] %vm373, 0.0
        %1279 = vst.msk [vmem:[#allocation2 + $0x1a8] sm:$0x3] %vm1227, 0.0
        %s1280 = scalar_lea.vmem [#allocation2], 24
        %1281 = vst.msk [vmem:[%s1280 + $0x1] sm:$0xff] %vm373, %v1193
        %1282 = vst.msk [vmem:[%s1280 + $0x9] sm:$0xff] %vm373, %v1194
        %1283 = vst.msk [vmem:[%s1280 + $0x19] sm:$0xff] %vm373, %v1195
        %1284 = vst.msk [vmem:[%s1280 + $0x21] sm:$0xff] %vm373, %v1196
        %1285 = vst.msk [vmem:[%s1280 + $0x31] sm:$0xff] %vm373, %v1197
        %1286 = vst.msk [vmem:[%s1280 + $0x39] sm:$0xff] %vm373, %v1198
        %1287 = vst.msk [vmem:[%s1280 + $0x49] sm:$0xff] %vm373, %v1199
        %1288 = vst.msk [vmem:[%s1280 + $0x51] sm:$0xff] %vm373, %v1200
        %1289 = vst.msk [vmem:[%s1280 + $0x61] sm:$0xff] %vm373, %v1201
        %1290 = vst.msk [vmem:[%s1280 + $0x69] sm:$0xff] %vm373, %v1202
        %1291 = vst.msk [vmem:[%s1280 + $0x79] sm:$0xff] %vm373, %v1203
        %1292 = vst.msk [vmem:[%s1280 + $0x81] sm:$0xff] %vm373, %v1204
        %1293 = vst.msk [vmem:[%s1280 + $0x91] sm:$0xff] %vm373, %v1205
        %1294 = vst.msk [vmem:[%s1280 + $0x99] sm:$0xff] %vm373, %v1206
        %1295 = vst.msk [vmem:[%s1280 + $0xa9] sm:$0xff] %vm373, %v1207
        %1296 = vst.msk [vmem:[%s1280 + $0xb1] sm:$0xff] %vm373, %v1208
        %1297 = vst.msk [vmem:[%s1280 + $0xc1] sm:$0xff] %vm373, %v1209
        %1298 = vst.msk [vmem:[%s1280 + $0xc9] sm:$0xff] %vm373, %v1210
        %1299 = vst.msk [vmem:[%s1280 + $0xd9] sm:$0xff] %vm373, %v1211
        %1300 = vst.msk [vmem:[%s1280 + $0xe1] sm:$0xff] %vm373, %v1212
        %1301 = vst.msk [vmem:[%s1280 + $0xf1] sm:$0xff] %vm373, %v1213
        %1302 = vst.msk [vmem:[%s1280 + $0xf9] sm:$0xff] %vm373, %v1214
        %1303 = vst.msk [vmem:[%s1280 + $0x109] sm:$0xff] %vm373, %v1215
        %1304 = vst.msk [vmem:[%s1280 + $0x111] sm:$0xff] %vm373, %v1216
        %1305 = vst.msk [vmem:[%s1280 + $0x121] sm:$0xff] %vm373, %v1217
        %1306 = vst.msk [vmem:[%s1280 + $0x129] sm:$0xff] %vm373, %v1218
        %1307 = vst.msk [vmem:[%s1280 + $0x139] sm:$0xff] %vm373, %v1219
        %1308 = vst.msk [vmem:[%s1280 + $0x141] sm:$0xff] %vm373, %v1220
        %1309 = vst.msk [vmem:[%s1280 + $0x151] sm:$0xff] %vm373, %v1221
        %1310 = vst.msk [vmem:[%s1280 + $0x159] sm:$0xff] %vm373, %v1222
        %1311 = vst.msk [vmem:[%s1280 + $0x169] sm:$0xff] %vm373, %v1223
        %1312 = vst.msk [vmem:[%s1280 + $0x171] sm:$0xff] %vm373, %v1224
        %vm1313 = vcmask 523264
        %1314 = vst.msk [vmem:[#allocation3] sm:$0xff] %vm1313, 0.0
        %1315 = vst.msk [vmem:[#allocation3 + $0x8] sm:$0xff] %vm1313, 0.0
        %1316 = vst.msk [vmem:[#allocation3 + $0x10] sm:$0xff] %vm1313, 0.0
        %1317 = vst.msk [vmem:[#allocation3 + $0x18] sm:$0xff] %vm1313, 0.0
        %1318 = vst.msk [vmem:[#allocation3 + $0x20] sm:$0xff] %vm1313, 0.0
        %1319 = vst.msk [vmem:[#allocation3 + $0x28] sm:$0xff] %vm1313, 0.0
        %1320 = vst.msk [vmem:[#allocation3 + $0x30] sm:$0xff] %vm1313, 0.0
        %1321 = vst.msk [vmem:[#allocation3 + $0x38] sm:$0xff] %vm1313, 0.0
        %1322 = vst.msk [vmem:[#allocation3 + $0x40] sm:$0xff] %vm1313, 0.0
        %1323 = vst.msk [vmem:[#allocation3 + $0x48] sm:$0xff] %vm1313, 0.0
        %1324 = vst.msk [vmem:[#allocation3 + $0x50] sm:$0xff] %vm1313, 0.0
        %1325 = vst.msk [vmem:[#allocation3 + $0x58] sm:$0xff] %vm1313, 0.0
        %1326 = vst.msk [vmem:[#allocation3 + $0x60] sm:$0xff] %vm1313, 0.0
        %1327 = vst.msk [vmem:[#allocation3 + $0x68] sm:$0xff] %vm1313, 0.0
        %1328 = vst.msk [vmem:[#allocation3 + $0x70] sm:$0xff] %vm1313, 0.0
        %1329 = vst.msk [vmem:[#allocation3 + $0x78] sm:$0xff] %vm1313, 0.0
        %1330 = vst.msk [vmem:[#allocation3 + $0x80] sm:$0xff] %vm1313, 0.0
        %1331 = vst.msk [vmem:[#allocation3 + $0x88] sm:$0xff] %vm1313, 0.0
        %1332 = vst.msk [vmem:[#allocation3 + $0x90] sm:$0xff] %vm1313, 0.0
        %1333 = vst.msk [vmem:[#allocation3 + $0x98] sm:$0xff] %vm1313, 0.0
        %1334 = vst.msk [vmem:[#allocation3 + $0xa0] sm:$0xff] %vm1313, 0.0
        %1335 = vst.msk [vmem:[#allocation3 + $0xa8] sm:$0xff] %vm1313, 0.0
        %1336 = vst.msk [vmem:[#allocation3 + $0xb0] sm:$0xff] %vm1313, 0.0
        %1337 = vst.msk [vmem:[#allocation3 + $0xb8] sm:$0xff] %vm1313, 0.0
        %1338 = vst.msk [vmem:[#allocation3 + $0xc0] sm:$0xff] %vm1313, 0.0
        %1339 = vst.msk [vmem:[#allocation3 + $0xc8] sm:$0xff] %vm1313, 0.0
        %1340 = vst.msk [vmem:[#allocation3 + $0xd0] sm:$0xff] %vm1313, 0.0
        %1341 = vst.msk [vmem:[#allocation3 + $0xd8] sm:$0xff] %vm1313, 0.0
        %1342 = vst.msk [vmem:[#allocation3 + $0xe0] sm:$0xff] %vm1313, 0.0
        %1343 = vst.msk [vmem:[#allocation3 + $0xe8] sm:$0xff] %vm1313, 0.0
        %1344 = vst.msk [vmem:[#allocation3 + $0xf0] sm:$0xff] %vm1313, 0.0
        %1345 = vst.msk [vmem:[#allocation3 + $0xf8] sm:$0xff] %vm1313, 0.0
        %v1346 = vld [vmem:[#allocation2] sm:$0xff]
        %v1347 = vld [vmem:[#allocation2 + $0x8] sm:$0xff]
        %v1348 = vld [vmem:[#allocation2 + $0x18] sm:$0xff]
        %v1349 = vld [vmem:[#allocation2 + $0x20] sm:$0xff]
        %v1350 = vld [vmem:[#allocation2 + $0x30] sm:$0xff]
        %v1351 = vld [vmem:[#allocation2 + $0x38] sm:$0xff]
        %v1352 = vld [vmem:[#allocation2 + $0x48] sm:$0xff]
        %v1353 = vld [vmem:[#allocation2 + $0x50] sm:$0xff]
        %v1354 = vld [vmem:[#allocation2 + $0x60] sm:$0xff]
        %v1355 = vld [vmem:[#allocation2 + $0x68] sm:$0xff]
        %v1356 = vld [vmem:[#allocation2 + $0x78] sm:$0xff]
        %v1357 = vld [vmem:[#allocation2 + $0x80] sm:$0xff]
        %v1358 = vld [vmem:[#allocation2 + $0x90] sm:$0xff]
        %v1359 = vld [vmem:[#allocation2 + $0x98] sm:$0xff]
        %v1360 = vld [vmem:[#allocation2 + $0xa8] sm:$0xff]
        %v1361 = vld [vmem:[#allocation2 + $0xb0] sm:$0xff]
        %v1362 = vld [vmem:[#allocation2 + $0xc0] sm:$0xff]
        %v1363 = vld [vmem:[#allocation2 + $0xc8] sm:$0xff]
        %v1364 = vld [vmem:[#allocation2 + $0xd8] sm:$0xff]
        %v1365 = vld [vmem:[#allocation2 + $0xe0] sm:$0xff]
        %v1366 = vld [vmem:[#allocation2 + $0xf0] sm:$0xff]
        %v1367 = vld [vmem:[#allocation2 + $0xf8] sm:$0xff]
        %v1368 = vld [vmem:[#allocation2 + $0x108] sm:$0xff]
        %v1369 = vld [vmem:[#allocation2 + $0x110] sm:$0xff]
        %v1370 = vld [vmem:[#allocation2 + $0x120] sm:$0xff]
        %v1371 = vld [vmem:[#allocation2 + $0x128] sm:$0xff]
        %v1372 = vld [vmem:[#allocation2 + $0x138] sm:$0xff]
        %v1373 = vld [vmem:[#allocation2 + $0x140] sm:$0xff]
        %v1374 = vld [vmem:[#allocation2 + $0x150] sm:$0xff]
        %v1375 = vld [vmem:[#allocation2 + $0x158] sm:$0xff]
        %v1376 = vld [vmem:[#allocation2 + $0x168] sm:$0xff]
        %v1377 = vld [vmem:[#allocation2 + $0x170] sm:$0xff]
        %v1378 = vld [vmem:[#allocation3] sm:$0xff]
        %v1379 = vld [vmem:[#allocation3 + $0x8] sm:$0xff]
        %v1380 = vld [vmem:[#allocation3 + $0x10] sm:$0xff]
        %v1381 = vld [vmem:[#allocation3 + $0x18] sm:$0xff]
        %v1382 = vld [vmem:[#allocation3 + $0x20] sm:$0xff]
        %v1383 = vld [vmem:[#allocation3 + $0x28] sm:$0xff]
        %v1384 = vld [vmem:[#allocation3 + $0x30] sm:$0xff]
        %v1385 = vld [vmem:[#allocation3 + $0x38] sm:$0xff]
        %v1386 = vld [vmem:[#allocation3 + $0x40] sm:$0xff]
        %v1387 = vld [vmem:[#allocation3 + $0x48] sm:$0xff]
        %v1388 = vld [vmem:[#allocation3 + $0x50] sm:$0xff]
        %v1389 = vld [vmem:[#allocation3 + $0x58] sm:$0xff]
        %v1390 = vld [vmem:[#allocation3 + $0x60] sm:$0xff]
        %v1391 = vld [vmem:[#allocation3 + $0x68] sm:$0xff]
        %v1392 = vld [vmem:[#allocation3 + $0x70] sm:$0xff]
        %v1393 = vld [vmem:[#allocation3 + $0x78] sm:$0xff]
        %v1394 = vld [vmem:[#allocation3 + $0x80] sm:$0xff]
        %v1395 = vld [vmem:[#allocation3 + $0x88] sm:$0xff]
        %v1396 = vld [vmem:[#allocation3 + $0x90] sm:$0xff]
        %v1397 = vld [vmem:[#allocation3 + $0x98] sm:$0xff]
        %v1398 = vld [vmem:[#allocation3 + $0xa0] sm:$0xff]
        %v1399 = vld [vmem:[#allocation3 + $0xa8] sm:$0xff]
        %v1400 = vld [vmem:[#allocation3 + $0xb0] sm:$0xff]
        %v1401 = vld [vmem:[#allocation3 + $0xb8] sm:$0xff]
        %v1402 = vld [vmem:[#allocation3 + $0xc0] sm:$0xff]
        %v1403 = vld [vmem:[#allocation3 + $0xc8] sm:$0xff]
        %v1404 = vld [vmem:[#allocation3 + $0xd0] sm:$0xff]
        %v1405 = vld [vmem:[#allocation3 + $0xd8] sm:$0xff]
        %v1406 = vld [vmem:[#allocation3 + $0xe0] sm:$0xff]
        %v1407 = vld [vmem:[#allocation3 + $0xe8] sm:$0xff]
        %v1408 = vld [vmem:[#allocation3 + $0xf0] sm:$0xff]
        %v1409 = vld [vmem:[#allocation3 + $0xf8] sm:$0xff]
        %v1410 = vld [vmem:[#allocation10] sm:$0xff]
        %v1411 = vld [vmem:[#allocation10 + $0x8] sm:$0xff]
        %v1412 = vld [vmem:[#allocation10 + $0x10] sm:$0xff]
        %v1413 = vld [vmem:[#allocation10 + $0x18] sm:$0xff]
        %v1415 = vsel %vm373, %v1346, 0
        %v1418 = vsel %vm373, %v1347, 0
        %v1421 = vsel %vm373, %v1348, 0
        %v1424 = vsel %vm373, %v1349, 0
        %v1427 = vsel %vm373, %v1350, 0
        %v1430 = vsel %vm373, %v1351, 0
        %v1433 = vsel %vm373, %v1352, 0
        %v1436 = vsel %vm373, %v1353, 0
        %v1439 = vsel %vm373, %v1354, 0
        %v1442 = vsel %vm373, %v1355, 0
        %v1445 = vsel %vm373, %v1356, 0
        %v1448 = vsel %vm373, %v1357, 0
        %v1451 = vsel %vm373, %v1358, 0
        %v1454 = vsel %vm373, %v1359, 0
        %v1457 = vsel %vm373, %v1360, 0
        %v1460 = vsel %vm373, %v1361, 0
        %v1463 = vsel %vm373, %v1362, 0
        %v1466 = vsel %vm373, %v1363, 0
        %v1469 = vsel %vm373, %v1364, 0
        %v1472 = vsel %vm373, %v1365, 0
        %v1475 = vsel %vm373, %v1366, 0
        %v1478 = vsel %vm373, %v1367, 0
        %v1481 = vsel %vm373, %v1368, 0
        %v1484 = vsel %vm373, %v1369, 0
        %v1487 = vsel %vm373, %v1370, 0
        %v1490 = vsel %vm373, %v1371, 0
        %v1493 = vsel %vm373, %v1372, 0
        %v1496 = vsel %vm373, %v1373, 0
        %v1499 = vsel %vm373, %v1374, 0
        %v1502 = vsel %vm373, %v1375, 0
        %v1505 = vsel %vm373, %v1376, 0
        %v1508 = vsel %vm373, %v1377, 0
        %1510 = vmatprep.subr.mxu0 0.0
        %1511 = vmatpush1.msra.mxu0 %v1410
        %1512 = vmatprep.subr.mxu0 0.0
        %1513 = vmatpush1.msra.mxu0 %v1411
        %1514 = vmatprep.subr.mxu0 0.0
        %1515 = vmatpush1.msra.mxu0 %v1412
        %1516 = vmatprep.subr.mxu0 0.0
        %1517 = vmatpush1.msra.mxu0 %v1413
        %1518 = vmatprep.subr.mxu0 0.0
        %1519 = vmatpush1.msra.mxu0 0.0
        %1520 = vmatprep.subr.mxu0 0.0
        %1521 = vmatpush1.msra.mxu0 0.0
        %1522 = vmatprep.subr.mxu0 0.0
        %1523 = vmatpush1.msra.mxu0 0.0
        %1524 = vmatprep.subr.mxu0 0.0
        %1525 = vmatpush1.msra.mxu0 0.0
        %1526 = vmatprep.subr.mxu0 0.0
        %1527 = vmatpush1.msra.mxu0 0.0
        %1528 = vmatprep.subr.mxu0 0.0
        %1529 = vmatpush1.msra.mxu0 0.0
        %1530 = vmatprep.subr.mxu0 0.0
        %1531 = vmatpush1.msra.mxu0 0.0
        %1532 = vmatprep.subr.mxu0 0.0
        %1533 = vmatpush1.msra.mxu0 0.0
        %1534 = vmatprep.subr.mxu0 0.0
        %1535 = vmatpush1.msra.mxu0 0.0
        %1536 = vmatprep.subr.mxu0 0.0
        %1537 = vmatpush1.msra.mxu0 0.0
        %1538 = vmatprep.subr.mxu0 0.0
        %1539 = vmatpush1.msra.mxu0 0.0
        %1540 = vmatprep.subr.mxu0 0.0
        %1541 = vmatpush1.msra.mxu0 0.0
        %1542 = vmatprep.subr.mxu0 0.0
        %1543 = vmatpush1.msra.mxu0 0.0
        %1544 = vmatprep.subr.mxu0 0.0
        %1545 = vmatpush1.msra.mxu0 0.0
        %1546 = vmatprep.subr.mxu0 0.0
        %1547 = vmatpush1.msra.mxu0 0.0
        %1548 = vmatprep.subr.mxu0 0.0
        %1549 = vmatpush1.msra.mxu0 0.0
        %1550 = vmatprep.subr.mxu0 0.0
        %1551 = vmatpush1.msra.mxu0 0.0
        %1552 = vmatprep.subr.mxu0 0.0
        %1553 = vmatpush1.msra.mxu0 0.0
        %1554 = vmatprep.subr.mxu0 0.0
        %1555 = vmatpush1.msra.mxu0 0.0
        %1556 = vmatprep.subr.mxu0 0.0
        %1557 = vmatpush1.msra.mxu0 0.0
        %1558 = vmatprep.subr.mxu0 0.0
        %1559 = vmatpush1.msra.mxu0 0.0
        %1560 = vmatprep.subr.mxu0 0.0
        %1561 = vmatpush1.msra.mxu0 0.0
        %1562 = vmatprep.subr.mxu0 0.0
        %1563 = vmatpush1.msra.mxu0 0.0
        %1564 = vmatprep.subr.mxu0 0.0
        %1565 = vmatpush1.msra.mxu0 0.0
        %1566 = vmatprep.subr.mxu0 0.0
        %1567 = vmatpush1.msra.mxu0 0.0
        %1568 = vmatprep.subr.mxu0 0.0
        %1569 = vmatpush1.msra.mxu0 0.0
        %1570 = vmatprep.subr.mxu0 0.0
        %1571 = vmatpush1.msra.mxu0 0.0
        %1572 = vmatprep.subr.mxu0 0.0
        %1573 = vmatpush1.msra.mxu0 0.0
        %1574 = vmatprep.mubr.f32.mxu0 0.0
        %1575 = vmatmul.mubr.f32.gmra.mrb[0].mxu0 %v1415
        %v1576 = vpop.f32.mrb[0].mxu0
        %v1577 = vadd.f32 0.0, %v1576
        %v1578 = vpop.f32.mrb[0].mxu0
        %1579 = vmatprep.mubr.f32.mxu0 0.0
        %1580 = vmatmul.mubr.f32.gmra.mrb[0].mxu0 %v1418
        %v1581 = vpop.f32.mrb[0].mxu0
        %v1582 = vadd.f32 0.0, %v1581
        %v1583 = vpop.f32.mrb[0].mxu0
        %1584 = vmatprep.mubr.f32.mxu0 0.0
        %1585 = vmatmul.mubr.f32.gmra.mrb[0].mxu0 %v1421
        %v1586 = vpop.f32.mrb[0].mxu0
        %v1587 = vadd.f32 0.0, %v1586
        %v1588 = vpop.f32.mrb[0].mxu0
        %1589 = vmatprep.mubr.f32.mxu0 0.0
        %1590 = vmatmul.mubr.f32.gmra.mrb[0].mxu0 %v1424
        %v1591 = vpop.f32.mrb[0].mxu0
        %v1592 = vadd.f32 0.0, %v1591
        %v1593 = vpop.f32.mrb[0].mxu0
        %1594 = vmatprep.mubr.f32.mxu0 0.0
        %1595 = vmatmul.mubr.f32.gmra.mrb[0].mxu0 %v1427
        %v1596 = vpop.f32.mrb[0].mxu0
        %v1597 = vadd.f32 0.0, %v1596
        %v1598 = vpop.f32.mrb[0].mxu0
        %1599 = vmatprep.mubr.f32.mxu0 0.0
        %1600 = vmatmul.mubr.f32.gmra.mrb[0].mxu0 %v1430
        %v1601 = vpop.f32.mrb[0].mxu0
        %v1602 = vadd.f32 0.0, %v1601
        %v1603 = vpop.f32.mrb[0].mxu0
        %1604 = vmatprep.mubr.f32.mxu0 0.0
        %1605 = vmatmul.mubr.f32.gmra.mrb[0].mxu0 %v1433
        %v1606 = vpop.f32.mrb[0].mxu0
        %v1607 = vadd.f32 0.0, %v1606
        %v1608 = vpop.f32.mrb[0].mxu0
        %1609 = vmatprep.mubr.f32.mxu0 0.0
        %1610 = vmatmul.mubr.f32.gmra.mrb[0].mxu0 %v1436
        %v1611 = vpop.f32.mrb[0].mxu0
        %v1612 = vadd.f32 0.0, %v1611
        %v1613 = vpop.f32.mrb[0].mxu0
        %1614 = vmatprep.mubr.f32.mxu0 0.0
        %1615 = vmatmul.mubr.f32.gmra.mrb[0].mxu0 %v1439
        %v1616 = vpop.f32.mrb[0].mxu0
        %v1617 = vadd.f32 0.0, %v1616
        %v1618 = vpop.f32.mrb[0].mxu0
        %1619 = vmatprep.mubr.f32.mxu0 0.0
        %1620 = vmatmul.mubr.f32.gmra.mrb[0].mxu0 %v1442
        %v1621 = vpop.f32.mrb[0].mxu0
        %v1622 = vadd.f32 0.0, %v1621
        %v1623 = vpop.f32.mrb[0].mxu0
        %1624 = vmatprep.mubr.f32.mxu0 0.0
        %1625 = vmatmul.mubr.f32.gmra.mrb[0].mxu0 %v1445
        %v1626 = vpop.f32.mrb[0].mxu0
        %v1627 = vadd.f32 0.0, %v1626
        %v1628 = vpop.f32.mrb[0].mxu0
        %1629 = vmatprep.mubr.f32.mxu0 0.0
        %1630 = vmatmul.mubr.f32.gmra.mrb[0].mxu0 %v1448
        %v1631 = vpop.f32.mrb[0].mxu0
        %v1632 = vadd.f32 0.0, %v1631
        %v1633 = vpop.f32.mrb[0].mxu0
        %1634 = vmatprep.mubr.f32.mxu0 0.0
        %1635 = vmatmul.mubr.f32.gmra.mrb[0].mxu0 %v1451
        %v1636 = vpop.f32.mrb[0].mxu0
        %v1637 = vadd.f32 0.0, %v1636
        %v1638 = vpop.f32.mrb[0].mxu0
        %1639 = vmatprep.mubr.f32.mxu0 0.0
        %1640 = vmatmul.mubr.f32.gmra.mrb[0].mxu0 %v1454
        %v1641 = vpop.f32.mrb[0].mxu0
        %v1642 = vadd.f32 0.0, %v1641
        %v1643 = vpop.f32.mrb[0].mxu0
        %1644 = vmatprep.mubr.f32.mxu0 0.0
        %1645 = vmatmul.mubr.f32.gmra.mrb[0].mxu0 %v1457
        %v1646 = vpop.f32.mrb[0].mxu0
        %v1647 = vadd.f32 0.0, %v1646
        %v1648 = vpop.f32.mrb[0].mxu0
        %1649 = vmatprep.mubr.f32.mxu0 0.0
        %1650 = vmatmul.mubr.f32.gmra.mrb[0].mxu0 %v1460
        %v1651 = vpop.f32.mrb[0].mxu0
        %v1652 = vadd.f32 0.0, %v1651
        %v1653 = vpop.f32.mrb[0].mxu0
        %1654 = vmatprep.mubr.f32.mxu0 0.0
        %1655 = vmatmul.mubr.f32.gmra.mrb[0].mxu0 %v1463
        %v1656 = vpop.f32.mrb[0].mxu0
        %v1657 = vadd.f32 0.0, %v1656
        %v1658 = vpop.f32.mrb[0].mxu0
        %1659 = vmatprep.mubr.f32.mxu0 0.0
        %1660 = vmatmul.mubr.f32.gmra.mrb[0].mxu0 %v1466
        %v1661 = vpop.f32.mrb[0].mxu0
        %v1662 = vadd.f32 0.0, %v1661
        %v1663 = vpop.f32.mrb[0].mxu0
        %1664 = vmatprep.mubr.f32.mxu0 0.0
        %1665 = vmatmul.mubr.f32.gmra.mrb[0].mxu0 %v1469
        %v1666 = vpop.f32.mrb[0].mxu0
        %v1667 = vadd.f32 0.0, %v1666
        %v1668 = vpop.f32.mrb[0].mxu0
        %1669 = vmatprep.mubr.f32.mxu0 0.0
        %1670 = vmatmul.mubr.f32.gmra.mrb[0].mxu0 %v1472
        %v1671 = vpop.f32.mrb[0].mxu0
        %v1672 = vadd.f32 0.0, %v1671
        %v1673 = vpop.f32.mrb[0].mxu0
        %1674 = vmatprep.mubr.f32.mxu0 0.0
        %1675 = vmatmul.mubr.f32.gmra.mrb[0].mxu0 %v1475
        %v1676 = vpop.f32.mrb[0].mxu0
        %v1677 = vadd.f32 0.0, %v1676
        %v1678 = vpop.f32.mrb[0].mxu0
        %1679 = vmatprep.mubr.f32.mxu0 0.0
        %1680 = vmatmul.mubr.f32.gmra.mrb[0].mxu0 %v1478
        %v1681 = vpop.f32.mrb[0].mxu0
        %v1682 = vadd.f32 0.0, %v1681
        %v1683 = vpop.f32.mrb[0].mxu0
        %1684 = vmatprep.mubr.f32.mxu0 0.0
        %1685 = vmatmul.mubr.f32.gmra.mrb[0].mxu0 %v1481
        %v1686 = vpop.f32.mrb[0].mxu0
        %v1687 = vadd.f32 0.0, %v1686
        %v1688 = vpop.f32.mrb[0].mxu0
        %1689 = vmatprep.mubr.f32.mxu0 0.0
        %1690 = vmatmul.mubr.f32.gmra.mrb[0].mxu0 %v1484
        %v1691 = vpop.f32.mrb[0].mxu0
        %v1692 = vadd.f32 0.0, %v1691
        %v1693 = vpop.f32.mrb[0].mxu0
        %1694 = vmatprep.mubr.f32.mxu0 0.0
        %1695 = vmatmul.mubr.f32.gmra.mrb[0].mxu0 %v1487
        %v1696 = vpop.f32.mrb[0].mxu0
        %v1697 = vadd.f32 0.0, %v1696
        %v1698 = vpop.f32.mrb[0].mxu0
        %1699 = vmatprep.mubr.f32.mxu0 0.0
        %1700 = vmatmul.mubr.f32.gmra.mrb[0].mxu0 %v1490
        %v1701 = vpop.f32.mrb[0].mxu0
        %v1702 = vadd.f32 0.0, %v1701
        %v1703 = vpop.f32.mrb[0].mxu0
        %1704 = vmatprep.mubr.f32.mxu0 0.0
        %1705 = vmatmul.mubr.f32.gmra.mrb[0].mxu0 %v1493
        %v1706 = vpop.f32.mrb[0].mxu0
        %v1707 = vadd.f32 0.0, %v1706
        %v1708 = vpop.f32.mrb[0].mxu0
        %1709 = vmatprep.mubr.f32.mxu0 0.0
        %1710 = vmatmul.mubr.f32.gmra.mrb[0].mxu0 %v1496
        %v1711 = vpop.f32.mrb[0].mxu0
        %v1712 = vadd.f32 0.0, %v1711
        %v1713 = vpop.f32.mrb[0].mxu0
        %1714 = vmatprep.mubr.f32.mxu0 0.0
        %1715 = vmatmul.mubr.f32.gmra.mrb[0].mxu0 %v1499
        %v1716 = vpop.f32.mrb[0].mxu0
        %v1717 = vadd.f32 0.0, %v1716
        %v1718 = vpop.f32.mrb[0].mxu0
        %1719 = vmatprep.mubr.f32.mxu0 0.0
        %1720 = vmatmul.mubr.f32.gmra.mrb[0].mxu0 %v1502
        %v1721 = vpop.f32.mrb[0].mxu0
        %v1722 = vadd.f32 0.0, %v1721
        %v1723 = vpop.f32.mrb[0].mxu0
        %1724 = vmatprep.mubr.f32.mxu0 0.0
        %1725 = vmatmul.mubr.f32.gmra.mrb[0].mxu0 %v1505
        %v1726 = vpop.f32.mrb[0].mxu0
        %v1727 = vadd.f32 0.0, %v1726
        %v1728 = vpop.f32.mrb[0].mxu0
        %1729 = vmatprep.mubr.f32.mxu0 0.0
        %1730 = vmatmul.mubr.f32.gmra.mrb[0].mxu0 %v1508
        %v1731 = vpop.f32.mrb[0].mxu0
        %v1732 = vadd.f32 0.0, %v1731
        %v1733 = vpop.f32.mrb[0].mxu0
        %1734 = vdwg.mxu0
        %v1735 = vadd.f32 %v1378, %v1577
        %v1736 = vadd.f32 %v1379, %v1582
        %v1737 = vadd.f32 %v1380, %v1587
        %v1738 = vadd.f32 %v1381, %v1592
        %v1739 = vadd.f32 %v1382, %v1597
        %v1740 = vadd.f32 %v1383, %v1602
        %v1741 = vadd.f32 %v1384, %v1607
        %v1742 = vadd.f32 %v1385, %v1612
        %v1743 = vadd.f32 %v1386, %v1617
        %v1744 = vadd.f32 %v1387, %v1622
        %v1745 = vadd.f32 %v1388, %v1627
        %v1746 = vadd.f32 %v1389, %v1632
        %v1747 = vadd.f32 %v1390, %v1637
        %v1748 = vadd.f32 %v1391, %v1642
        %v1749 = vadd.f32 %v1392, %v1647
        %v1750 = vadd.f32 %v1393, %v1652
        %v1751 = vadd.f32 %v1394, %v1657
        %v1752 = vadd.f32 %v1395, %v1662
        %v1753 = vadd.f32 %v1396, %v1667
        %v1754 = vadd.f32 %v1397, %v1672
        %v1755 = vadd.f32 %v1398, %v1677
        %v1756 = vadd.f32 %v1399, %v1682
        %v1757 = vadd.f32 %v1400, %v1687
        %v1758 = vadd.f32 %v1401, %v1692
        %v1759 = vadd.f32 %v1402, %v1697
        %v1760 = vadd.f32 %v1403, %v1702
        %v1761 = vadd.f32 %v1404, %v1707
        %v1762 = vadd.f32 %v1405, %v1712
        %v1763 = vadd.f32 %v1406, %v1717
        %v1764 = vadd.f32 %v1407, %v1722
        %v1765 = vadd.f32 %v1408, %v1727
        %v1766 = vadd.f32 %v1409, %v1732
        %1767 = vst.msk [vmem:[#allocation3] sm:$0xff] %vm1313, %v1735
        %1768 = vst.msk [vmem:[#allocation3 + $0x8] sm:$0xff] %vm1313, %v1736
        %1769 = vst.msk [vmem:[#allocation3 + $0x10] sm:$0xff] %vm1313, %v1737
        %1770 = vst.msk [vmem:[#allocation3 + $0x18] sm:$0xff] %vm1313, %v1738
        %1771 = vst.msk [vmem:[#allocation3 + $0x20] sm:$0xff] %vm1313, %v1739
        %1772 = vst.msk [vmem:[#allocation3 + $0x28] sm:$0xff] %vm1313, %v1740
        %1773 = vst.msk [vmem:[#allocation3 + $0x30] sm:$0xff] %vm1313, %v1741
        %1774 = vst.msk [vmem:[#allocation3 + $0x38] sm:$0xff] %vm1313, %v1742
        %1775 = vst.msk [vmem:[#allocation3 + $0x40] sm:$0xff] %vm1313, %v1743
        %1776 = vst.msk [vmem:[#allocation3 + $0x48] sm:$0xff] %vm1313, %v1744
        %1777 = vst.msk [vmem:[#allocation3 + $0x50] sm:$0xff] %vm1313, %v1745
        %1778 = vst.msk [vmem:[#allocation3 + $0x58] sm:$0xff] %vm1313, %v1746
        %1779 = vst.msk [vmem:[#allocation3 + $0x60] sm:$0xff] %vm1313, %v1747
        %1780 = vst.msk [vmem:[#allocation3 + $0x68] sm:$0xff] %vm1313, %v1748
        %1781 = vst.msk [vmem:[#allocation3 + $0x70] sm:$0xff] %vm1313, %v1749
        %1782 = vst.msk [vmem:[#allocation3 + $0x78] sm:$0xff] %vm1313, %v1750
        %1783 = vst.msk [vmem:[#allocation3 + $0x80] sm:$0xff] %vm1313, %v1751
        %1784 = vst.msk [vmem:[#allocation3 + $0x88] sm:$0xff] %vm1313, %v1752
        %1785 = vst.msk [vmem:[#allocation3 + $0x90] sm:$0xff] %vm1313, %v1753
        %1786 = vst.msk [vmem:[#allocation3 + $0x98] sm:$0xff] %vm1313, %v1754
        %1787 = vst.msk [vmem:[#allocation3 + $0xa0] sm:$0xff] %vm1313, %v1755
        %1788 = vst.msk [vmem:[#allocation3 + $0xa8] sm:$0xff] %vm1313, %v1756
        %1789 = vst.msk [vmem:[#allocation3 + $0xb0] sm:$0xff] %vm1313, %v1757
        %1790 = vst.msk [vmem:[#allocation3 + $0xb8] sm:$0xff] %vm1313, %v1758
        %1791 = vst.msk [vmem:[#allocation3 + $0xc0] sm:$0xff] %vm1313, %v1759
        %1792 = vst.msk [vmem:[#allocation3 + $0xc8] sm:$0xff] %vm1313, %v1760
        %1793 = vst.msk [vmem:[#allocation3 + $0xd0] sm:$0xff] %vm1313, %v1761
        %1794 = vst.msk [vmem:[#allocation3 + $0xd8] sm:$0xff] %vm1313, %v1762
        %1795 = vst.msk [vmem:[#allocation3 + $0xe0] sm:$0xff] %vm1313, %v1763
        %1796 = vst.msk [vmem:[#allocation3 + $0xe8] sm:$0xff] %vm1313, %v1764
        %1797 = vst.msk [vmem:[#allocation3 + $0xf0] sm:$0xff] %vm1313, %v1765
        %1798 = vst.msk [vmem:[#allocation3 + $0xf8] sm:$0xff] %vm1313, %v1766
        %v1799 = vld [vmem:[#allocation2 + $0x1] sm:$0xff]
        %v1800 = vld [vmem:[#allocation2 + $0x9] sm:$0xff]
        %v1801 = vld [vmem:[#allocation2 + $0x19] sm:$0xff]
        %v1802 = vld [vmem:[#allocation2 + $0x21] sm:$0xff]
        %v1803 = vld [vmem:[#allocation2 + $0x31] sm:$0xff]
        %v1804 = vld [vmem:[#allocation2 + $0x39] sm:$0xff]
        %v1805 = vld [vmem:[#allocation2 + $0x49] sm:$0xff]
        %v1806 = vld [vmem:[#allocation2 + $0x51] sm:$0xff]
        %v1807 = vld [vmem:[#allocation2 + $0x61] sm:$0xff]
        %v1808 = vld [vmem:[#allocation2 + $0x69] sm:$0xff]
        %v1809 = vld [vmem:[#allocation2 + $0x79] sm:$0xff]
        %v1810 = vld [vmem:[#allocation2 + $0x81] sm:$0xff]
        %v1811 = vld [vmem:[#allocation2 + $0x91] sm:$0xff]
        %v1812 = vld [vmem:[#allocation2 + $0x99] sm:$0xff]
        %v1813 = vld [vmem:[#allocation2 + $0xa9] sm:$0xff]
        %v1814 = vld [vmem:[#allocation2 + $0xb1] sm:$0xff]
        %v1815 = vld [vmem:[#allocation2 + $0xc1] sm:$0xff]
        %v1816 = vld [vmem:[#allocation2 + $0xc9] sm:$0xff]
        %v1817 = vld [vmem:[#allocation2 + $0xd9] sm:$0xff]
        %v1818 = vld [vmem:[#allocation2 + $0xe1] sm:$0xff]
        %v1819 = vld [vmem:[#allocation2 + $0xf1] sm:$0xff]
        %v1820 = vld [vmem:[#allocation2 + $0xf9] sm:$0xff]
        %v1821 = vld [vmem:[#allocation2 + $0x109] sm:$0xff]
        %v1822 = vld [vmem:[#allocation2 + $0x111] sm:$0xff]
        %v1823 = vld [vmem:[#allocation2 + $0x121] sm:$0xff]
        %v1824 = vld [vmem:[#allocation2 + $0x129] sm:$0xff]
        %v1825 = vld [vmem:[#allocation2 + $0x139] sm:$0xff]
        %v1826 = vld [vmem:[#allocation2 + $0x141] sm:$0xff]
        %v1827 = vld [vmem:[#allocation2 + $0x151] sm:$0xff]
        %v1828 = vld [vmem:[#allocation2 + $0x159] sm:$0xff]
        %v1829 = vld [vmem:[#allocation2 + $0x169] sm:$0xff]
        %v1830 = vld [vmem:[#allocation2 + $0x171] sm:$0xff]
        %v1831 = vld [vmem:[#allocation3] sm:$0xff]
        %v1832 = vld [vmem:[#allocation3 + $0x8] sm:$0xff]
        %v1833 = vld [vmem:[#allocation3 + $0x10] sm:$0xff]
        %v1834 = vld [vmem:[#allocation3 + $0x18] sm:$0xff]
        %v1835 = vld [vmem:[#allocation3 + $0x20] sm:$0xff]
        %v1836 = vld [vmem:[#allocation3 + $0x28] sm:$0xff]
        %v1837 = vld [vmem:[#allocation3 + $0x30] sm:$0xff]
        %v1838 = vld [vmem:[#allocation3 + $0x38] sm:$0xff]
        %v1839 = vld [vmem:[#allocation3 + $0x40] sm:$0xff]
        %v1840 = vld [vmem:[#allocation3 + $0x48] sm:$0xff]
        %v1841 = vld [vmem:[#allocation3 + $0x50] sm:$0xff]
        %v1842 = vld [vmem:[#allocation3 + $0x58] sm:$0xff]
        %v1843 = vld [vmem:[#allocation3 + $0x60] sm:$0xff]
        %v1844 = vld [vmem:[#allocation3 + $0x68] sm:$0xff]
        %v1845 = vld [vmem:[#allocation3 + $0x70] sm:$0xff]
        %v1846 = vld [vmem:[#allocation3 + $0x78] sm:$0xff]
        %v1847 = vld [vmem:[#allocation3 + $0x80] sm:$0xff]
        %v1848 = vld [vmem:[#allocation3 + $0x88] sm:$0xff]
        %v1849 = vld [vmem:[#allocation3 + $0x90] sm:$0xff]
        %v1850 = vld [vmem:[#allocation3 + $0x98] sm:$0xff]
        %v1851 = vld [vmem:[#allocation3 + $0xa0] sm:$0xff]
        %v1852 = vld [vmem:[#allocation3 + $0xa8] sm:$0xff]
        %v1853 = vld [vmem:[#allocation3 + $0xb0] sm:$0xff]
        %v1854 = vld [vmem:[#allocation3 + $0xb8] sm:$0xff]
        %v1855 = vld [vmem:[#allocation3 + $0xc0] sm:$0xff]
        %v1856 = vld [vmem:[#allocation3 + $0xc8] sm:$0xff]
        %v1857 = vld [vmem:[#allocation3 + $0xd0] sm:$0xff]
        %v1858 = vld [vmem:[#allocation3 + $0xd8] sm:$0xff]
        %v1859 = vld [vmem:[#allocation3 + $0xe0] sm:$0xff]
        %v1860 = vld [vmem:[#allocation3 + $0xe8] sm:$0xff]
        %v1861 = vld [vmem:[#allocation3 + $0xf0] sm:$0xff]
        %v1862 = vld [vmem:[#allocation3 + $0xf8] sm:$0xff]
        %s1863 = scalar_lea.vmem [#allocation10], 32
        %v1864 = vld [vmem:[%s1863] sm:$0xff]
        %v1865 = vld [vmem:[%s1863 + $0x8] sm:$0xff]
        %v1866 = vld [vmem:[%s1863 + $0x10] sm:$0xff]
        %v1867 = vld [vmem:[%s1863 + $0x18] sm:$0xff]
        %v1869 = vsel %vm373, %v1799, 0
        %v1872 = vsel %vm373, %v1800, 0
        %v1875 = vsel %vm373, %v1801, 0
        %v1878 = vsel %vm373, %v1802, 0
        %v1881 = vsel %vm373, %v1803, 0
        %v1884 = vsel %vm373, %v1804, 0
        %v1887 = vsel %vm373, %v1805, 0
        %v1890 = vsel %vm373, %v1806, 0
        %v1893 = vsel %vm373, %v1807, 0
        %v1896 = vsel %vm373, %v1808, 0
        %v1899 = vsel %vm373, %v1809, 0
        %v1902 = vsel %vm373, %v1810, 0
        %v1905 = vsel %vm373, %v1811, 0
        %v1908 = vsel %vm373, %v1812, 0
        %v1911 = vsel %vm373, %v1813, 0
        %v1914 = vsel %vm373, %v1814, 0
        %v1917 = vsel %vm373, %v1815, 0
        %v1920 = vsel %vm373, %v1816, 0
        %v1923 = vsel %vm373, %v1817, 0
        %v1926 = vsel %vm373, %v1818, 0
        %v1929 = vsel %vm373, %v1819, 0
        %v1932 = vsel %vm373, %v1820, 0
        %v1935 = vsel %vm373, %v1821, 0
        %v1938 = vsel %vm373, %v1822, 0
        %v1941 = vsel %vm373, %v1823, 0
        %v1944 = vsel %vm373, %v1824, 0
        %v1947 = vsel %vm373, %v1825, 0
        %v1950 = vsel %vm373, %v1826, 0
        %v1953 = vsel %vm373, %v1827, 0
        %v1956 = vsel %vm373, %v1828, 0
        %v1959 = vsel %vm373, %v1829, 0
        %v1962 = vsel %vm373, %v1830, 0
        %1964 = vmatprep.subr.mxu0 0.0
        %1965 = vmatpush1.msra.mxu0 %v1864
        %1966 = vmatprep.subr.mxu0 0.0
        %1967 = vmatpush1.msra.mxu0 %v1865
        %1968 = vmatprep.subr.mxu0 0.0
        %1969 = vmatpush1.msra.mxu0 %v1866
        %1970 = vmatprep.subr.mxu0 0.0
        %1971 = vmatpush1.msra.mxu0 %v1867
        %1972 = vmatprep.subr.mxu0 0.0
        %1973 = vmatpush1.msra.mxu0 0.0
        %1974 = vmatprep.subr.mxu0 0.0
        %1975 = vmatpush1.msra.mxu0 0.0
        %1976 = vmatprep.subr.mxu0 0.0
        %1977 = vmatpush1.msra.mxu0 0.0
        %1978 = vmatprep.subr.mxu0 0.0
        %1979 = vmatpush1.msra.mxu0 0.0
        %1980 = vmatprep.subr.mxu0 0.0
        %1981 = vmatpush1.msra.mxu0 0.0
        %1982 = vmatprep.subr.mxu0 0.0
        %1983 = vmatpush1.msra.mxu0 0.0
        %1984 = vmatprep.subr.mxu0 0.0
        %1985 = vmatpush1.msra.mxu0 0.0
        %1986 = vmatprep.subr.mxu0 0.0
        %1987 = vmatpush1.msra.mxu0 0.0
        %1988 = vmatprep.subr.mxu0 0.0
        %1989 = vmatpush1.msra.mxu0 0.0
        %1990 = vmatprep.subr.mxu0 0.0
        %1991 = vmatpush1.msra.mxu0 0.0
        %1992 = vmatprep.subr.mxu0 0.0
        %1993 = vmatpush1.msra.mxu0 0.0
        %1994 = vmatprep.subr.mxu0 0.0
        %1995 = vmatpush1.msra.mxu0 0.0
        %1996 = vmatprep.subr.mxu0 0.0
        %1997 = vmatpush1.msra.mxu0 0.0
        %1998 = vmatprep.subr.mxu0 0.0
        %1999 = vmatpush1.msra.mxu0 0.0
        %2000 = vmatprep.subr.mxu0 0.0
        %2001 = vmatpush1.msra.mxu0 0.0
        %2002 = vmatprep.subr.mxu0 0.0
        %2003 = vmatpush1.msra.mxu0 0.0
        %2004 = vmatprep.subr.mxu0 0.0
        %2005 = vmatpush1.msra.mxu0 0.0
        %2006 = vmatprep.subr.mxu0 0.0
        %2007 = vmatpush1.msra.mxu0 0.0
        %2008 = vmatprep.subr.mxu0 0.0
        %2009 = vmatpush1.msra.mxu0 0.0
        %2010 = vmatprep.subr.mxu0 0.0
        %2011 = vmatpush1.msra.mxu0 0.0
        %2012 = vmatprep.subr.mxu0 0.0
        %2013 = vmatpush1.msra.mxu0 0.0
        %2014 = vmatprep.subr.mxu0 0.0
        %2015 = vmatpush1.msra.mxu0 0.0
        %2016 = vmatprep.subr.mxu0 0.0
        %2017 = vmatpush1.msra.mxu0 0.0
        %2018 = vmatprep.subr.mxu0 0.0
        %2019 = vmatpush1.msra.mxu0 0.0
        %2020 = vmatprep.subr.mxu0 0.0
        %2021 = vmatpush1.msra.mxu0 0.0
        %2022 = vmatprep.subr.mxu0 0.0
        %2023 = vmatpush1.msra.mxu0 0.0
        %2024 = vmatprep.subr.mxu0 0.0
        %2025 = vmatpush1.msra.mxu0 0.0
        %2026 = vmatprep.subr.mxu0 0.0
        %2027 = vmatpush1.msra.mxu0 0.0
        %2028 = vmatprep.mubr.f32.mxu0 0.0
        %2029 = vmatmul.mubr.f32.gmra.mrb[0].mxu0 %v1869
        %v2030 = vpop.f32.mrb[0].mxu0
        %v2031 = vadd.f32 0.0, %v2030
        %v2032 = vpop.f32.mrb[0].mxu0
        %2033 = vmatprep.mubr.f32.mxu0 0.0
        %2034 = vmatmul.mubr.f32.gmra.mrb[0].mxu0 %v1872
        %v2035 = vpop.f32.mrb[0].mxu0
        %v2036 = vadd.f32 0.0, %v2035
        %v2037 = vpop.f32.mrb[0].mxu0
        %2038 = vmatprep.mubr.f32.mxu0 0.0
        %2039 = vmatmul.mubr.f32.gmra.mrb[0].mxu0 %v1875
        %v2040 = vpop.f32.mrb[0].mxu0
        %v2041 = vadd.f32 0.0, %v2040
        %v2042 = vpop.f32.mrb[0].mxu0
        %2043 = vmatprep.mubr.f32.mxu0 0.0
        %2044 = vmatmul.mubr.f32.gmra.mrb[0].mxu0 %v1878
        %v2045 = vpop.f32.mrb[0].mxu0
        %v2046 = vadd.f32 0.0, %v2045
        %v2047 = vpop.f32.mrb[0].mxu0
        %2048 = vmatprep.mubr.f32.mxu0 0.0
        %2049 = vmatmul.mubr.f32.gmra.mrb[0].mxu0 %v1881
        %v2050 = vpop.f32.mrb[0].mxu0
        %v2051 = vadd.f32 0.0, %v2050
        %v2052 = vpop.f32.mrb[0].mxu0
        %2053 = vmatprep.mubr.f32.mxu0 0.0
        %2054 = vmatmul.mubr.f32.gmra.mrb[0].mxu0 %v1884
        %v2055 = vpop.f32.mrb[0].mxu0
        %v2056 = vadd.f32 0.0, %v2055
        %v2057 = vpop.f32.mrb[0].mxu0
        %2058 = vmatprep.mubr.f32.mxu0 0.0
        %2059 = vmatmul.mubr.f32.gmra.mrb[0].mxu0 %v1887
        %v2060 = vpop.f32.mrb[0].mxu0
        %v2061 = vadd.f32 0.0, %v2060
        %v2062 = vpop.f32.mrb[0].mxu0
        %2063 = vmatprep.mubr.f32.mxu0 0.0
        %2064 = vmatmul.mubr.f32.gmra.mrb[0].mxu0 %v1890
        %v2065 = vpop.f32.mrb[0].mxu0
        %v2066 = vadd.f32 0.0, %v2065
        %v2067 = vpop.f32.mrb[0].mxu0
        %2068 = vmatprep.mubr.f32.mxu0 0.0
        %2069 = vmatmul.mubr.f32.gmra.mrb[0].mxu0 %v1893
        %v2070 = vpop.f32.mrb[0].mxu0
        %v2071 = vadd.f32 0.0, %v2070
        %v2072 = vpop.f32.mrb[0].mxu0
        %2073 = vmatprep.mubr.f32.mxu0 0.0
        %2074 = vmatmul.mubr.f32.gmra.mrb[0].mxu0 %v1896
        %v2075 = vpop.f32.mrb[0].mxu0
        %v2076 = vadd.f32 0.0, %v2075
        %v2077 = vpop.f32.mrb[0].mxu0
        %2078 = vmatprep.mubr.f32.mxu0 0.0
        %2079 = vmatmul.mubr.f32.gmra.mrb[0].mxu0 %v1899
        %v2080 = vpop.f32.mrb[0].mxu0
        %v2081 = vadd.f32 0.0, %v2080
        %v2082 = vpop.f32.mrb[0].mxu0
        %2083 = vmatprep.mubr.f32.mxu0 0.0
        %2084 = vmatmul.mubr.f32.gmra.mrb[0].mxu0 %v1902
        %v2085 = vpop.f32.mrb[0].mxu0
        %v2086 = vadd.f32 0.0, %v2085
        %v2087 = vpop.f32.mrb[0].mxu0
        %2088 = vmatprep.mubr.f32.mxu0 0.0
        %2089 = vmatmul.mubr.f32.gmra.mrb[0].mxu0 %v1905
        %v2090 = vpop.f32.mrb[0].mxu0
        %v2091 = vadd.f32 0.0, %v2090
        %v2092 = vpop.f32.mrb[0].mxu0
        %2093 = vmatprep.mubr.f32.mxu0 0.0
        %2094 = vmatmul.mubr.f32.gmra.mrb[0].mxu0 %v1908
        %v2095 = vpop.f32.mrb[0].mxu0
        %v2096 = vadd.f32 0.0, %v2095
        %v2097 = vpop.f32.mrb[0].mxu0
        %2098 = vmatprep.mubr.f32.mxu0 0.0
        %2099 = vmatmul.mubr.f32.gmra.mrb[0].mxu0 %v1911
        %v2100 = vpop.f32.mrb[0].mxu0
        %v2101 = vadd.f32 0.0, %v2100
        %v2102 = vpop.f32.mrb[0].mxu0
        %2103 = vmatprep.mubr.f32.mxu0 0.0
        %2104 = vmatmul.mubr.f32.gmra.mrb[0].mxu0 %v1914
        %v2105 = vpop.f32.mrb[0].mxu0
        %v2106 = vadd.f32 0.0, %v2105
        %v2107 = vpop.f32.mrb[0].mxu0
        %2108 = vmatprep.mubr.f32.mxu0 0.0
        %2109 = vmatmul.mubr.f32.gmra.mrb[0].mxu0 %v1917
        %v2110 = vpop.f32.mrb[0].mxu0
        %v2111 = vadd.f32 0.0, %v2110
        %v2112 = vpop.f32.mrb[0].mxu0
        %2113 = vmatprep.mubr.f32.mxu0 0.0
        %2114 = vmatmul.mubr.f32.gmra.mrb[0].mxu0 %v1920
        %v2115 = vpop.f32.mrb[0].mxu0
        %v2116 = vadd.f32 0.0, %v2115
        %v2117 = vpop.f32.mrb[0].mxu0
        %2118 = vmatprep.mubr.f32.mxu0 0.0
        %2119 = vmatmul.mubr.f32.gmra.mrb[0].mxu0 %v1923
        %v2120 = vpop.f32.mrb[0].mxu0
        %v2121 = vadd.f32 0.0, %v2120
        %v2122 = vpop.f32.mrb[0].mxu0
        %2123 = vmatprep.mubr.f32.mxu0 0.0
        %2124 = vmatmul.mubr.f32.gmra.mrb[0].mxu0 %v1926
        %v2125 = vpop.f32.mrb[0].mxu0
        %v2126 = vadd.f32 0.0, %v2125
        %v2127 = vpop.f32.mrb[0].mxu0
        %2128 = vmatprep.mubr.f32.mxu0 0.0
        %2129 = vmatmul.mubr.f32.gmra.mrb[0].mxu0 %v1929
        %v2130 = vpop.f32.mrb[0].mxu0
        %v2131 = vadd.f32 0.0, %v2130
        %v2132 = vpop.f32.mrb[0].mxu0
        %2133 = vmatprep.mubr.f32.mxu0 0.0
        %2134 = vmatmul.mubr.f32.gmra.mrb[0].mxu0 %v1932
        %v2135 = vpop.f32.mrb[0].mxu0
        %v2136 = vadd.f32 0.0, %v2135
        %v2137 = vpop.f32.mrb[0].mxu0
        %2138 = vmatprep.mubr.f32.mxu0 0.0
        %2139 = vmatmul.mubr.f32.gmra.mrb[0].mxu0 %v1935
        %v2140 = vpop.f32.mrb[0].mxu0
        %v2141 = vadd.f32 0.0, %v2140
        %v2142 = vpop.f32.mrb[0].mxu0
        %2143 = vmatprep.mubr.f32.mxu0 0.0
        %2144 = vmatmul.mubr.f32.gmra.mrb[0].mxu0 %v1938
        %v2145 = vpop.f32.mrb[0].mxu0
        %v2146 = vadd.f32 0.0, %v2145
        %v2147 = vpop.f32.mrb[0].mxu0
        %2148 = vmatprep.mubr.f32.mxu0 0.0
        %2149 = vmatmul.mubr.f32.gmra.mrb[0].mxu0 %v1941
        %v2150 = vpop.f32.mrb[0].mxu0
        %v2151 = vadd.f32 0.0, %v2150
        %v2152 = vpop.f32.mrb[0].mxu0
        %2153 = vmatprep.mubr.f32.mxu0 0.0
        %2154 = vmatmul.mubr.f32.gmra.mrb[0].mxu0 %v1944
        %v2155 = vpop.f32.mrb[0].mxu0
        %v2156 = vadd.f32 0.0, %v2155
        %v2157 = vpop.f32.mrb[0].mxu0
        %2158 = vmatprep.mubr.f32.mxu0 0.0
        %2159 = vmatmul.mubr.f32.gmra.mrb[0].mxu0 %v1947
        %v2160 = vpop.f32.mrb[0].mxu0
        %v2161 = vadd.f32 0.0, %v2160
        %v2162 = vpop.f32.mrb[0].mxu0
        %2163 = vmatprep.mubr.f32.mxu0 0.0
        %2164 = vmatmul.mubr.f32.gmra.mrb[0].mxu0 %v1950
        %v2165 = vpop.f32.mrb[0].mxu0
        %v2166 = vadd.f32 0.0, %v2165
        %v2167 = vpop.f32.mrb[0].mxu0
        %2168 = vmatprep.mubr.f32.mxu0 0.0
        %2169 = vmatmul.mubr.f32.gmra.mrb[0].mxu0 %v1953
        %v2170 = vpop.f32.mrb[0].mxu0
        %v2171 = vadd.f32 0.0, %v2170
        %v2172 = vpop.f32.mrb[0].mxu0
        %2173 = vmatprep.mubr.f32.mxu0 0.0
        %2174 = vmatmul.mubr.f32.gmra.mrb[0].mxu0 %v1956
        %v2175 = vpop.f32.mrb[0].mxu0
        %v2176 = vadd.f32 0.0, %v2175
        %v2177 = vpop.f32.mrb[0].mxu0
        %2178 = vmatprep.mubr.f32.mxu0 0.0
        %2179 = vmatmul.mubr.f32.gmra.mrb[0].mxu0 %v1959
        %v2180 = vpop.f32.mrb[0].mxu0
        %v2181 = vadd.f32 0.0, %v2180
        %v2182 = vpop.f32.mrb[0].mxu0
        %2183 = vmatprep.mubr.f32.mxu0 0.0
        %2184 = vmatmul.mubr.f32.gmra.mrb[0].mxu0 %v1962
        %v2185 = vpop.f32.mrb[0].mxu0
        %v2186 = vadd.f32 0.0, %v2185
        %v2187 = vpop.f32.mrb[0].mxu0
        %2188 = vdwg.mxu0
        %v2189 = vadd.f32 %v1831, %v2031
        %v2190 = vadd.f32 %v1832, %v2036
        %v2191 = vadd.f32 %v1833, %v2041
        %v2192 = vadd.f32 %v1834, %v2046
        %v2193 = vadd.f32 %v1835, %v2051
        %v2194 = vadd.f32 %v1836, %v2056
        %v2195 = vadd.f32 %v1837, %v2061
        %v2196 = vadd.f32 %v1838, %v2066
        %v2197 = vadd.f32 %v1839, %v2071
        %v2198 = vadd.f32 %v1840, %v2076
        %v2199 = vadd.f32 %v1841, %v2081
        %v2200 = vadd.f32 %v1842, %v2086
        %v2201 = vadd.f32 %v1843, %v2091
        %v2202 = vadd.f32 %v1844, %v2096
        %v2203 = vadd.f32 %v1845, %v2101
        %v2204 = vadd.f32 %v1846, %v2106
        %v2205 = vadd.f32 %v1847, %v2111
        %v2206 = vadd.f32 %v1848, %v2116
        %v2207 = vadd.f32 %v1849, %v2121
        %v2208 = vadd.f32 %v1850, %v2126
        %v2209 = vadd.f32 %v1851, %v2131
        %v2210 = vadd.f32 %v1852, %v2136
        %v2211 = vadd.f32 %v1853, %v2141
        %v2212 = vadd.f32 %v1854, %v2146
        %v2213 = vadd.f32 %v1855, %v2151
        %v2214 = vadd.f32 %v1856, %v2156
        %v2215 = vadd.f32 %v1857, %v2161
        %v2216 = vadd.f32 %v1858, %v2166
        %v2217 = vadd.f32 %v1859, %v2171
        %v2218 = vadd.f32 %v1860, %v2176
        %v2219 = vadd.f32 %v1861, %v2181
        %v2220 = vadd.f32 %v1862, %v2186
        %2221 = vst.msk [vmem:[#allocation3] sm:$0xff] %vm1313, %v2189
        %2222 = vst.msk [vmem:[#allocation3 + $0x8] sm:$0xff] %vm1313, %v2190
        %2223 = vst.msk [vmem:[#allocation3 + $0x10] sm:$0xff] %vm1313, %v2191
        %2224 = vst.msk [vmem:[#allocation3 + $0x18] sm:$0xff] %vm1313, %v2192
        %2225 = vst.msk [vmem:[#allocation3 + $0x20] sm:$0xff] %vm1313, %v2193
        %2226 = vst.msk [vmem:[#allocation3 + $0x28] sm:$0xff] %vm1313, %v2194
        %2227 = vst.msk [vmem:[#allocation3 + $0x30] sm:$0xff] %vm1313, %v2195
        %2228 = vst.msk [vmem:[#allocation3 + $0x38] sm:$0xff] %vm1313, %v2196
        %2229 = vst.msk [vmem:[#allocation3 + $0x40] sm:$0xff] %vm1313, %v2197
        %2230 = vst.msk [vmem:[#allocation3 + $0x48] sm:$0xff] %vm1313, %v2198
        %2231 = vst.msk [vmem:[#allocation3 + $0x50] sm:$0xff] %vm1313, %v2199
        %2232 = vst.msk [vmem:[#allocation3 + $0x58] sm:$0xff] %vm1313, %v2200
        %2233 = vst.msk [vmem:[#allocation3 + $0x60] sm:$0xff] %vm1313, %v2201
        %2234 = vst.msk [vmem:[#allocation3 + $0x68] sm:$0xff] %vm1313, %v2202
        %2235 = vst.msk [vmem:[#allocation3 + $0x70] sm:$0xff] %vm1313, %v2203
        %2236 = vst.msk [vmem:[#allocation3 + $0x78] sm:$0xff] %vm1313, %v2204
        %2237 = vst.msk [vmem:[#allocation3 + $0x80] sm:$0xff] %vm1313, %v2205
        %2238 = vst.msk [vmem:[#allocation3 + $0x88] sm:$0xff] %vm1313, %v2206
        %2239 = vst.msk [vmem:[#allocation3 + $0x90] sm:$0xff] %vm1313, %v2207
        %2240 = vst.msk [vmem:[#allocation3 + $0x98] sm:$0xff] %vm1313, %v2208
        %2241 = vst.msk [vmem:[#allocation3 + $0xa0] sm:$0xff] %vm1313, %v2209
        %2242 = vst.msk [vmem:[#allocation3 + $0xa8] sm:$0xff] %vm1313, %v2210
        %2243 = vst.msk [vmem:[#allocation3 + $0xb0] sm:$0xff] %vm1313, %v2211
        %2244 = vst.msk [vmem:[#allocation3 + $0xb8] sm:$0xff] %vm1313, %v2212
        %2245 = vst.msk [vmem:[#allocation3 + $0xc0] sm:$0xff] %vm1313, %v2213
        %2246 = vst.msk [vmem:[#allocation3 + $0xc8] sm:$0xff] %vm1313, %v2214
        %2247 = vst.msk [vmem:[#allocation3 + $0xd0] sm:$0xff] %vm1313, %v2215
        %2248 = vst.msk [vmem:[#allocation3 + $0xd8] sm:$0xff] %vm1313, %v2216
        %2249 = vst.msk [vmem:[#allocation3 + $0xe0] sm:$0xff] %vm1313, %v2217
        %2250 = vst.msk [vmem:[#allocation3 + $0xe8] sm:$0xff] %vm1313, %v2218
        %2251 = vst.msk [vmem:[#allocation3 + $0xf0] sm:$0xff] %vm1313, %v2219
        %2252 = vst.msk [vmem:[#allocation3 + $0xf8] sm:$0xff] %vm1313, %v2220
        %v2253 = vld [vmem:[#allocation2 + $0x2] sm:$0xff]
        %v2254 = vld [vmem:[#allocation2 + $0xa] sm:$0xff]
        %v2255 = vld [vmem:[#allocation2 + $0x1a] sm:$0xff]
        %v2256 = vld [vmem:[#allocation2 + $0x22] sm:$0xff]
        %v2257 = vld [vmem:[#allocation2 + $0x32] sm:$0xff]
        %v2258 = vld [vmem:[#allocation2 + $0x3a] sm:$0xff]
        %v2259 = vld [vmem:[#allocation2 + $0x4a] sm:$0xff]
        %v2260 = vld [vmem:[#allocation2 + $0x52] sm:$0xff]
        %v2261 = vld [vmem:[#allocation2 + $0x62] sm:$0xff]
        %v2262 = vld [vmem:[#allocation2 + $0x6a] sm:$0xff]
        %v2263 = vld [vmem:[#allocation2 + $0x7a] sm:$0xff]
        %v2264 = vld [vmem:[#allocation2 + $0x82] sm:$0xff]
        %v2265 = vld [vmem:[#allocation2 + $0x92] sm:$0xff]
        %v2266 = vld [vmem:[#allocation2 + $0x9a] sm:$0xff]
        %v2267 = vld [vmem:[#allocation2 + $0xaa] sm:$0xff]
        %v2268 = vld [vmem:[#allocation2 + $0xb2] sm:$0xff]
        %v2269 = vld [vmem:[#allocation2 + $0xc2] sm:$0xff]
        %v2270 = vld [vmem:[#allocation2 + $0xca] sm:$0xff]
        %v2271 = vld [vmem:[#allocation2 + $0xda] sm:$0xff]
        %v2272 = vld [vmem:[#allocation2 + $0xe2] sm:$0xff]
        %v2273 = vld [vmem:[#allocation2 + $0xf2] sm:$0xff]
        %v2274 = vld [vmem:[#allocation2 + $0xfa] sm:$0xff]
        %v2275 = vld [vmem:[#allocation2 + $0x10a] sm:$0xff]
        %v2276 = vld [vmem:[#allocation2 + $0x112] sm:$0xff]
        %v2277 = vld [vmem:[#allocation2 + $0x122] sm:$0xff]
        %v2278 = vld [vmem:[#allocation2 + $0x12a] sm:$0xff]
        %v2279 = vld [vmem:[#allocation2 + $0x13a] sm:$0xff]
        %v2280 = vld [vmem:[#allocation2 + $0x142] sm:$0xff]
        %v2281 = vld [vmem:[#allocation2 + $0x152] sm:$0xff]
        %v2282 = vld [vmem:[#allocation2 + $0x15a] sm:$0xff]
        %v2283 = vld [vmem:[#allocation2 + $0x16a] sm:$0xff]
        %v2284 = vld [vmem:[#allocation2 + $0x172] sm:$0xff]
        %v2285 = vld [vmem:[#allocation3] sm:$0xff]
        %v2286 = vld [vmem:[#allocation3 + $0x8] sm:$0xff]
        %v2287 = vld [vmem:[#allocation3 + $0x10] sm:$0xff]
        %v2288 = vld [vmem:[#allocation3 + $0x18] sm:$0xff]
        %v2289 = vld [vmem:[#allocation3 + $0x20] sm:$0xff]
        %v2290 = vld [vmem:[#allocation3 + $0x28] sm:$0xff]
        %v2291 = vld [vmem:[#allocation3 + $0x30] sm:$0xff]
        %v2292 = vld [vmem:[#allocation3 + $0x38] sm:$0xff]
        %v2293 = vld [vmem:[#allocation3 + $0x40] sm:$0xff]
        %v2294 = vld [vmem:[#allocation3 + $0x48] sm:$0xff]
        %v2295 = vld [vmem:[#allocation3 + $0x50] sm:$0xff]
        %v2296 = vld [vmem:[#allocation3 + $0x58] sm:$0xff]
        %v2297 = vld [vmem:[#allocation3 + $0x60] sm:$0xff]
        %v2298 = vld [vmem:[#allocation3 + $0x68] sm:$0xff]
        %v2299 = vld [vmem:[#allocation3 + $0x70] sm:$0xff]
        %v2300 = vld [vmem:[#allocation3 + $0x78] sm:$0xff]
        %v2301 = vld [vmem:[#allocation3 + $0x80] sm:$0xff]
        %v2302 = vld [vmem:[#allocation3 + $0x88] sm:$0xff]
        %v2303 = vld [vmem:[#allocation3 + $0x90] sm:$0xff]
        %v2304 = vld [vmem:[#allocation3 + $0x98] sm:$0xff]
        %v2305 = vld [vmem:[#allocation3 + $0xa0] sm:$0xff]
        %v2306 = vld [vmem:[#allocation3 + $0xa8] sm:$0xff]
        %v2307 = vld [vmem:[#allocation3 + $0xb0] sm:$0xff]
        %v2308 = vld [vmem:[#allocation3 + $0xb8] sm:$0xff]
        %v2309 = vld [vmem:[#allocation3 + $0xc0] sm:$0xff]
        %v2310 = vld [vmem:[#allocation3 + $0xc8] sm:$0xff]
        %v2311 = vld [vmem:[#allocation3 + $0xd0] sm:$0xff]
        %v2312 = vld [vmem:[#allocation3 + $0xd8] sm:$0xff]
        %v2313 = vld [vmem:[#allocation3 + $0xe0] sm:$0xff]
        %v2314 = vld [vmem:[#allocation3 + $0xe8] sm:$0xff]
        %v2315 = vld [vmem:[#allocation3 + $0xf0] sm:$0xff]
        %v2316 = vld [vmem:[#allocation3 + $0xf8] sm:$0xff]
        %s2317 = scalar_lea.vmem [#allocation10], 64
        %v2318 = vld [vmem:[%s2317] sm:$0xff]
        %v2319 = vld [vmem:[%s2317 + $0x8] sm:$0xff]
        %v2320 = vld [vmem:[%s2317 + $0x10] sm:$0xff]
        %v2321 = vld [vmem:[%s2317 + $0x18] sm:$0xff]
        %v2323 = vsel %vm373, %v2253, 0
        %v2326 = vsel %vm373, %v2254, 0
        %v2329 = vsel %vm373, %v2255, 0
        %v2332 = vsel %vm373, %v2256, 0
        %v2335 = vsel %vm373, %v2257, 0
        %v2338 = vsel %vm373, %v2258, 0
        %v2341 = vsel %vm373, %v2259, 0
        %v2344 = vsel %vm373, %v2260, 0
        %v2347 = vsel %vm373, %v2261, 0
        %v2350 = vsel %vm373, %v2262, 0
        %v2353 = vsel %vm373, %v2263, 0
        %v2356 = vsel %vm373, %v2264, 0
        %v2359 = vsel %vm373, %v2265, 0
        %v2362 = vsel %vm373, %v2266, 0
        %v2365 = vsel %vm373, %v2267, 0
        %v2368 = vsel %vm373, %v2268, 0
        %v2371 = vsel %vm373, %v2269, 0
        %v2374 = vsel %vm373, %v2270, 0
        %v2377 = vsel %vm373, %v2271, 0
        %v2380 = vsel %vm373, %v2272, 0
        %v2383 = vsel %vm373, %v2273, 0
        %v2386 = vsel %vm373, %v2274, 0
        %v2389 = vsel %vm373, %v2275, 0
        %v2392 = vsel %vm373, %v2276, 0
        %v2395 = vsel %vm373, %v2277, 0
        %v2398 = vsel %vm373, %v2278, 0
        %v2401 = vsel %vm373, %v2279, 0
        %v2404 = vsel %vm373, %v2280, 0
        %v2407 = vsel %vm373, %v2281, 0
        %v2410 = vsel %vm373, %v2282, 0
        %v2413 = vsel %vm373, %v2283, 0
        %v2416 = vsel %vm373, %v2284, 0
        %2418 = vmatprep.subr.mxu0 0.0
        %2419 = vmatpush1.msra.mxu0 %v2318
        %2420 = vmatprep.subr.mxu0 0.0
        %2421 = vmatpush1.msra.mxu0 %v2319
        %2422 = vmatprep.subr.mxu0 0.0
        %2423 = vmatpush1.msra.mxu0 %v2320
        %2424 = vmatprep.subr.mxu0 0.0
        %2425 = vmatpush1.msra.mxu0 %v2321
        %2426 = vmatprep.subr.mxu0 0.0
        %2427 = vmatpush1.msra.mxu0 0.0
        %2428 = vmatprep.subr.mxu0 0.0
        %2429 = vmatpush1.msra.mxu0 0.0
        %2430 = vmatprep.subr.mxu0 0.0
        %2431 = vmatpush1.msra.mxu0 0.0
        %2432 = vmatprep.subr.mxu0 0.0
        %2433 = vmatpush1.msra.mxu0 0.0
        %2434 = vmatprep.subr.mxu0 0.0
        %2435 = vmatpush1.msra.mxu0 0.0
        %2436 = vmatprep.subr.mxu0 0.0
        %2437 = vmatpush1.msra.mxu0 0.0
        %2438 = vmatprep.subr.mxu0 0.0
        %2439 = vmatpush1.msra.mxu0 0.0
        %2440 = vmatprep.subr.mxu0 0.0
        %2441 = vmatpush1.msra.mxu0 0.0
        %2442 = vmatprep.subr.mxu0 0.0
        %2443 = vmatpush1.msra.mxu0 0.0
        %2444 = vmatprep.subr.mxu0 0.0
        %2445 = vmatpush1.msra.mxu0 0.0
        %2446 = vmatprep.subr.mxu0 0.0
        %2447 = vmatpush1.msra.mxu0 0.0
        %2448 = vmatprep.subr.mxu0 0.0
        %2449 = vmatpush1.msra.mxu0 0.0
        %2450 = vmatprep.subr.mxu0 0.0
        %2451 = vmatpush1.msra.mxu0 0.0
        %2452 = vmatprep.subr.mxu0 0.0
        %2453 = vmatpush1.msra.mxu0 0.0
        %2454 = vmatprep.subr.mxu0 0.0
        %2455 = vmatpush1.msra.mxu0 0.0
        %2456 = vmatprep.subr.mxu0 0.0
        %2457 = vmatpush1.msra.mxu0 0.0
        %2458 = vmatprep.subr.mxu0 0.0
        %2459 = vmatpush1.msra.mxu0 0.0
        %2460 = vmatprep.subr.mxu0 0.0
        %2461 = vmatpush1.msra.mxu0 0.0
        %2462 = vmatprep.subr.mxu0 0.0
        %2463 = vmatpush1.msra.mxu0 0.0
        %2464 = vmatprep.subr.mxu0 0.0
        %2465 = vmatpush1.msra.mxu0 0.0
        %2466 = vmatprep.subr.mxu0 0.0
        %2467 = vmatpush1.msra.mxu0 0.0
        %2468 = vmatprep.subr.mxu0 0.0
        %2469 = vmatpush1.msra.mxu0 0.0
        %2470 = vmatprep.subr.mxu0 0.0
        %2471 = vmatpush1.msra.mxu0 0.0
        %2472 = vmatprep.subr.mxu0 0.0
        %2473 = vmatpush1.msra.mxu0 0.0
        %2474 = vmatprep.subr.mxu0 0.0
        %2475 = vmatpush1.msra.mxu0 0.0
        %2476 = vmatprep.subr.mxu0 0.0
        %2477 = vmatpush1.msra.mxu0 0.0
        %2478 = vmatprep.subr.mxu0 0.0
        %2479 = vmatpush1.msra.mxu0 0.0
        %2480 = vmatprep.subr.mxu0 0.0
        %2481 = vmatpush1.msra.mxu0 0.0
        %2482 = vmatprep.mubr.f32.mxu0 0.0
        %2483 = vmatmul.mubr.f32.gmra.mrb[0].mxu0 %v2323
        %v2484 = vpop.f32.mrb[0].mxu0
        %v2485 = vadd.f32 0.0, %v2484
        %v2486 = vpop.f32.mrb[0].mxu0
        %2487 = vmatprep.mubr.f32.mxu0 0.0
        %2488 = vmatmul.mubr.f32.gmra.mrb[0].mxu0 %v2326
        %v2489 = vpop.f32.mrb[0].mxu0
        %v2490 = vadd.f32 0.0, %v2489
        %v2491 = vpop.f32.mrb[0].mxu0
        %2492 = vmatprep.mubr.f32.mxu0 0.0
        %2493 = vmatmul.mubr.f32.gmra.mrb[0].mxu0 %v2329
        %v2494 = vpop.f32.mrb[0].mxu0
        %v2495 = vadd.f32 0.0, %v2494
        %v2496 = vpop.f32.mrb[0].mxu0
        %2497 = vmatprep.mubr.f32.mxu0 0.0
        %2498 = vmatmul.mubr.f32.gmra.mrb[0].mxu0 %v2332
        %v2499 = vpop.f32.mrb[0].mxu0
        %v2500 = vadd.f32 0.0, %v2499
        %v2501 = vpop.f32.mrb[0].mxu0
        %2502 = vmatprep.mubr.f32.mxu0 0.0
        %2503 = vmatmul.mubr.f32.gmra.mrb[0].mxu0 %v2335
        %v2504 = vpop.f32.mrb[0].mxu0
        %v2505 = vadd.f32 0.0, %v2504
        %v2506 = vpop.f32.mrb[0].mxu0
        %2507 = vmatprep.mubr.f32.mxu0 0.0
        %2508 = vmatmul.mubr.f32.gmra.mrb[0].mxu0 %v2338
        %v2509 = vpop.f32.mrb[0].mxu0
        %v2510 = vadd.f32 0.0, %v2509
        %v2511 = vpop.f32.mrb[0].mxu0
        %2512 = vmatprep.mubr.f32.mxu0 0.0
        %2513 = vmatmul.mubr.f32.gmra.mrb[0].mxu0 %v2341
        %v2514 = vpop.f32.mrb[0].mxu0
        %v2515 = vadd.f32 0.0, %v2514
        %v2516 = vpop.f32.mrb[0].mxu0
        %2517 = vmatprep.mubr.f32.mxu0 0.0
        %2518 = vmatmul.mubr.f32.gmra.mrb[0].mxu0 %v2344
        %v2519 = vpop.f32.mrb[0].mxu0
        %v2520 = vadd.f32 0.0, %v2519
        %v2521 = vpop.f32.mrb[0].mxu0
        %2522 = vmatprep.mubr.f32.mxu0 0.0
        %2523 = vmatmul.mubr.f32.gmra.mrb[0].mxu0 %v2347
        %v2524 = vpop.f32.mrb[0].mxu0
        %v2525 = vadd.f32 0.0, %v2524
        %v2526 = vpop.f32.mrb[0].mxu0
        %2527 = vmatprep.mubr.f32.mxu0 0.0
        %2528 = vmatmul.mubr.f32.gmra.mrb[0].mxu0 %v2350
        %v2529 = vpop.f32.mrb[0].mxu0
        %v2530 = vadd.f32 0.0, %v2529
        %v2531 = vpop.f32.mrb[0].mxu0
        %2532 = vmatprep.mubr.f32.mxu0 0.0
        %2533 = vmatmul.mubr.f32.gmra.mrb[0].mxu0 %v2353
        %v2534 = vpop.f32.mrb[0].mxu0
        %v2535 = vadd.f32 0.0, %v2534
        %v2536 = vpop.f32.mrb[0].mxu0
        %2537 = vmatprep.mubr.f32.mxu0 0.0
        %2538 = vmatmul.mubr.f32.gmra.mrb[0].mxu0 %v2356
        %v2539 = vpop.f32.mrb[0].mxu0
        %v2540 = vadd.f32 0.0, %v2539
        %v2541 = vpop.f32.mrb[0].mxu0
        %2542 = vmatprep.mubr.f32.mxu0 0.0
        %2543 = vmatmul.mubr.f32.gmra.mrb[0].mxu0 %v2359
        %v2544 = vpop.f32.mrb[0].mxu0
        %v2545 = vadd.f32 0.0, %v2544
        %v2546 = vpop.f32.mrb[0].mxu0
        %2547 = vmatprep.mubr.f32.mxu0 0.0
        %2548 = vmatmul.mubr.f32.gmra.mrb[0].mxu0 %v2362
        %v2549 = vpop.f32.mrb[0].mxu0
        %v2550 = vadd.f32 0.0, %v2549
        %v2551 = vpop.f32.mrb[0].mxu0
        %2552 = vmatprep.mubr.f32.mxu0 0.0
        %2553 = vmatmul.mubr.f32.gmra.mrb[0].mxu0 %v2365
        %v2554 = vpop.f32.mrb[0].mxu0
        %v2555 = vadd.f32 0.0, %v2554
        %v2556 = vpop.f32.mrb[0].mxu0
        %2557 = vmatprep.mubr.f32.mxu0 0.0
        %2558 = vmatmul.mubr.f32.gmra.mrb[0].mxu0 %v2368
        %v2559 = vpop.f32.mrb[0].mxu0
        %v2560 = vadd.f32 0.0, %v2559
        %v2561 = vpop.f32.mrb[0].mxu0
        %2562 = vmatprep.mubr.f32.mxu0 0.0
        %2563 = vmatmul.mubr.f32.gmra.mrb[0].mxu0 %v2371
        %v2564 = vpop.f32.mrb[0].mxu0
        %v2565 = vadd.f32 0.0, %v2564
        %v2566 = vpop.f32.mrb[0].mxu0
        %2567 = vmatprep.mubr.f32.mxu0 0.0
        %2568 = vmatmul.mubr.f32.gmra.mrb[0].mxu0 %v2374
        %v2569 = vpop.f32.mrb[0].mxu0
        %v2570 = vadd.f32 0.0, %v2569
        %v2571 = vpop.f32.mrb[0].mxu0
        %2572 = vmatprep.mubr.f32.mxu0 0.0
        %2573 = vmatmul.mubr.f32.gmra.mrb[0].mxu0 %v2377
        %v2574 = vpop.f32.mrb[0].mxu0
        %v2575 = vadd.f32 0.0, %v2574
        %v2576 = vpop.f32.mrb[0].mxu0
        %2577 = vmatprep.mubr.f32.mxu0 0.0
        %2578 = vmatmul.mubr.f32.gmra.mrb[0].mxu0 %v2380
        %v2579 = vpop.f32.mrb[0].mxu0
        %v2580 = vadd.f32 0.0, %v2579
        %v2581 = vpop.f32.mrb[0].mxu0
        %2582 = vmatprep.mubr.f32.mxu0 0.0
        %2583 = vmatmul.mubr.f32.gmra.mrb[0].mxu0 %v2383
        %v2584 = vpop.f32.mrb[0].mxu0
        %v2585 = vadd.f32 0.0, %v2584
        %v2586 = vpop.f32.mrb[0].mxu0
        %2587 = vmatprep.mubr.f32.mxu0 0.0
        %2588 = vmatmul.mubr.f32.gmra.mrb[0].mxu0 %v2386
        %v2589 = vpop.f32.mrb[0].mxu0
        %v2590 = vadd.f32 0.0, %v2589
        %v2591 = vpop.f32.mrb[0].mxu0
        %2592 = vmatprep.mubr.f32.mxu0 0.0
        %2593 = vmatmul.mubr.f32.gmra.mrb[0].mxu0 %v2389
        %v2594 = vpop.f32.mrb[0].mxu0
        %v2595 = vadd.f32 0.0, %v2594
        %v2596 = vpop.f32.mrb[0].mxu0
        %2597 = vmatprep.mubr.f32.mxu0 0.0
        %2598 = vmatmul.mubr.f32.gmra.mrb[0].mxu0 %v2392
        %v2599 = vpop.f32.mrb[0].mxu0
        %v2600 = vadd.f32 0.0, %v2599
        %v2601 = vpop.f32.mrb[0].mxu0
        %2602 = vmatprep.mubr.f32.mxu0 0.0
        %2603 = vmatmul.mubr.f32.gmra.mrb[0].mxu0 %v2395
        %v2604 = vpop.f32.mrb[0].mxu0
        %v2605 = vadd.f32 0.0, %v2604
        %v2606 = vpop.f32.mrb[0].mxu0
        %2607 = vmatprep.mubr.f32.mxu0 0.0
        %2608 = vmatmul.mubr.f32.gmra.mrb[0].mxu0 %v2398
        %v2609 = vpop.f32.mrb[0].mxu0
        %v2610 = vadd.f32 0.0, %v2609
        %v2611 = vpop.f32.mrb[0].mxu0
        %2612 = vmatprep.mubr.f32.mxu0 0.0
        %2613 = vmatmul.mubr.f32.gmra.mrb[0].mxu0 %v2401
        %v2614 = vpop.f32.mrb[0].mxu0
        %v2615 = vadd.f32 0.0, %v2614
        %v2616 = vpop.f32.mrb[0].mxu0
        %2617 = vmatprep.mubr.f32.mxu0 0.0
        %2618 = vmatmul.mubr.f32.gmra.mrb[0].mxu0 %v2404
        %v2619 = vpop.f32.mrb[0].mxu0
        %v2620 = vadd.f32 0.0, %v2619
        %v2621 = vpop.f32.mrb[0].mxu0
        %2622 = vmatprep.mubr.f32.mxu0 0.0
        %2623 = vmatmul.mubr.f32.gmra.mrb[0].mxu0 %v2407
        %v2624 = vpop.f32.mrb[0].mxu0
        %v2625 = vadd.f32 0.0, %v2624
        %v2626 = vpop.f32.mrb[0].mxu0
        %2627 = vmatprep.mubr.f32.mxu0 0.0
        %2628 = vmatmul.mubr.f32.gmra.mrb[0].mxu0 %v2410
        %v2629 = vpop.f32.mrb[0].mxu0
        %v2630 = vadd.f32 0.0, %v2629
        %v2631 = vpop.f32.mrb[0].mxu0
        %2632 = vmatprep.mubr.f32.mxu0 0.0
        %2633 = vmatmul.mubr.f32.gmra.mrb[0].mxu0 %v2413
        %v2634 = vpop.f32.mrb[0].mxu0
        %v2635 = vadd.f32 0.0, %v2634
        %v2636 = vpop.f32.mrb[0].mxu0
        %2637 = vmatprep.mubr.f32.mxu0 0.0
        %2638 = vmatmul.mubr.f32.gmra.mrb[0].mxu0 %v2416
        %v2639 = vpop.f32.mrb[0].mxu0
        %v2640 = vadd.f32 0.0, %v2639
        %v2641 = vpop.f32.mrb[0].mxu0
        %2642 = vdwg.mxu0
        %v2643 = vadd.f32 %v2285, %v2485
        %v2644 = vadd.f32 %v2286, %v2490
        %v2645 = vadd.f32 %v2287, %v2495
        %v2646 = vadd.f32 %v2288, %v2500
        %v2647 = vadd.f32 %v2289, %v2505
        %v2648 = vadd.f32 %v2290, %v2510
        %v2649 = vadd.f32 %v2291, %v2515
        %v2650 = vadd.f32 %v2292, %v2520
        %v2651 = vadd.f32 %v2293, %v2525
        %v2652 = vadd.f32 %v2294, %v2530
        %v2653 = vadd.f32 %v2295, %v2535
        %v2654 = vadd.f32 %v2296, %v2540
        %v2655 = vadd.f32 %v2297, %v2545
        %v2656 = vadd.f32 %v2298, %v2550
        %v2657 = vadd.f32 %v2299, %v2555
        %v2658 = vadd.f32 %v2300, %v2560
        %v2659 = vadd.f32 %v2301, %v2565
        %v2660 = vadd.f32 %v2302, %v2570
        %v2661 = vadd.f32 %v2303, %v2575
        %v2662 = vadd.f32 %v2304, %v2580
        %v2663 = vadd.f32 %v2305, %v2585
        %v2664 = vadd.f32 %v2306, %v2590
        %v2665 = vadd.f32 %v2307, %v2595
        %v2666 = vadd.f32 %v2308, %v2600
        %v2667 = vadd.f32 %v2309, %v2605
        %v2668 = vadd.f32 %v2310, %v2610
        %v2669 = vadd.f32 %v2311, %v2615
        %v2670 = vadd.f32 %v2312, %v2620
        %v2671 = vadd.f32 %v2313, %v2625
        %v2672 = vadd.f32 %v2314, %v2630
        %v2673 = vadd.f32 %v2315, %v2635
        %v2674 = vadd.f32 %v2316, %v2640
        %2675 = vst.msk [vmem:[#allocation3] sm:$0xff] %vm1313, %v2643
        %2676 = vst.msk [vmem:[#allocation3 + $0x8] sm:$0xff] %vm1313, %v2644
        %2677 = vst.msk [vmem:[#allocation3 + $0x10] sm:$0xff] %vm1313, %v2645
        %2678 = vst.msk [vmem:[#allocation3 + $0x18] sm:$0xff] %vm1313, %v2646
        %2679 = vst.msk [vmem:[#allocation3 + $0x20] sm:$0xff] %vm1313, %v2647
        %2680 = vst.msk [vmem:[#allocation3 + $0x28] sm:$0xff] %vm1313, %v2648
        %2681 = vst.msk [vmem:[#allocation3 + $0x30] sm:$0xff] %vm1313, %v2649
        %2682 = vst.msk [vmem:[#allocation3 + $0x38] sm:$0xff] %vm1313, %v2650
        %2683 = vst.msk [vmem:[#allocation3 + $0x40] sm:$0xff] %vm1313, %v2651
        %2684 = vst.msk [vmem:[#allocation3 + $0x48] sm:$0xff] %vm1313, %v2652
        %2685 = vst.msk [vmem:[#allocation3 + $0x50] sm:$0xff] %vm1313, %v2653
        %2686 = vst.msk [vmem:[#allocation3 + $0x58] sm:$0xff] %vm1313, %v2654
        %2687 = vst.msk [vmem:[#allocation3 + $0x60] sm:$0xff] %vm1313, %v2655
        %2688 = vst.msk [vmem:[#allocation3 + $0x68] sm:$0xff] %vm1313, %v2656
        %2689 = vst.msk [vmem:[#allocation3 + $0x70] sm:$0xff] %vm1313, %v2657
        %2690 = vst.msk [vmem:[#allocation3 + $0x78] sm:$0xff] %vm1313, %v2658
        %2691 = vst.msk [vmem:[#allocation3 + $0x80] sm:$0xff] %vm1313, %v2659
        %2692 = vst.msk [vmem:[#allocation3 + $0x88] sm:$0xff] %vm1313, %v2660
        %2693 = vst.msk [vmem:[#allocation3 + $0x90] sm:$0xff] %vm1313, %v2661
        %2694 = vst.msk [vmem:[#allocation3 + $0x98] sm:$0xff] %vm1313, %v2662
        %2695 = vst.msk [vmem:[#allocation3 + $0xa0] sm:$0xff] %vm1313, %v2663
        %2696 = vst.msk [vmem:[#allocation3 + $0xa8] sm:$0xff] %vm1313, %v2664
        %2697 = vst.msk [vmem:[#allocation3 + $0xb0] sm:$0xff] %vm1313, %v2665
        %2698 = vst.msk [vmem:[#allocation3 + $0xb8] sm:$0xff] %vm1313, %v2666
        %2699 = vst.msk [vmem:[#allocation3 + $0xc0] sm:$0xff] %vm1313, %v2667
        %2700 = vst.msk [vmem:[#allocation3 + $0xc8] sm:$0xff] %vm1313, %v2668
        %2701 = vst.msk [vmem:[#allocation3 + $0xd0] sm:$0xff] %vm1313, %v2669
        %2702 = vst.msk [vmem:[#allocation3 + $0xd8] sm:$0xff] %vm1313, %v2670
        %2703 = vst.msk [vmem:[#allocation3 + $0xe0] sm:$0xff] %vm1313, %v2671
        %2704 = vst.msk [vmem:[#allocation3 + $0xe8] sm:$0xff] %vm1313, %v2672
        %2705 = vst.msk [vmem:[#allocation3 + $0xf0] sm:$0xff] %vm1313, %v2673
        %2706 = vst.msk [vmem:[#allocation3 + $0xf8] sm:$0xff] %vm1313, %v2674
        %v2707 = vld [vmem:[%s1280] sm:$0xff]
        %v2708 = vld [vmem:[%s1280 + $0x8] sm:$0xff]
        %v2709 = vld [vmem:[%s1280 + $0x18] sm:$0xff]
        %v2710 = vld [vmem:[%s1280 + $0x20] sm:$0xff]
        %v2711 = vld [vmem:[%s1280 + $0x30] sm:$0xff]
        %v2712 = vld [vmem:[%s1280 + $0x38] sm:$0xff]
        %v2713 = vld [vmem:[%s1280 + $0x48] sm:$0xff]
        %v2714 = vld [vmem:[%s1280 + $0x50] sm:$0xff]
        %v2715 = vld [vmem:[%s1280 + $0x60] sm:$0xff]
        %v2716 = vld [vmem:[%s1280 + $0x68] sm:$0xff]
        %v2717 = vld [vmem:[%s1280 + $0x78] sm:$0xff]
        %v2718 = vld [vmem:[%s1280 + $0x80] sm:$0xff]
        %v2719 = vld [vmem:[%s1280 + $0x90] sm:$0xff]
        %v2720 = vld [vmem:[%s1280 + $0x98] sm:$0xff]
        %v2721 = vld [vmem:[%s1280 + $0xa8] sm:$0xff]
        %v2722 = vld [vmem:[%s1280 + $0xb0] sm:$0xff]
        %v2723 = vld [vmem:[%s1280 + $0xc0] sm:$0xff]
        %v2724 = vld [vmem:[%s1280 + $0xc8] sm:$0xff]
        %v2725 = vld [vmem:[%s1280 + $0xd8] sm:$0xff]
        %v2726 = vld [vmem:[%s1280 + $0xe0] sm:$0xff]
        %v2727 = vld [vmem:[%s1280 + $0xf0] sm:$0xff]
        %v2728 = vld [vmem:[%s1280 + $0xf8] sm:$0xff]
        %v2729 = vld [vmem:[%s1280 + $0x108] sm:$0xff]
        %v2730 = vld [vmem:[%s1280 + $0x110] sm:$0xff]
        %v2731 = vld [vmem:[%s1280 + $0x120] sm:$0xff]
        %v2732 = vld [vmem:[%s1280 + $0x128] sm:$0xff]
        %v2733 = vld [vmem:[%s1280 + $0x138] sm:$0xff]
        %v2734 = vld [vmem:[%s1280 + $0x140] sm:$0xff]
        %v2735 = vld [vmem:[%s1280 + $0x150] sm:$0xff]
        %v2736 = vld [vmem:[%s1280 + $0x158] sm:$0xff]
        %v2737 = vld [vmem:[%s1280 + $0x168] sm:$0xff]
        %v2738 = vld [vmem:[%s1280 + $0x170] sm:$0xff]
        %v2739 = vld [vmem:[#allocation3] sm:$0xff]
        %v2740 = vld [vmem:[#allocation3 + $0x8] sm:$0xff]
        %v2741 = vld [vmem:[#allocation3 + $0x10] sm:$0xff]
        %v2742 = vld [vmem:[#allocation3 + $0x18] sm:$0xff]
        %v2743 = vld [vmem:[#allocation3 + $0x20] sm:$0xff]
        %v2744 = vld [vmem:[#allocation3 + $0x28] sm:$0xff]
        %v2745 = vld [vmem:[#allocation3 + $0x30] sm:$0xff]
        %v2746 = vld [vmem:[#allocation3 + $0x38] sm:$0xff]
        %v2747 = vld [vmem:[#allocation3 + $0x40] sm:$0xff]
        %v2748 = vld [vmem:[#allocation3 + $0x48] sm:$0xff]
        %v2749 = vld [vmem:[#allocation3 + $0x50] sm:$0xff]
        %v2750 = vld [vmem:[#allocation3 + $0x58] sm:$0xff]
        %v2751 = vld [vmem:[#allocation3 + $0x60] sm:$0xff]
        %v2752 = vld [vmem:[#allocation3 + $0x68] sm:$0xff]
        %v2753 = vld [vmem:[#allocation3 + $0x70] sm:$0xff]
        %v2754 = vld [vmem:[#allocation3 + $0x78] sm:$0xff]
        %v2755 = vld [vmem:[#allocation3 + $0x80] sm:$0xff]
        %v2756 = vld [vmem:[#allocation3 + $0x88] sm:$0xff]
        %v2757 = vld [vmem:[#allocation3 + $0x90] sm:$0xff]
        %v2758 = vld [vmem:[#allocation3 + $0x98] sm:$0xff]
        %v2759 = vld [vmem:[#allocation3 + $0xa0] sm:$0xff]
        %v2760 = vld [vmem:[#allocation3 + $0xa8] sm:$0xff]
        %v2761 = vld [vmem:[#allocation3 + $0xb0] sm:$0xff]
        %v2762 = vld [vmem:[#allocation3 + $0xb8] sm:$0xff]
        %v2763 = vld [vmem:[#allocation3 + $0xc0] sm:$0xff]
        %v2764 = vld [vmem:[#allocation3 + $0xc8] sm:$0xff]
        %v2765 = vld [vmem:[#allocation3 + $0xd0] sm:$0xff]
        %v2766 = vld [vmem:[#allocation3 + $0xd8] sm:$0xff]
        %v2767 = vld [vmem:[#allocation3 + $0xe0] sm:$0xff]
        %v2768 = vld [vmem:[#allocation3 + $0xe8] sm:$0xff]
        %v2769 = vld [vmem:[#allocation3 + $0xf0] sm:$0xff]
        %v2770 = vld [vmem:[#allocation3 + $0xf8] sm:$0xff]
        %s2771 = scalar_lea.vmem [#allocation10], 96
        %v2772 = vld [vmem:[%s2771] sm:$0xff]
        %v2773 = vld [vmem:[%s2771 + $0x8] sm:$0xff]
        %v2774 = vld [vmem:[%s2771 + $0x10] sm:$0xff]
        %v2775 = vld [vmem:[%s2771 + $0x18] sm:$0xff]
        %v2777 = vsel %vm373, %v2707, 0
        %v2780 = vsel %vm373, %v2708, 0
        %v2783 = vsel %vm373, %v2709, 0
        %v2786 = vsel %vm373, %v2710, 0
        %v2789 = vsel %vm373, %v2711, 0
        %v2792 = vsel %vm373, %v2712, 0
        %v2795 = vsel %vm373, %v2713, 0
        %v2798 = vsel %vm373, %v2714, 0
        %v2801 = vsel %vm373, %v2715, 0
        %v2804 = vsel %vm373, %v2716, 0
        %v2807 = vsel %vm373, %v2717, 0
        %v2810 = vsel %vm373, %v2718, 0
        %v2813 = vsel %vm373, %v2719, 0
        %v2816 = vsel %vm373, %v2720, 0
        %v2819 = vsel %vm373, %v2721, 0
        %v2822 = vsel %vm373, %v2722, 0
        %v2825 = vsel %vm373, %v2723, 0
        %v2828 = vsel %vm373, %v2724, 0
        %v2831 = vsel %vm373, %v2725, 0
        %v2834 = vsel %vm373, %v2726, 0
        %v2837 = vsel %vm373, %v2727, 0
        %v2840 = vsel %vm373, %v2728, 0
        %v2843 = vsel %vm373, %v2729, 0
        %v2846 = vsel %vm373, %v2730, 0
        %v2849 = vsel %vm373, %v2731, 0
        %v2852 = vsel %vm373, %v2732, 0
        %v2855 = vsel %vm373, %v2733, 0
        %v2858 = vsel %vm373, %v2734, 0
        %v2861 = vsel %vm373, %v2735, 0
        %v2864 = vsel %vm373, %v2736, 0
        %v2867 = vsel %vm373, %v2737, 0
        %v2870 = vsel %vm373, %v2738, 0
        %2872 = vmatprep.subr.mxu0 0.0
        %2873 = vmatpush1.msra.mxu0 %v2772
        %2874 = vmatprep.subr.mxu0 0.0
        %2875 = vmatpush1.msra.mxu0 %v2773
        %2876 = vmatprep.subr.mxu0 0.0
        %2877 = vmatpush1.msra.mxu0 %v2774
        %2878 = vmatprep.subr.mxu0 0.0
        %2879 = vmatpush1.msra.mxu0 %v2775
        %2880 = vmatprep.subr.mxu0 0.0
        %2881 = vmatpush1.msra.mxu0 0.0
        %2882 = vmatprep.subr.mxu0 0.0
        %2883 = vmatpush1.msra.mxu0 0.0
        %2884 = vmatprep.subr.mxu0 0.0
        %2885 = vmatpush1.msra.mxu0 0.0
        %2886 = vmatprep.subr.mxu0 0.0
        %2887 = vmatpush1.msra.mxu0 0.0
        %2888 = vmatprep.subr.mxu0 0.0
        %2889 = vmatpush1.msra.mxu0 0.0
        %2890 = vmatprep.subr.mxu0 0.0
        %2891 = vmatpush1.msra.mxu0 0.0
        %2892 = vmatprep.subr.mxu0 0.0
        %2893 = vmatpush1.msra.mxu0 0.0
        %2894 = vmatprep.subr.mxu0 0.0
        %2895 = vmatpush1.msra.mxu0 0.0
        %2896 = vmatprep.subr.mxu0 0.0
        %2897 = vmatpush1.msra.mxu0 0.0
        %2898 = vmatprep.subr.mxu0 0.0
        %2899 = vmatpush1.msra.mxu0 0.0
        %2900 = vmatprep.subr.mxu0 0.0
        %2901 = vmatpush1.msra.mxu0 0.0
        %2902 = vmatprep.subr.mxu0 0.0
        %2903 = vmatpush1.msra.mxu0 0.0
        %2904 = vmatprep.subr.mxu0 0.0
        %2905 = vmatpush1.msra.mxu0 0.0
        %2906 = vmatprep.subr.mxu0 0.0
        %2907 = vmatpush1.msra.mxu0 0.0
        %2908 = vmatprep.subr.mxu0 0.0
        %2909 = vmatpush1.msra.mxu0 0.0
        %2910 = vmatprep.subr.mxu0 0.0
        %2911 = vmatpush1.msra.mxu0 0.0
        %2912 = vmatprep.subr.mxu0 0.0
        %2913 = vmatpush1.msra.mxu0 0.0
        %2914 = vmatprep.subr.mxu0 0.0
        %2915 = vmatpush1.msra.mxu0 0.0
        %2916 = vmatprep.subr.mxu0 0.0
        %2917 = vmatpush1.msra.mxu0 0.0
        %2918 = vmatprep.subr.mxu0 0.0
        %2919 = vmatpush1.msra.mxu0 0.0
        %2920 = vmatprep.subr.mxu0 0.0
        %2921 = vmatpush1.msra.mxu0 0.0
        %2922 = vmatprep.subr.mxu0 0.0
        %2923 = vmatpush1.msra.mxu0 0.0
        %2924 = vmatprep.subr.mxu0 0.0
        %2925 = vmatpush1.msra.mxu0 0.0
        %2926 = vmatprep.subr.mxu0 0.0
        %2927 = vmatpush1.msra.mxu0 0.0
        %2928 = vmatprep.subr.mxu0 0.0
        %2929 = vmatpush1.msra.mxu0 0.0
        %2930 = vmatprep.subr.mxu0 0.0
        %2931 = vmatpush1.msra.mxu0 0.0
        %2932 = vmatprep.subr.mxu0 0.0
        %2933 = vmatpush1.msra.mxu0 0.0
        %2934 = vmatprep.subr.mxu0 0.0
        %2935 = vmatpush1.msra.mxu0 0.0
        %2936 = vmatprep.mubr.f32.mxu0 0.0
        %2937 = vmatmul.mubr.f32.gmra.mrb[0].mxu0 %v2777
        %v2938 = vpop.f32.mrb[0].mxu0
        %v2939 = vadd.f32 0.0, %v2938
        %v2940 = vpop.f32.mrb[0].mxu0
        %2941 = vmatprep.mubr.f32.mxu0 0.0
        %2942 = vmatmul.mubr.f32.gmra.mrb[0].mxu0 %v2780
        %v2943 = vpop.f32.mrb[0].mxu0
        %v2944 = vadd.f32 0.0, %v2943
        %v2945 = vpop.f32.mrb[0].mxu0
        %2946 = vmatprep.mubr.f32.mxu0 0.0
        %2947 = vmatmul.mubr.f32.gmra.mrb[0].mxu0 %v2783
        %v2948 = vpop.f32.mrb[0].mxu0
        %v2949 = vadd.f32 0.0, %v2948
        %v2950 = vpop.f32.mrb[0].mxu0
        %2951 = vmatprep.mubr.f32.mxu0 0.0
        %2952 = vmatmul.mubr.f32.gmra.mrb[0].mxu0 %v2786
        %v2953 = vpop.f32.mrb[0].mxu0
        %v2954 = vadd.f32 0.0, %v2953
        %v2955 = vpop.f32.mrb[0].mxu0
        %2956 = vmatprep.mubr.f32.mxu0 0.0
        %2957 = vmatmul.mubr.f32.gmra.mrb[0].mxu0 %v2789
        %v2958 = vpop.f32.mrb[0].mxu0
        %v2959 = vadd.f32 0.0, %v2958
        %v2960 = vpop.f32.mrb[0].mxu0
        %2961 = vmatprep.mubr.f32.mxu0 0.0
        %2962 = vmatmul.mubr.f32.gmra.mrb[0].mxu0 %v2792
        %v2963 = vpop.f32.mrb[0].mxu0
        %v2964 = vadd.f32 0.0, %v2963
        %v2965 = vpop.f32.mrb[0].mxu0
        %2966 = vmatprep.mubr.f32.mxu0 0.0
        %2967 = vmatmul.mubr.f32.gmra.mrb[0].mxu0 %v2795
        %v2968 = vpop.f32.mrb[0].mxu0
        %v2969 = vadd.f32 0.0, %v2968
        %v2970 = vpop.f32.mrb[0].mxu0
        %2971 = vmatprep.mubr.f32.mxu0 0.0
        %2972 = vmatmul.mubr.f32.gmra.mrb[0].mxu0 %v2798
        %v2973 = vpop.f32.mrb[0].mxu0
        %v2974 = vadd.f32 0.0, %v2973
        %v2975 = vpop.f32.mrb[0].mxu0
        %2976 = vmatprep.mubr.f32.mxu0 0.0
        %2977 = vmatmul.mubr.f32.gmra.mrb[0].mxu0 %v2801
        %v2978 = vpop.f32.mrb[0].mxu0
        %v2979 = vadd.f32 0.0, %v2978
        %v2980 = vpop.f32.mrb[0].mxu0
        %2981 = vmatprep.mubr.f32.mxu0 0.0
        %2982 = vmatmul.mubr.f32.gmra.mrb[0].mxu0 %v2804
        %v2983 = vpop.f32.mrb[0].mxu0
        %v2984 = vadd.f32 0.0, %v2983
        %v2985 = vpop.f32.mrb[0].mxu0
        %2986 = vmatprep.mubr.f32.mxu0 0.0
        %2987 = vmatmul.mubr.f32.gmra.mrb[0].mxu0 %v2807
        %v2988 = vpop.f32.mrb[0].mxu0
        %v2989 = vadd.f32 0.0, %v2988
        %v2990 = vpop.f32.mrb[0].mxu0
        %2991 = vmatprep.mubr.f32.mxu0 0.0
        %2992 = vmatmul.mubr.f32.gmra.mrb[0].mxu0 %v2810
        %v2993 = vpop.f32.mrb[0].mxu0
        %v2994 = vadd.f32 0.0, %v2993
        %v2995 = vpop.f32.mrb[0].mxu0
        %2996 = vmatprep.mubr.f32.mxu0 0.0
        %2997 = vmatmul.mubr.f32.gmra.mrb[0].mxu0 %v2813
        %v2998 = vpop.f32.mrb[0].mxu0
        %v2999 = vadd.f32 0.0, %v2998
        %v3000 = vpop.f32.mrb[0].mxu0
        %3001 = vmatprep.mubr.f32.mxu0 0.0
        %3002 = vmatmul.mubr.f32.gmra.mrb[0].mxu0 %v2816
        %v3003 = vpop.f32.mrb[0].mxu0
        %v3004 = vadd.f32 0.0, %v3003
        %v3005 = vpop.f32.mrb[0].mxu0
        %3006 = vmatprep.mubr.f32.mxu0 0.0
        %3007 = vmatmul.mubr.f32.gmra.mrb[0].mxu0 %v2819
        %v3008 = vpop.f32.mrb[0].mxu0
        %v3009 = vadd.f32 0.0, %v3008
        %v3010 = vpop.f32.mrb[0].mxu0
        %3011 = vmatprep.mubr.f32.mxu0 0.0
        %3012 = vmatmul.mubr.f32.gmra.mrb[0].mxu0 %v2822
        %v3013 = vpop.f32.mrb[0].mxu0
        %v3014 = vadd.f32 0.0, %v3013
        %v3015 = vpop.f32.mrb[0].mxu0
        %3016 = vmatprep.mubr.f32.mxu0 0.0
        %3017 = vmatmul.mubr.f32.gmra.mrb[0].mxu0 %v2825
        %v3018 = vpop.f32.mrb[0].mxu0
        %v3019 = vadd.f32 0.0, %v3018
        %v3020 = vpop.f32.mrb[0].mxu0
        %3021 = vmatprep.mubr.f32.mxu0 0.0
        %3022 = vmatmul.mubr.f32.gmra.mrb[0].mxu0 %v2828
        %v3023 = vpop.f32.mrb[0].mxu0
        %v3024 = vadd.f32 0.0, %v3023
        %v3025 = vpop.f32.mrb[0].mxu0
        %3026 = vmatprep.mubr.f32.mxu0 0.0
        %3027 = vmatmul.mubr.f32.gmra.mrb[0].mxu0 %v2831
        %v3028 = vpop.f32.mrb[0].mxu0
        %v3029 = vadd.f32 0.0, %v3028
        %v3030 = vpop.f32.mrb[0].mxu0
        %3031 = vmatprep.mubr.f32.mxu0 0.0
        %3032 = vmatmul.mubr.f32.gmra.mrb[0].mxu0 %v2834
        %v3033 = vpop.f32.mrb[0].mxu0
        %v3034 = vadd.f32 0.0, %v3033
        %v3035 = vpop.f32.mrb[0].mxu0
        %3036 = vmatprep.mubr.f32.mxu0 0.0
        %3037 = vmatmul.mubr.f32.gmra.mrb[0].mxu0 %v2837
        %v3038 = vpop.f32.mrb[0].mxu0
        %v3039 = vadd.f32 0.0, %v3038
        %v3040 = vpop.f32.mrb[0].mxu0
        %3041 = vmatprep.mubr.f32.mxu0 0.0
        %3042 = vmatmul.mubr.f32.gmra.mrb[0].mxu0 %v2840
        %v3043 = vpop.f32.mrb[0].mxu0
        %v3044 = vadd.f32 0.0, %v3043
        %v3045 = vpop.f32.mrb[0].mxu0
        %3046 = vmatprep.mubr.f32.mxu0 0.0
        %3047 = vmatmul.mubr.f32.gmra.mrb[0].mxu0 %v2843
        %v3048 = vpop.f32.mrb[0].mxu0
        %v3049 = vadd.f32 0.0, %v3048
        %v3050 = vpop.f32.mrb[0].mxu0
        %3051 = vmatprep.mubr.f32.mxu0 0.0
        %3052 = vmatmul.mubr.f32.gmra.mrb[0].mxu0 %v2846
        %v3053 = vpop.f32.mrb[0].mxu0
        %v3054 = vadd.f32 0.0, %v3053
        %v3055 = vpop.f32.mrb[0].mxu0
        %3056 = vmatprep.mubr.f32.mxu0 0.0
        %3057 = vmatmul.mubr.f32.gmra.mrb[0].mxu0 %v2849
        %v3058 = vpop.f32.mrb[0].mxu0
        %v3059 = vadd.f32 0.0, %v3058
        %v3060 = vpop.f32.mrb[0].mxu0
        %3061 = vmatprep.mubr.f32.mxu0 0.0
        %3062 = vmatmul.mubr.f32.gmra.mrb[0].mxu0 %v2852
        %v3063 = vpop.f32.mrb[0].mxu0
        %v3064 = vadd.f32 0.0, %v3063
        %v3065 = vpop.f32.mrb[0].mxu0
        %3066 = vmatprep.mubr.f32.mxu0 0.0
        %3067 = vmatmul.mubr.f32.gmra.mrb[0].mxu0 %v2855
        %v3068 = vpop.f32.mrb[0].mxu0
        %v3069 = vadd.f32 0.0, %v3068
        %v3070 = vpop.f32.mrb[0].mxu0
        %3071 = vmatprep.mubr.f32.mxu0 0.0
        %3072 = vmatmul.mubr.f32.gmra.mrb[0].mxu0 %v2858
        %v3073 = vpop.f32.mrb[0].mxu0
        %v3074 = vadd.f32 0.0, %v3073
        %v3075 = vpop.f32.mrb[0].mxu0
        %3076 = vmatprep.mubr.f32.mxu0 0.0
        %3077 = vmatmul.mubr.f32.gmra.mrb[0].mxu0 %v2861
        %v3078 = vpop.f32.mrb[0].mxu0
        %v3079 = vadd.f32 0.0, %v3078
        %v3080 = vpop.f32.mrb[0].mxu0
        %3081 = vmatprep.mubr.f32.mxu0 0.0
        %3082 = vmatmul.mubr.f32.gmra.mrb[0].mxu0 %v2864
        %v3083 = vpop.f32.mrb[0].mxu0
        %v3084 = vadd.f32 0.0, %v3083
        %v3085 = vpop.f32.mrb[0].mxu0
        %3086 = vmatprep.mubr.f32.mxu0 0.0
        %3087 = vmatmul.mubr.f32.gmra.mrb[0].mxu0 %v2867
        %v3088 = vpop.f32.mrb[0].mxu0
        %v3089 = vadd.f32 0.0, %v3088
        %v3090 = vpop.f32.mrb[0].mxu0
        %3091 = vmatprep.mubr.f32.mxu0 0.0
        %3092 = vmatmul.mubr.f32.gmra.mrb[0].mxu0 %v2870
        %v3093 = vpop.f32.mrb[0].mxu0
        %v3094 = vadd.f32 0.0, %v3093
        %v3095 = vpop.f32.mrb[0].mxu0
        %3096 = vdwg.mxu0
        %v3097 = vadd.f32 %v2739, %v2939
        %v3098 = vadd.f32 %v2740, %v2944
        %v3099 = vadd.f32 %v2741, %v2949
        %v3100 = vadd.f32 %v2742, %v2954
        %v3101 = vadd.f32 %v2743, %v2959
        %v3102 = vadd.f32 %v2744, %v2964
        %v3103 = vadd.f32 %v2745, %v2969
        %v3104 = vadd.f32 %v2746, %v2974
        %v3105 = vadd.f32 %v2747, %v2979
        %v3106 = vadd.f32 %v2748, %v2984
        %v3107 = vadd.f32 %v2749, %v2989
        %v3108 = vadd.f32 %v2750, %v2994
        %v3109 = vadd.f32 %v2751, %v2999
        %v3110 = vadd.f32 %v2752, %v3004
        %v3111 = vadd.f32 %v2753, %v3009
        %v3112 = vadd.f32 %v2754, %v3014
        %v3113 = vadd.f32 %v2755, %v3019
        %v3114 = vadd.f32 %v2756, %v3024
        %v3115 = vadd.f32 %v2757, %v3029
        %v3116 = vadd.f32 %v2758, %v3034
        %v3117 = vadd.f32 %v2759, %v3039
        %v3118 = vadd.f32 %v2760, %v3044
        %v3119 = vadd.f32 %v2761, %v3049
        %v3120 = vadd.f32 %v2762, %v3054
        %v3121 = vadd.f32 %v2763, %v3059
        %v3122 = vadd.f32 %v2764, %v3064
        %v3123 = vadd.f32 %v2765, %v3069
        %v3124 = vadd.f32 %v2766, %v3074
        %v3125 = vadd.f32 %v2767, %v3079
        %v3126 = vadd.f32 %v2768, %v3084
        %v3127 = vadd.f32 %v2769, %v3089
        %v3128 = vadd.f32 %v2770, %v3094
        %3129 = vst.msk [vmem:[#allocation3] sm:$0xff] %vm1313, %v3097
        %3130 = vst.msk [vmem:[#allocation3 + $0x8] sm:$0xff] %vm1313, %v3098
        %3131 = vst.msk [vmem:[#allocation3 + $0x10] sm:$0xff] %vm1313, %v3099
        %3132 = vst.msk [vmem:[#allocation3 + $0x18] sm:$0xff] %vm1313, %v3100
        %3133 = vst.msk [vmem:[#allocation3 + $0x20] sm:$0xff] %vm1313, %v3101
        %3134 = vst.msk [vmem:[#allocation3 + $0x28] sm:$0xff] %vm1313, %v3102
        %3135 = vst.msk [vmem:[#allocation3 + $0x30] sm:$0xff] %vm1313, %v3103
        %3136 = vst.msk [vmem:[#allocation3 + $0x38] sm:$0xff] %vm1313, %v3104
        %3137 = vst.msk [vmem:[#allocation3 + $0x40] sm:$0xff] %vm1313, %v3105
        %3138 = vst.msk [vmem:[#allocation3 + $0x48] sm:$0xff] %vm1313, %v3106
        %3139 = vst.msk [vmem:[#allocation3 + $0x50] sm:$0xff] %vm1313, %v3107
        %3140 = vst.msk [vmem:[#allocation3 + $0x58] sm:$0xff] %vm1313, %v3108
        %3141 = vst.msk [vmem:[#allocation3 + $0x60] sm:$0xff] %vm1313, %v3109
        %3142 = vst.msk [vmem:[#allocation3 + $0x68] sm:$0xff] %vm1313, %v3110
        %3143 = vst.msk [vmem:[#allocation3 + $0x70] sm:$0xff] %vm1313, %v3111
        %3144 = vst.msk [vmem:[#allocation3 + $0x78] sm:$0xff] %vm1313, %v3112
        %3145 = vst.msk [vmem:[#allocation3 + $0x80] sm:$0xff] %vm1313, %v3113
        %3146 = vst.msk [vmem:[#allocation3 + $0x88] sm:$0xff] %vm1313, %v3114
        %3147 = vst.msk [vmem:[#allocation3 + $0x90] sm:$0xff] %vm1313, %v3115
        %3148 = vst.msk [vmem:[#allocation3 + $0x98] sm:$0xff] %vm1313, %v3116
        %3149 = vst.msk [vmem:[#allocation3 + $0xa0] sm:$0xff] %vm1313, %v3117
        %3150 = vst.msk [vmem:[#allocation3 + $0xa8] sm:$0xff] %vm1313, %v3118
        %3151 = vst.msk [vmem:[#allocation3 + $0xb0] sm:$0xff] %vm1313, %v3119
        %3152 = vst.msk [vmem:[#allocation3 + $0xb8] sm:$0xff] %vm1313, %v3120
        %3153 = vst.msk [vmem:[#allocation3 + $0xc0] sm:$0xff] %vm1313, %v3121
        %3154 = vst.msk [vmem:[#allocation3 + $0xc8] sm:$0xff] %vm1313, %v3122
        %3155 = vst.msk [vmem:[#allocation3 + $0xd0] sm:$0xff] %vm1313, %v3123
        %3156 = vst.msk [vmem:[#allocation3 + $0xd8] sm:$0xff] %vm1313, %v3124
        %3157 = vst.msk [vmem:[#allocation3 + $0xe0] sm:$0xff] %vm1313, %v3125
        %3158 = vst.msk [vmem:[#allocation3 + $0xe8] sm:$0xff] %vm1313, %v3126
        %3159 = vst.msk [vmem:[#allocation3 + $0xf0] sm:$0xff] %vm1313, %v3127
        %3160 = vst.msk [vmem:[#allocation3 + $0xf8] sm:$0xff] %vm1313, %v3128
        %v3161 = vld [vmem:[%s1280 + $0x1] sm:$0xff]
        %v3162 = vld [vmem:[%s1280 + $0x9] sm:$0xff]
        %v3163 = vld [vmem:[%s1280 + $0x19] sm:$0xff]
        %v3164 = vld [vmem:[%s1280 + $0x21] sm:$0xff]
        %v3165 = vld [vmem:[%s1280 + $0x31] sm:$0xff]
        %v3166 = vld [vmem:[%s1280 + $0x39] sm:$0xff]
        %v3167 = vld [vmem:[%s1280 + $0x49] sm:$0xff]
        %v3168 = vld [vmem:[%s1280 + $0x51] sm:$0xff]
        %v3169 = vld [vmem:[%s1280 + $0x61] sm:$0xff]
        %v3170 = vld [vmem:[%s1280 + $0x69] sm:$0xff]
        %v3171 = vld [vmem:[%s1280 + $0x79] sm:$0xff]
        %v3172 = vld [vmem:[%s1280 + $0x81] sm:$0xff]
        %v3173 = vld [vmem:[%s1280 + $0x91] sm:$0xff]
        %v3174 = vld [vmem:[%s1280 + $0x99] sm:$0xff]
        %v3175 = vld [vmem:[%s1280 + $0xa9] sm:$0xff]
        %v3176 = vld [vmem:[%s1280 + $0xb1] sm:$0xff]
        %v3177 = vld [vmem:[%s1280 + $0xc1] sm:$0xff]
        %v3178 = vld [vmem:[%s1280 + $0xc9] sm:$0xff]
        %v3179 = vld [vmem:[%s1280 + $0xd9] sm:$0xff]
        %v3180 = vld [vmem:[%s1280 + $0xe1] sm:$0xff]
        %v3181 = vld [vmem:[%s1280 + $0xf1] sm:$0xff]
        %v3182 = vld [vmem:[%s1280 + $0xf9] sm:$0xff]
        %v3183 = vld [vmem:[%s1280 + $0x109] sm:$0xff]
        %v3184 = vld [vmem:[%s1280 + $0x111] sm:$0xff]
        %v3185 = vld [vmem:[%s1280 + $0x121] sm:$0xff]
        %v3186 = vld [vmem:[%s1280 + $0x129] sm:$0xff]
        %v3187 = vld [vmem:[%s1280 + $0x139] sm:$0xff]
        %v3188 = vld [vmem:[%s1280 + $0x141] sm:$0xff]
        %v3189 = vld [vmem:[%s1280 + $0x151] sm:$0xff]
        %v3190 = vld [vmem:[%s1280 + $0x159] sm:$0xff]
        %v3191 = vld [vmem:[%s1280 + $0x169] sm:$0xff]
        %v3192 = vld [vmem:[%s1280 + $0x171] sm:$0xff]
        %v3193 = vld [vmem:[#allocation3] sm:$0xff]
        %v3194 = vld [vmem:[#allocation3 + $0x8] sm:$0xff]
        %v3195 = vld [vmem:[#allocation3 + $0x10] sm:$0xff]
        %v3196 = vld [vmem:[#allocation3 + $0x18] sm:$0xff]
        %v3197 = vld [vmem:[#allocation3 + $0x20] sm:$0xff]
        %v3198 = vld [vmem:[#allocation3 + $0x28] sm:$0xff]
        %v3199 = vld [vmem:[#allocation3 + $0x30] sm:$0xff]
        %v3200 = vld [vmem:[#allocation3 + $0x38] sm:$0xff]
        %v3201 = vld [vmem:[#allocation3 + $0x40] sm:$0xff]
        %v3202 = vld [vmem:[#allocation3 + $0x48] sm:$0xff]
        %v3203 = vld [vmem:[#allocation3 + $0x50] sm:$0xff]
        %v3204 = vld [vmem:[#allocation3 + $0x58] sm:$0xff]
        %v3205 = vld [vmem:[#allocation3 + $0x60] sm:$0xff]
        %v3206 = vld [vmem:[#allocation3 + $0x68] sm:$0xff]
        %v3207 = vld [vmem:[#allocation3 + $0x70] sm:$0xff]
        %v3208 = vld [vmem:[#allocation3 + $0x78] sm:$0xff]
        %v3209 = vld [vmem:[#allocation3 + $0x80] sm:$0xff]
        %v3210 = vld [vmem:[#allocation3 + $0x88] sm:$0xff]
        %v3211 = vld [vmem:[#allocation3 + $0x90] sm:$0xff]
        %v3212 = vld [vmem:[#allocation3 + $0x98] sm:$0xff]
        %v3213 = vld [vmem:[#allocation3 + $0xa0] sm:$0xff]
        %v3214 = vld [vmem:[#allocation3 + $0xa8] sm:$0xff]
        %v3215 = vld [vmem:[#allocation3 + $0xb0] sm:$0xff]
        %v3216 = vld [vmem:[#allocation3 + $0xb8] sm:$0xff]
        %v3217 = vld [vmem:[#allocation3 + $0xc0] sm:$0xff]
        %v3218 = vld [vmem:[#allocation3 + $0xc8] sm:$0xff]
        %v3219 = vld [vmem:[#allocation3 + $0xd0] sm:$0xff]
        %v3220 = vld [vmem:[#allocation3 + $0xd8] sm:$0xff]
        %v3221 = vld [vmem:[#allocation3 + $0xe0] sm:$0xff]
        %v3222 = vld [vmem:[#allocation3 + $0xe8] sm:$0xff]
        %v3223 = vld [vmem:[#allocation3 + $0xf0] sm:$0xff]
        %v3224 = vld [vmem:[#allocation3 + $0xf8] sm:$0xff]
        %s3225 = scalar_lea.vmem [#allocation10], 128
        %v3226 = vld [vmem:[%s3225] sm:$0xff]
        %v3227 = vld [vmem:[%s3225 + $0x8] sm:$0xff]
        %v3228 = vld [vmem:[%s3225 + $0x10] sm:$0xff]
        %v3229 = vld [vmem:[%s3225 + $0x18] sm:$0xff]
        %v3231 = vsel %vm373, %v3161, 0
        %v3234 = vsel %vm373, %v3162, 0
        %v3237 = vsel %vm373, %v3163, 0
        %v3240 = vsel %vm373, %v3164, 0
        %v3243 = vsel %vm373, %v3165, 0
        %v3246 = vsel %vm373, %v3166, 0
        %v3249 = vsel %vm373, %v3167, 0
        %v3252 = vsel %vm373, %v3168, 0
        %v3255 = vsel %vm373, %v3169, 0
        %v3258 = vsel %vm373, %v3170, 0
        %v3261 = vsel %vm373, %v3171, 0
        %v3264 = vsel %vm373, %v3172, 0
        %v3267 = vsel %vm373, %v3173, 0
        %v3270 = vsel %vm373, %v3174, 0
        %v3273 = vsel %vm373, %v3175, 0
        %v3276 = vsel %vm373, %v3176, 0
        %v3279 = vsel %vm373, %v3177, 0
        %v3282 = vsel %vm373, %v3178, 0
        %v3285 = vsel %vm373, %v3179, 0
        %v3288 = vsel %vm373, %v3180, 0
        %v3291 = vsel %vm373, %v3181, 0
        %v3294 = vsel %vm373, %v3182, 0
        %v3297 = vsel %vm373, %v3183, 0
        %v3300 = vsel %vm373, %v3184, 0
        %v3303 = vsel %vm373, %v3185, 0
        %v3306 = vsel %vm373, %v3186, 0
        %v3309 = vsel %vm373, %v3187, 0
        %v3312 = vsel %vm373, %v3188, 0
        %v3315 = vsel %vm373, %v3189, 0
        %v3318 = vsel %vm373, %v3190, 0
        %v3321 = vsel %vm373, %v3191, 0
        %v3324 = vsel %vm373, %v3192, 0
        %3326 = vmatprep.subr.mxu0 0.0
        %3327 = vmatpush1.msra.mxu0 %v3226
        %3328 = vmatprep.subr.mxu0 0.0
        %3329 = vmatpush1.msra.mxu0 %v3227
        %3330 = vmatprep.subr.mxu0 0.0
        %3331 = vmatpush1.msra.mxu0 %v3228
        %3332 = vmatprep.subr.mxu0 0.0
        %3333 = vmatpush1.msra.mxu0 %v3229
        %3334 = vmatprep.subr.mxu0 0.0
        %3335 = vmatpush1.msra.mxu0 0.0
        %3336 = vmatprep.subr.mxu0 0.0
        %3337 = vmatpush1.msra.mxu0 0.0
        %3338 = vmatprep.subr.mxu0 0.0
        %3339 = vmatpush1.msra.mxu0 0.0
        %3340 = vmatprep.subr.mxu0 0.0
        %3341 = vmatpush1.msra.mxu0 0.0
        %3342 = vmatprep.subr.mxu0 0.0
        %3343 = vmatpush1.msra.mxu0 0.0
        %3344 = vmatprep.subr.mxu0 0.0
        %3345 = vmatpush1.msra.mxu0 0.0
        %3346 = vmatprep.subr.mxu0 0.0
        %3347 = vmatpush1.msra.mxu0 0.0
        %3348 = vmatprep.subr.mxu0 0.0
        %3349 = vmatpush1.msra.mxu0 0.0
        %3350 = vmatprep.subr.mxu0 0.0
        %3351 = vmatpush1.msra.mxu0 0.0
        %3352 = vmatprep.subr.mxu0 0.0
        %3353 = vmatpush1.msra.mxu0 0.0
        %3354 = vmatprep.subr.mxu0 0.0
        %3355 = vmatpush1.msra.mxu0 0.0
        %3356 = vmatprep.subr.mxu0 0.0
        %3357 = vmatpush1.msra.mxu0 0.0
        %3358 = vmatprep.subr.mxu0 0.0
        %3359 = vmatpush1.msra.mxu0 0.0
        %3360 = vmatprep.subr.mxu0 0.0
        %3361 = vmatpush1.msra.mxu0 0.0
        %3362 = vmatprep.subr.mxu0 0.0
        %3363 = vmatpush1.msra.mxu0 0.0
        %3364 = vmatprep.subr.mxu0 0.0
        %3365 = vmatpush1.msra.mxu0 0.0
        %3366 = vmatprep.subr.mxu0 0.0
        %3367 = vmatpush1.msra.mxu0 0.0
        %3368 = vmatprep.subr.mxu0 0.0
        %3369 = vmatpush1.msra.mxu0 0.0
        %3370 = vmatprep.subr.mxu0 0.0
        %3371 = vmatpush1.msra.mxu0 0.0
        %3372 = vmatprep.subr.mxu0 0.0
        %3373 = vmatpush1.msra.mxu0 0.0
        %3374 = vmatprep.subr.mxu0 0.0
        %3375 = vmatpush1.msra.mxu0 0.0
        %3376 = vmatprep.subr.mxu0 0.0
        %3377 = vmatpush1.msra.mxu0 0.0
        %3378 = vmatprep.subr.mxu0 0.0
        %3379 = vmatpush1.msra.mxu0 0.0
        %3380 = vmatprep.subr.mxu0 0.0
        %3381 = vmatpush1.msra.mxu0 0.0
        %3382 = vmatprep.subr.mxu0 0.0
        %3383 = vmatpush1.msra.mxu0 0.0
        %3384 = vmatprep.subr.mxu0 0.0
        %3385 = vmatpush1.msra.mxu0 0.0
        %3386 = vmatprep.subr.mxu0 0.0
        %3387 = vmatpush1.msra.mxu0 0.0
        %3388 = vmatprep.subr.mxu0 0.0
        %3389 = vmatpush1.msra.mxu0 0.0
        %3390 = vmatprep.mubr.f32.mxu0 0.0
        %3391 = vmatmul.mubr.f32.gmra.mrb[0].mxu0 %v3231
        %v3392 = vpop.f32.mrb[0].mxu0
        %v3393 = vadd.f32 0.0, %v3392
        %v3394 = vpop.f32.mrb[0].mxu0
        %3395 = vmatprep.mubr.f32.mxu0 0.0
        %3396 = vmatmul.mubr.f32.gmra.mrb[0].mxu0 %v3234
        %v3397 = vpop.f32.mrb[0].mxu0
        %v3398 = vadd.f32 0.0, %v3397
        %v3399 = vpop.f32.mrb[0].mxu0
        %3400 = vmatprep.mubr.f32.mxu0 0.0
        %3401 = vmatmul.mubr.f32.gmra.mrb[0].mxu0 %v3237
        %v3402 = vpop.f32.mrb[0].mxu0
        %v3403 = vadd.f32 0.0, %v3402
        %v3404 = vpop.f32.mrb[0].mxu0
        %3405 = vmatprep.mubr.f32.mxu0 0.0
        %3406 = vmatmul.mubr.f32.gmra.mrb[0].mxu0 %v3240
        %v3407 = vpop.f32.mrb[0].mxu0
        %v3408 = vadd.f32 0.0, %v3407
        %v3409 = vpop.f32.mrb[0].mxu0
        %3410 = vmatprep.mubr.f32.mxu0 0.0
        %3411 = vmatmul.mubr.f32.gmra.mrb[0].mxu0 %v3243
        %v3412 = vpop.f32.mrb[0].mxu0
        %v3413 = vadd.f32 0.0, %v3412
        %v3414 = vpop.f32.mrb[0].mxu0
        %3415 = vmatprep.mubr.f32.mxu0 0.0
        %3416 = vmatmul.mubr.f32.gmra.mrb[0].mxu0 %v3246
        %v3417 = vpop.f32.mrb[0].mxu0
        %v3418 = vadd.f32 0.0, %v3417
        %v3419 = vpop.f32.mrb[0].mxu0
        %3420 = vmatprep.mubr.f32.mxu0 0.0
        %3421 = vmatmul.mubr.f32.gmra.mrb[0].mxu0 %v3249
        %v3422 = vpop.f32.mrb[0].mxu0
        %v3423 = vadd.f32 0.0, %v3422
        %v3424 = vpop.f32.mrb[0].mxu0
        %3425 = vmatprep.mubr.f32.mxu0 0.0
        %3426 = vmatmul.mubr.f32.gmra.mrb[0].mxu0 %v3252
        %v3427 = vpop.f32.mrb[0].mxu0
        %v3428 = vadd.f32 0.0, %v3427
        %v3429 = vpop.f32.mrb[0].mxu0
        %3430 = vmatprep.mubr.f32.mxu0 0.0
        %3431 = vmatmul.mubr.f32.gmra.mrb[0].mxu0 %v3255
        %v3432 = vpop.f32.mrb[0].mxu0
        %v3433 = vadd.f32 0.0, %v3432
        %v3434 = vpop.f32.mrb[0].mxu0
        %3435 = vmatprep.mubr.f32.mxu0 0.0
        %3436 = vmatmul.mubr.f32.gmra.mrb[0].mxu0 %v3258
        %v3437 = vpop.f32.mrb[0].mxu0
        %v3438 = vadd.f32 0.0, %v3437
        %v3439 = vpop.f32.mrb[0].mxu0
        %3440 = vmatprep.mubr.f32.mxu0 0.0
        %3441 = vmatmul.mubr.f32.gmra.mrb[0].mxu0 %v3261
        %v3442 = vpop.f32.mrb[0].mxu0
        %v3443 = vadd.f32 0.0, %v3442
        %v3444 = vpop.f32.mrb[0].mxu0
        %3445 = vmatprep.mubr.f32.mxu0 0.0
        %3446 = vmatmul.mubr.f32.gmra.mrb[0].mxu0 %v3264
        %v3447 = vpop.f32.mrb[0].mxu0
        %v3448 = vadd.f32 0.0, %v3447
        %v3449 = vpop.f32.mrb[0].mxu0
        %3450 = vmatprep.mubr.f32.mxu0 0.0
        %3451 = vmatmul.mubr.f32.gmra.mrb[0].mxu0 %v3267
        %v3452 = vpop.f32.mrb[0].mxu0
        %v3453 = vadd.f32 0.0, %v3452
        %v3454 = vpop.f32.mrb[0].mxu0
        %3455 = vmatprep.mubr.f32.mxu0 0.0
        %3456 = vmatmul.mubr.f32.gmra.mrb[0].mxu0 %v3270
        %v3457 = vpop.f32.mrb[0].mxu0
        %v3458 = vadd.f32 0.0, %v3457
        %v3459 = vpop.f32.mrb[0].mxu0
        %3460 = vmatprep.mubr.f32.mxu0 0.0
        %3461 = vmatmul.mubr.f32.gmra.mrb[0].mxu0 %v3273
        %v3462 = vpop.f32.mrb[0].mxu0
        %v3463 = vadd.f32 0.0, %v3462
        %v3464 = vpop.f32.mrb[0].mxu0
        %3465 = vmatprep.mubr.f32.mxu0 0.0
        %3466 = vmatmul.mubr.f32.gmra.mrb[0].mxu0 %v3276
        %v3467 = vpop.f32.mrb[0].mxu0
        %v3468 = vadd.f32 0.0, %v3467
        %v3469 = vpop.f32.mrb[0].mxu0
        %3470 = vmatprep.mubr.f32.mxu0 0.0
        %3471 = vmatmul.mubr.f32.gmra.mrb[0].mxu0 %v3279
        %v3472 = vpop.f32.mrb[0].mxu0
        %v3473 = vadd.f32 0.0, %v3472
        %v3474 = vpop.f32.mrb[0].mxu0
        %3475 = vmatprep.mubr.f32.mxu0 0.0
        %3476 = vmatmul.mubr.f32.gmra.mrb[0].mxu0 %v3282
        %v3477 = vpop.f32.mrb[0].mxu0
        %v3478 = vadd.f32 0.0, %v3477
        %v3479 = vpop.f32.mrb[0].mxu0
        %3480 = vmatprep.mubr.f32.mxu0 0.0
        %3481 = vmatmul.mubr.f32.gmra.mrb[0].mxu0 %v3285
        %v3482 = vpop.f32.mrb[0].mxu0
        %v3483 = vadd.f32 0.0, %v3482
        %v3484 = vpop.f32.mrb[0].mxu0
        %3485 = vmatprep.mubr.f32.mxu0 0.0
        %3486 = vmatmul.mubr.f32.gmra.mrb[0].mxu0 %v3288
        %v3487 = vpop.f32.mrb[0].mxu0
        %v3488 = vadd.f32 0.0, %v3487
        %v3489 = vpop.f32.mrb[0].mxu0
        %3490 = vmatprep.mubr.f32.mxu0 0.0
        %3491 = vmatmul.mubr.f32.gmra.mrb[0].mxu0 %v3291
        %v3492 = vpop.f32.mrb[0].mxu0
        %v3493 = vadd.f32 0.0, %v3492
        %v3494 = vpop.f32.mrb[0].mxu0
        %3495 = vmatprep.mubr.f32.mxu0 0.0
        %3496 = vmatmul.mubr.f32.gmra.mrb[0].mxu0 %v3294
        %v3497 = vpop.f32.mrb[0].mxu0
        %v3498 = vadd.f32 0.0, %v3497
        %v3499 = vpop.f32.mrb[0].mxu0
        %3500 = vmatprep.mubr.f32.mxu0 0.0
        %3501 = vmatmul.mubr.f32.gmra.mrb[0].mxu0 %v3297
        %v3502 = vpop.f32.mrb[0].mxu0
        %v3503 = vadd.f32 0.0, %v3502
        %v3504 = vpop.f32.mrb[0].mxu0
        %3505 = vmatprep.mubr.f32.mxu0 0.0
        %3506 = vmatmul.mubr.f32.gmra.mrb[0].mxu0 %v3300
        %v3507 = vpop.f32.mrb[0].mxu0
        %v3508 = vadd.f32 0.0, %v3507
        %v3509 = vpop.f32.mrb[0].mxu0
        %3510 = vmatprep.mubr.f32.mxu0 0.0
        %3511 = vmatmul.mubr.f32.gmra.mrb[0].mxu0 %v3303
        %v3512 = vpop.f32.mrb[0].mxu0
        %v3513 = vadd.f32 0.0, %v3512
        %v3514 = vpop.f32.mrb[0].mxu0
        %3515 = vmatprep.mubr.f32.mxu0 0.0
        %3516 = vmatmul.mubr.f32.gmra.mrb[0].mxu0 %v3306
        %v3517 = vpop.f32.mrb[0].mxu0
        %v3518 = vadd.f32 0.0, %v3517
        %v3519 = vpop.f32.mrb[0].mxu0
        %3520 = vmatprep.mubr.f32.mxu0 0.0
        %3521 = vmatmul.mubr.f32.gmra.mrb[0].mxu0 %v3309
        %v3522 = vpop.f32.mrb[0].mxu0
        %v3523 = vadd.f32 0.0, %v3522
        %v3524 = vpop.f32.mrb[0].mxu0
        %3525 = vmatprep.mubr.f32.mxu0 0.0
        %3526 = vmatmul.mubr.f32.gmra.mrb[0].mxu0 %v3312
        %v3527 = vpop.f32.mrb[0].mxu0
        %v3528 = vadd.f32 0.0, %v3527
        %v3529 = vpop.f32.mrb[0].mxu0
        %3530 = vmatprep.mubr.f32.mxu0 0.0
        %3531 = vmatmul.mubr.f32.gmra.mrb[0].mxu0 %v3315
        %v3532 = vpop.f32.mrb[0].mxu0
        %v3533 = vadd.f32 0.0, %v3532
        %v3534 = vpop.f32.mrb[0].mxu0
        %3535 = vmatprep.mubr.f32.mxu0 0.0
        %3536 = vmatmul.mubr.f32.gmra.mrb[0].mxu0 %v3318
        %v3537 = vpop.f32.mrb[0].mxu0
        %v3538 = vadd.f32 0.0, %v3537
        %v3539 = vpop.f32.mrb[0].mxu0
        %3540 = vmatprep.mubr.f32.mxu0 0.0
        %3541 = vmatmul.mubr.f32.gmra.mrb[0].mxu0 %v3321
        %v3542 = vpop.f32.mrb[0].mxu0
        %v3543 = vadd.f32 0.0, %v3542
        %v3544 = vpop.f32.mrb[0].mxu0
        %3545 = vmatprep.mubr.f32.mxu0 0.0
        %3546 = vmatmul.mubr.f32.gmra.mrb[0].mxu0 %v3324
        %v3547 = vpop.f32.mrb[0].mxu0
        %v3548 = vadd.f32 0.0, %v3547
        %v3549 = vpop.f32.mrb[0].mxu0
        %3550 = vdwg.mxu0
        %v3551 = vadd.f32 %v3193, %v3393
        %v3552 = vadd.f32 %v3194, %v3398
        %v3553 = vadd.f32 %v3195, %v3403
        %v3554 = vadd.f32 %v3196, %v3408
        %v3555 = vadd.f32 %v3197, %v3413
        %v3556 = vadd.f32 %v3198, %v3418
        %v3557 = vadd.f32 %v3199, %v3423
        %v3558 = vadd.f32 %v3200, %v3428
        %v3559 = vadd.f32 %v3201, %v3433
        %v3560 = vadd.f32 %v3202, %v3438
        %v3561 = vadd.f32 %v3203, %v3443
        %v3562 = vadd.f32 %v3204, %v3448
        %v3563 = vadd.f32 %v3205, %v3453
        %v3564 = vadd.f32 %v3206, %v3458
        %v3565 = vadd.f32 %v3207, %v3463
        %v3566 = vadd.f32 %v3208, %v3468
        %v3567 = vadd.f32 %v3209, %v3473
        %v3568 = vadd.f32 %v3210, %v3478
        %v3569 = vadd.f32 %v3211, %v3483
        %v3570 = vadd.f32 %v3212, %v3488
        %v3571 = vadd.f32 %v3213, %v3493
        %v3572 = vadd.f32 %v3214, %v3498
        %v3573 = vadd.f32 %v3215, %v3503
        %v3574 = vadd.f32 %v3216, %v3508
        %v3575 = vadd.f32 %v3217, %v3513
        %v3576 = vadd.f32 %v3218, %v3518
        %v3577 = vadd.f32 %v3219, %v3523
        %v3578 = vadd.f32 %v3220, %v3528
        %v3579 = vadd.f32 %v3221, %v3533
        %v3580 = vadd.f32 %v3222, %v3538
        %v3581 = vadd.f32 %v3223, %v3543
        %v3582 = vadd.f32 %v3224, %v3548
        %3583 = vst.msk [vmem:[#allocation3] sm:$0xff] %vm1313, %v3551
        %3584 = vst.msk [vmem:[#allocation3 + $0x8] sm:$0xff] %vm1313, %v3552
        %3585 = vst.msk [vmem:[#allocation3 + $0x10] sm:$0xff] %vm1313, %v3553
        %3586 = vst.msk [vmem:[#allocation3 + $0x18] sm:$0xff] %vm1313, %v3554
        %3587 = vst.msk [vmem:[#allocation3 + $0x20] sm:$0xff] %vm1313, %v3555
        %3588 = vst.msk [vmem:[#allocation3 + $0x28] sm:$0xff] %vm1313, %v3556
        %3589 = vst.msk [vmem:[#allocation3 + $0x30] sm:$0xff] %vm1313, %v3557
        %3590 = vst.msk [vmem:[#allocation3 + $0x38] sm:$0xff] %vm1313, %v3558
        %3591 = vst.msk [vmem:[#allocation3 + $0x40] sm:$0xff] %vm1313, %v3559
        %3592 = vst.msk [vmem:[#allocation3 + $0x48] sm:$0xff] %vm1313, %v3560
        %3593 = vst.msk [vmem:[#allocation3 + $0x50] sm:$0xff] %vm1313, %v3561
        %3594 = vst.msk [vmem:[#allocation3 + $0x58] sm:$0xff] %vm1313, %v3562
        %3595 = vst.msk [vmem:[#allocation3 + $0x60] sm:$0xff] %vm1313, %v3563
        %3596 = vst.msk [vmem:[#allocation3 + $0x68] sm:$0xff] %vm1313, %v3564
        %3597 = vst.msk [vmem:[#allocation3 + $0x70] sm:$0xff] %vm1313, %v3565
        %3598 = vst.msk [vmem:[#allocation3 + $0x78] sm:$0xff] %vm1313, %v3566
        %3599 = vst.msk [vmem:[#allocation3 + $0x80] sm:$0xff] %vm1313, %v3567
        %3600 = vst.msk [vmem:[#allocation3 + $0x88] sm:$0xff] %vm1313, %v3568
        %3601 = vst.msk [vmem:[#allocation3 + $0x90] sm:$0xff] %vm1313, %v3569
        %3602 = vst.msk [vmem:[#allocation3 + $0x98] sm:$0xff] %vm1313, %v3570
        %3603 = vst.msk [vmem:[#allocation3 + $0xa0] sm:$0xff] %vm1313, %v3571
        %3604 = vst.msk [vmem:[#allocation3 + $0xa8] sm:$0xff] %vm1313, %v3572
        %3605 = vst.msk [vmem:[#allocation3 + $0xb0] sm:$0xff] %vm1313, %v3573
        %3606 = vst.msk [vmem:[#allocation3 + $0xb8] sm:$0xff] %vm1313, %v3574
        %3607 = vst.msk [vmem:[#allocation3 + $0xc0] sm:$0xff] %vm1313, %v3575
        %3608 = vst.msk [vmem:[#allocation3 + $0xc8] sm:$0xff] %vm1313, %v3576
        %3609 = vst.msk [vmem:[#allocation3 + $0xd0] sm:$0xff] %vm1313, %v3577
        %3610 = vst.msk [vmem:[#allocation3 + $0xd8] sm:$0xff] %vm1313, %v3578
        %3611 = vst.msk [vmem:[#allocation3 + $0xe0] sm:$0xff] %vm1313, %v3579
        %3612 = vst.msk [vmem:[#allocation3 + $0xe8] sm:$0xff] %vm1313, %v3580
        %3613 = vst.msk [vmem:[#allocation3 + $0xf0] sm:$0xff] %vm1313, %v3581
        %3614 = vst.msk [vmem:[#allocation3 + $0xf8] sm:$0xff] %vm1313, %v3582
        %v3615 = vld [vmem:[%s1280 + $0x2] sm:$0xff]
        %v3616 = vld [vmem:[%s1280 + $0xa] sm:$0xff]
        %v3617 = vld [vmem:[%s1280 + $0x1a] sm:$0xff]
        %v3618 = vld [vmem:[%s1280 + $0x22] sm:$0xff]
        %v3619 = vld [vmem:[%s1280 + $0x32] sm:$0xff]
        %v3620 = vld [vmem:[%s1280 + $0x3a] sm:$0xff]
        %v3621 = vld [vmem:[%s1280 + $0x4a] sm:$0xff]
        %v3622 = vld [vmem:[%s1280 + $0x52] sm:$0xff]
        %v3623 = vld [vmem:[%s1280 + $0x62] sm:$0xff]
        %v3624 = vld [vmem:[%s1280 + $0x6a] sm:$0xff]
        %v3625 = vld [vmem:[%s1280 + $0x7a] sm:$0xff]
        %v3626 = vld [vmem:[%s1280 + $0x82] sm:$0xff]
        %v3627 = vld [vmem:[%s1280 + $0x92] sm:$0xff]
        %v3628 = vld [vmem:[%s1280 + $0x9a] sm:$0xff]
        %v3629 = vld [vmem:[%s1280 + $0xaa] sm:$0xff]
        %v3630 = vld [vmem:[%s1280 + $0xb2] sm:$0xff]
        %v3631 = vld [vmem:[%s1280 + $0xc2] sm:$0xff]
        %v3632 = vld [vmem:[%s1280 + $0xca] sm:$0xff]
        %v3633 = vld [vmem:[%s1280 + $0xda] sm:$0xff]
        %v3634 = vld [vmem:[%s1280 + $0xe2] sm:$0xff]
        %v3635 = vld [vmem:[%s1280 + $0xf2] sm:$0xff]
        %v3636 = vld [vmem:[%s1280 + $0xfa] sm:$0xff]
        %v3637 = vld [vmem:[%s1280 + $0x10a] sm:$0xff]
        %v3638 = vld [vmem:[%s1280 + $0x112] sm:$0xff]
        %v3639 = vld [vmem:[%s1280 + $0x122] sm:$0xff]
        %v3640 = vld [vmem:[%s1280 + $0x12a] sm:$0xff]
        %v3641 = vld [vmem:[%s1280 + $0x13a] sm:$0xff]
        %v3642 = vld [vmem:[%s1280 + $0x142] sm:$0xff]
        %v3643 = vld [vmem:[%s1280 + $0x152] sm:$0xff]
        %v3644 = vld [vmem:[%s1280 + $0x15a] sm:$0xff]
        %v3645 = vld [vmem:[%s1280 + $0x16a] sm:$0xff]
        %v3646 = vld [vmem:[%s1280 + $0x172] sm:$0xff]
        %v3647 = vld [vmem:[#allocation3] sm:$0xff]
        %v3648 = vld [vmem:[#allocation3 + $0x8] sm:$0xff]
        %v3649 = vld [vmem:[#allocation3 + $0x10] sm:$0xff]
        %v3650 = vld [vmem:[#allocation3 + $0x18] sm:$0xff]
        %v3651 = vld [vmem:[#allocation3 + $0x20] sm:$0xff]
        %v3652 = vld [vmem:[#allocation3 + $0x28] sm:$0xff]
        %v3653 = vld [vmem:[#allocation3 + $0x30] sm:$0xff]
        %v3654 = vld [vmem:[#allocation3 + $0x38] sm:$0xff]
        %v3655 = vld [vmem:[#allocation3 + $0x40] sm:$0xff]
        %v3656 = vld [vmem:[#allocation3 + $0x48] sm:$0xff]
        %v3657 = vld [vmem:[#allocation3 + $0x50] sm:$0xff]
        %v3658 = vld [vmem:[#allocation3 + $0x58] sm:$0xff]
        %v3659 = vld [vmem:[#allocation3 + $0x60] sm:$0xff]
        %v3660 = vld [vmem:[#allocation3 + $0x68] sm:$0xff]
        %v3661 = vld [vmem:[#allocation3 + $0x70] sm:$0xff]
        %v3662 = vld [vmem:[#allocation3 + $0x78] sm:$0xff]
        %v3663 = vld [vmem:[#allocation3 + $0x80] sm:$0xff]
        %v3664 = vld [vmem:[#allocation3 + $0x88] sm:$0xff]
        %v3665 = vld [vmem:[#allocation3 + $0x90] sm:$0xff]
        %v3666 = vld [vmem:[#allocation3 + $0x98] sm:$0xff]
        %v3667 = vld [vmem:[#allocation3 + $0xa0] sm:$0xff]
        %v3668 = vld [vmem:[#allocation3 + $0xa8] sm:$0xff]
        %v3669 = vld [vmem:[#allocation3 + $0xb0] sm:$0xff]
        %v3670 = vld [vmem:[#allocation3 + $0xb8] sm:$0xff]
        %v3671 = vld [vmem:[#allocation3 + $0xc0] sm:$0xff]
        %v3672 = vld [vmem:[#allocation3 + $0xc8] sm:$0xff]
        %v3673 = vld [vmem:[#allocation3 + $0xd0] sm:$0xff]
        %v3674 = vld [vmem:[#allocation3 + $0xd8] sm:$0xff]
        %v3675 = vld [vmem:[#allocation3 + $0xe0] sm:$0xff]
        %v3676 = vld [vmem:[#allocation3 + $0xe8] sm:$0xff]
        %v3677 = vld [vmem:[#allocation3 + $0xf0] sm:$0xff]
        %v3678 = vld [vmem:[#allocation3 + $0xf8] sm:$0xff]
        %s3679 = scalar_lea.vmem [#allocation10], 160
        %v3680 = vld [vmem:[%s3679] sm:$0xff]
        %v3681 = vld [vmem:[%s3679 + $0x8] sm:$0xff]
        %v3682 = vld [vmem:[%s3679 + $0x10] sm:$0xff]
        %v3683 = vld [vmem:[%s3679 + $0x18] sm:$0xff]
        %v3685 = vsel %vm373, %v3615, 0
        %v3688 = vsel %vm373, %v3616, 0
        %v3691 = vsel %vm373, %v3617, 0
        %v3694 = vsel %vm373, %v3618, 0
        %v3697 = vsel %vm373, %v3619, 0
        %v3700 = vsel %vm373, %v3620, 0
        %v3703 = vsel %vm373, %v3621, 0
        %v3706 = vsel %vm373, %v3622, 0
        %v3709 = vsel %vm373, %v3623, 0
        %v3712 = vsel %vm373, %v3624, 0
        %v3715 = vsel %vm373, %v3625, 0
        %v3718 = vsel %vm373, %v3626, 0
        %v3721 = vsel %vm373, %v3627, 0
        %v3724 = vsel %vm373, %v3628, 0
        %v3727 = vsel %vm373, %v3629, 0
        %v3730 = vsel %vm373, %v3630, 0
        %v3733 = vsel %vm373, %v3631, 0
        %v3736 = vsel %vm373, %v3632, 0
        %v3739 = vsel %vm373, %v3633, 0
        %v3742 = vsel %vm373, %v3634, 0
        %v3745 = vsel %vm373, %v3635, 0
        %v3748 = vsel %vm373, %v3636, 0
        %v3751 = vsel %vm373, %v3637, 0
        %v3754 = vsel %vm373, %v3638, 0
        %v3757 = vsel %vm373, %v3639, 0
        %v3760 = vsel %vm373, %v3640, 0
        %v3763 = vsel %vm373, %v3641, 0
        %v3766 = vsel %vm373, %v3642, 0
        %v3769 = vsel %vm373, %v3643, 0
        %v3772 = vsel %vm373, %v3644, 0
        %v3775 = vsel %vm373, %v3645, 0
        %v3778 = vsel %vm373, %v3646, 0
        %3780 = vmatprep.subr.mxu0 0.0
        %3781 = vmatpush1.msra.mxu0 %v3680
        %3782 = vmatprep.subr.mxu0 0.0
        %3783 = vmatpush1.msra.mxu0 %v3681
        %3784 = vmatprep.subr.mxu0 0.0
        %3785 = vmatpush1.msra.mxu0 %v3682
        %3786 = vmatprep.subr.mxu0 0.0
        %3787 = vmatpush1.msra.mxu0 %v3683
        %3788 = vmatprep.subr.mxu0 0.0
        %3789 = vmatpush1.msra.mxu0 0.0
        %3790 = vmatprep.subr.mxu0 0.0
        %3791 = vmatpush1.msra.mxu0 0.0
        %3792 = vmatprep.subr.mxu0 0.0
        %3793 = vmatpush1.msra.mxu0 0.0
        %3794 = vmatprep.subr.mxu0 0.0
        %3795 = vmatpush1.msra.mxu0 0.0
        %3796 = vmatprep.subr.mxu0 0.0
        %3797 = vmatpush1.msra.mxu0 0.0
        %3798 = vmatprep.subr.mxu0 0.0
        %3799 = vmatpush1.msra.mxu0 0.0
        %3800 = vmatprep.subr.mxu0 0.0
        %3801 = vmatpush1.msra.mxu0 0.0
        %3802 = vmatprep.subr.mxu0 0.0
        %3803 = vmatpush1.msra.mxu0 0.0
        %3804 = vmatprep.subr.mxu0 0.0
        %3805 = vmatpush1.msra.mxu0 0.0
        %3806 = vmatprep.subr.mxu0 0.0
        %3807 = vmatpush1.msra.mxu0 0.0
        %3808 = vmatprep.subr.mxu0 0.0
        %3809 = vmatpush1.msra.mxu0 0.0
        %3810 = vmatprep.subr.mxu0 0.0
        %3811 = vmatpush1.msra.mxu0 0.0
        %3812 = vmatprep.subr.mxu0 0.0
        %3813 = vmatpush1.msra.mxu0 0.0
        %3814 = vmatprep.subr.mxu0 0.0
        %3815 = vmatpush1.msra.mxu0 0.0
        %3816 = vmatprep.subr.mxu0 0.0
        %3817 = vmatpush1.msra.mxu0 0.0
        %3818 = vmatprep.subr.mxu0 0.0
        %3819 = vmatpush1.msra.mxu0 0.0
        %3820 = vmatprep.subr.mxu0 0.0
        %3821 = vmatpush1.msra.mxu0 0.0
        %3822 = vmatprep.subr.mxu0 0.0
        %3823 = vmatpush1.msra.mxu0 0.0
        %3824 = vmatprep.subr.mxu0 0.0
        %3825 = vmatpush1.msra.mxu0 0.0
        %3826 = vmatprep.subr.mxu0 0.0
        %3827 = vmatpush1.msra.mxu0 0.0
        %3828 = vmatprep.subr.mxu0 0.0
        %3829 = vmatpush1.msra.mxu0 0.0
        %3830 = vmatprep.subr.mxu0 0.0
        %3831 = vmatpush1.msra.mxu0 0.0
        %3832 = vmatprep.subr.mxu0 0.0
        %3833 = vmatpush1.msra.mxu0 0.0
        %3834 = vmatprep.subr.mxu0 0.0
        %3835 = vmatpush1.msra.mxu0 0.0
        %3836 = vmatprep.subr.mxu0 0.0
        %3837 = vmatpush1.msra.mxu0 0.0
        %3838 = vmatprep.subr.mxu0 0.0
        %3839 = vmatpush1.msra.mxu0 0.0
        %3840 = vmatprep.subr.mxu0 0.0
        %3841 = vmatpush1.msra.mxu0 0.0
        %3842 = vmatprep.subr.mxu0 0.0
        %3843 = vmatpush1.msra.mxu0 0.0
        %3844 = vmatprep.mubr.f32.mxu0 0.0
        %3845 = vmatmul.mubr.f32.gmra.mrb[0].mxu0 %v3685
        %v3846 = vpop.f32.mrb[0].mxu0
        %v3847 = vadd.f32 0.0, %v3846
        %v3848 = vpop.f32.mrb[0].mxu0
        %3849 = vmatprep.mubr.f32.mxu0 0.0
        %3850 = vmatmul.mubr.f32.gmra.mrb[0].mxu0 %v3688
        %v3851 = vpop.f32.mrb[0].mxu0
        %v3852 = vadd.f32 0.0, %v3851
        %v3853 = vpop.f32.mrb[0].mxu0
        %3854 = vmatprep.mubr.f32.mxu0 0.0
        %3855 = vmatmul.mubr.f32.gmra.mrb[0].mxu0 %v3691
        %v3856 = vpop.f32.mrb[0].mxu0
        %v3857 = vadd.f32 0.0, %v3856
        %v3858 = vpop.f32.mrb[0].mxu0
        %3859 = vmatprep.mubr.f32.mxu0 0.0
        %3860 = vmatmul.mubr.f32.gmra.mrb[0].mxu0 %v3694
        %v3861 = vpop.f32.mrb[0].mxu0
        %v3862 = vadd.f32 0.0, %v3861
        %v3863 = vpop.f32.mrb[0].mxu0
        %3864 = vmatprep.mubr.f32.mxu0 0.0
        %3865 = vmatmul.mubr.f32.gmra.mrb[0].mxu0 %v3697
        %v3866 = vpop.f32.mrb[0].mxu0
        %v3867 = vadd.f32 0.0, %v3866
        %v3868 = vpop.f32.mrb[0].mxu0
        %3869 = vmatprep.mubr.f32.mxu0 0.0
        %3870 = vmatmul.mubr.f32.gmra.mrb[0].mxu0 %v3700
        %v3871 = vpop.f32.mrb[0].mxu0
        %v3872 = vadd.f32 0.0, %v3871
        %v3873 = vpop.f32.mrb[0].mxu0
        %3874 = vmatprep.mubr.f32.mxu0 0.0
        %3875 = vmatmul.mubr.f32.gmra.mrb[0].mxu0 %v3703
        %v3876 = vpop.f32.mrb[0].mxu0
        %v3877 = vadd.f32 0.0, %v3876
        %v3878 = vpop.f32.mrb[0].mxu0
        %3879 = vmatprep.mubr.f32.mxu0 0.0
        %3880 = vmatmul.mubr.f32.gmra.mrb[0].mxu0 %v3706
        %v3881 = vpop.f32.mrb[0].mxu0
        %v3882 = vadd.f32 0.0, %v3881
        %v3883 = vpop.f32.mrb[0].mxu0
        %3884 = vmatprep.mubr.f32.mxu0 0.0
        %3885 = vmatmul.mubr.f32.gmra.mrb[0].mxu0 %v3709
        %v3886 = vpop.f32.mrb[0].mxu0
        %v3887 = vadd.f32 0.0, %v3886
        %v3888 = vpop.f32.mrb[0].mxu0
        %3889 = vmatprep.mubr.f32.mxu0 0.0
        %3890 = vmatmul.mubr.f32.gmra.mrb[0].mxu0 %v3712
        %v3891 = vpop.f32.mrb[0].mxu0
        %v3892 = vadd.f32 0.0, %v3891
        %v3893 = vpop.f32.mrb[0].mxu0
        %3894 = vmatprep.mubr.f32.mxu0 0.0
        %3895 = vmatmul.mubr.f32.gmra.mrb[0].mxu0 %v3715
        %v3896 = vpop.f32.mrb[0].mxu0
        %v3897 = vadd.f32 0.0, %v3896
        %v3898 = vpop.f32.mrb[0].mxu0
        %3899 = vmatprep.mubr.f32.mxu0 0.0
        %3900 = vmatmul.mubr.f32.gmra.mrb[0].mxu0 %v3718
        %v3901 = vpop.f32.mrb[0].mxu0
        %v3902 = vadd.f32 0.0, %v3901
        %v3903 = vpop.f32.mrb[0].mxu0
        %3904 = vmatprep.mubr.f32.mxu0 0.0
        %3905 = vmatmul.mubr.f32.gmra.mrb[0].mxu0 %v3721
        %v3906 = vpop.f32.mrb[0].mxu0
        %v3907 = vadd.f32 0.0, %v3906
        %v3908 = vpop.f32.mrb[0].mxu0
        %3909 = vmatprep.mubr.f32.mxu0 0.0
        %3910 = vmatmul.mubr.f32.gmra.mrb[0].mxu0 %v3724
        %v3911 = vpop.f32.mrb[0].mxu0
        %v3912 = vadd.f32 0.0, %v3911
        %v3913 = vpop.f32.mrb[0].mxu0
        %3914 = vmatprep.mubr.f32.mxu0 0.0
        %3915 = vmatmul.mubr.f32.gmra.mrb[0].mxu0 %v3727
        %v3916 = vpop.f32.mrb[0].mxu0
        %v3917 = vadd.f32 0.0, %v3916
        %v3918 = vpop.f32.mrb[0].mxu0
        %3919 = vmatprep.mubr.f32.mxu0 0.0
        %3920 = vmatmul.mubr.f32.gmra.mrb[0].mxu0 %v3730
        %v3921 = vpop.f32.mrb[0].mxu0
        %v3922 = vadd.f32 0.0, %v3921
        %v3923 = vpop.f32.mrb[0].mxu0
        %3924 = vmatprep.mubr.f32.mxu0 0.0
        %3925 = vmatmul.mubr.f32.gmra.mrb[0].mxu0 %v3733
        %v3926 = vpop.f32.mrb[0].mxu0
        %v3927 = vadd.f32 0.0, %v3926
        %v3928 = vpop.f32.mrb[0].mxu0
        %3929 = vmatprep.mubr.f32.mxu0 0.0
        %3930 = vmatmul.mubr.f32.gmra.mrb[0].mxu0 %v3736
        %v3931 = vpop.f32.mrb[0].mxu0
        %v3932 = vadd.f32 0.0, %v3931
        %v3933 = vpop.f32.mrb[0].mxu0
        %3934 = vmatprep.mubr.f32.mxu0 0.0
        %3935 = vmatmul.mubr.f32.gmra.mrb[0].mxu0 %v3739
        %v3936 = vpop.f32.mrb[0].mxu0
        %v3937 = vadd.f32 0.0, %v3936
        %v3938 = vpop.f32.mrb[0].mxu0
        %3939 = vmatprep.mubr.f32.mxu0 0.0
        %3940 = vmatmul.mubr.f32.gmra.mrb[0].mxu0 %v3742
        %v3941 = vpop.f32.mrb[0].mxu0
        %v3942 = vadd.f32 0.0, %v3941
        %v3943 = vpop.f32.mrb[0].mxu0
        %3944 = vmatprep.mubr.f32.mxu0 0.0
        %3945 = vmatmul.mubr.f32.gmra.mrb[0].mxu0 %v3745
        %v3946 = vpop.f32.mrb[0].mxu0
        %v3947 = vadd.f32 0.0, %v3946
        %v3948 = vpop.f32.mrb[0].mxu0
        %3949 = vmatprep.mubr.f32.mxu0 0.0
        %3950 = vmatmul.mubr.f32.gmra.mrb[0].mxu0 %v3748
        %v3951 = vpop.f32.mrb[0].mxu0
        %v3952 = vadd.f32 0.0, %v3951
        %v3953 = vpop.f32.mrb[0].mxu0
        %3954 = vmatprep.mubr.f32.mxu0 0.0
        %3955 = vmatmul.mubr.f32.gmra.mrb[0].mxu0 %v3751
        %v3956 = vpop.f32.mrb[0].mxu0
        %v3957 = vadd.f32 0.0, %v3956
        %v3958 = vpop.f32.mrb[0].mxu0
        %3959 = vmatprep.mubr.f32.mxu0 0.0
        %3960 = vmatmul.mubr.f32.gmra.mrb[0].mxu0 %v3754
        %v3961 = vpop.f32.mrb[0].mxu0
        %v3962 = vadd.f32 0.0, %v3961
        %v3963 = vpop.f32.mrb[0].mxu0
        %3964 = vmatprep.mubr.f32.mxu0 0.0
        %3965 = vmatmul.mubr.f32.gmra.mrb[0].mxu0 %v3757
        %v3966 = vpop.f32.mrb[0].mxu0
        %v3967 = vadd.f32 0.0, %v3966
        %v3968 = vpop.f32.mrb[0].mxu0
        %3969 = vmatprep.mubr.f32.mxu0 0.0
        %3970 = vmatmul.mubr.f32.gmra.mrb[0].mxu0 %v3760
        %v3971 = vpop.f32.mrb[0].mxu0
        %v3972 = vadd.f32 0.0, %v3971
        %v3973 = vpop.f32.mrb[0].mxu0
        %3974 = vmatprep.mubr.f32.mxu0 0.0
        %3975 = vmatmul.mubr.f32.gmra.mrb[0].mxu0 %v3763
        %v3976 = vpop.f32.mrb[0].mxu0
        %v3977 = vadd.f32 0.0, %v3976
        %v3978 = vpop.f32.mrb[0].mxu0
        %3979 = vmatprep.mubr.f32.mxu0 0.0
        %3980 = vmatmul.mubr.f32.gmra.mrb[0].mxu0 %v3766
        %v3981 = vpop.f32.mrb[0].mxu0
        %v3982 = vadd.f32 0.0, %v3981
        %v3983 = vpop.f32.mrb[0].mxu0
        %3984 = vmatprep.mubr.f32.mxu0 0.0
        %3985 = vmatmul.mubr.f32.gmra.mrb[0].mxu0 %v3769
        %v3986 = vpop.f32.mrb[0].mxu0
        %v3987 = vadd.f32 0.0, %v3986
        %v3988 = vpop.f32.mrb[0].mxu0
        %3989 = vmatprep.mubr.f32.mxu0 0.0
        %3990 = vmatmul.mubr.f32.gmra.mrb[0].mxu0 %v3772
        %v3991 = vpop.f32.mrb[0].mxu0
        %v3992 = vadd.f32 0.0, %v3991
        %v3993 = vpop.f32.mrb[0].mxu0
        %3994 = vmatprep.mubr.f32.mxu0 0.0
        %3995 = vmatmul.mubr.f32.gmra.mrb[0].mxu0 %v3775
        %v3996 = vpop.f32.mrb[0].mxu0
        %v3997 = vadd.f32 0.0, %v3996
        %v3998 = vpop.f32.mrb[0].mxu0
        %3999 = vmatprep.mubr.f32.mxu0 0.0
        %4000 = vmatmul.mubr.f32.gmra.mrb[0].mxu0 %v3778
        %v4001 = vpop.f32.mrb[0].mxu0
        %v4002 = vadd.f32 0.0, %v4001
        %v4003 = vpop.f32.mrb[0].mxu0
        %4004 = vdwg.mxu0
        %v4005 = vadd.f32 %v3647, %v3847
        %v4006 = vadd.f32 %v3648, %v3852
        %v4007 = vadd.f32 %v3649, %v3857
        %v4008 = vadd.f32 %v3650, %v3862
        %v4009 = vadd.f32 %v3651, %v3867
        %v4010 = vadd.f32 %v3652, %v3872
        %v4011 = vadd.f32 %v3653, %v3877
        %v4012 = vadd.f32 %v3654, %v3882
        %v4013 = vadd.f32 %v3655, %v3887
        %v4014 = vadd.f32 %v3656, %v3892
        %v4015 = vadd.f32 %v3657, %v3897
        %v4016 = vadd.f32 %v3658, %v3902
        %v4017 = vadd.f32 %v3659, %v3907
        %v4018 = vadd.f32 %v3660, %v3912
        %v4019 = vadd.f32 %v3661, %v3917
        %v4020 = vadd.f32 %v3662, %v3922
        %v4021 = vadd.f32 %v3663, %v3927
        %v4022 = vadd.f32 %v3664, %v3932
        %v4023 = vadd.f32 %v3665, %v3937
        %v4024 = vadd.f32 %v3666, %v3942
        %v4025 = vadd.f32 %v3667, %v3947
        %v4026 = vadd.f32 %v3668, %v3952
        %v4027 = vadd.f32 %v3669, %v3957
        %v4028 = vadd.f32 %v3670, %v3962
        %v4029 = vadd.f32 %v3671, %v3967
        %v4030 = vadd.f32 %v3672, %v3972
        %v4031 = vadd.f32 %v3673, %v3977
        %v4032 = vadd.f32 %v3674, %v3982
        %v4033 = vadd.f32 %v3675, %v3987
        %v4034 = vadd.f32 %v3676, %v3992
        %v4035 = vadd.f32 %v3677, %v3997
        %v4036 = vadd.f32 %v3678, %v4002
        %4037 = vst.msk [vmem:[#allocation3] sm:$0xff] %vm1313, %v4005
        %4038 = vst.msk [vmem:[#allocation3 + $0x8] sm:$0xff] %vm1313, %v4006
        %4039 = vst.msk [vmem:[#allocation3 + $0x10] sm:$0xff] %vm1313, %v4007
        %4040 = vst.msk [vmem:[#allocation3 + $0x18] sm:$0xff] %vm1313, %v4008
        %4041 = vst.msk [vmem:[#allocation3 + $0x20] sm:$0xff] %vm1313, %v4009
        %4042 = vst.msk [vmem:[#allocation3 + $0x28] sm:$0xff] %vm1313, %v4010
        %4043 = vst.msk [vmem:[#allocation3 + $0x30] sm:$0xff] %vm1313, %v4011
        %4044 = vst.msk [vmem:[#allocation3 + $0x38] sm:$0xff] %vm1313, %v4012
        %4045 = vst.msk [vmem:[#allocation3 + $0x40] sm:$0xff] %vm1313, %v4013
        %4046 = vst.msk [vmem:[#allocation3 + $0x48] sm:$0xff] %vm1313, %v4014
        %4047 = vst.msk [vmem:[#allocation3 + $0x50] sm:$0xff] %vm1313, %v4015
        %4048 = vst.msk [vmem:[#allocation3 + $0x58] sm:$0xff] %vm1313, %v4016
        %4049 = vst.msk [vmem:[#allocation3 + $0x60] sm:$0xff] %vm1313, %v4017
        %4050 = vst.msk [vmem:[#allocation3 + $0x68] sm:$0xff] %vm1313, %v4018
        %4051 = vst.msk [vmem:[#allocation3 + $0x70] sm:$0xff] %vm1313, %v4019
        %4052 = vst.msk [vmem:[#allocation3 + $0x78] sm:$0xff] %vm1313, %v4020
        %4053 = vst.msk [vmem:[#allocation3 + $0x80] sm:$0xff] %vm1313, %v4021
        %4054 = vst.msk [vmem:[#allocation3 + $0x88] sm:$0xff] %vm1313, %v4022
        %4055 = vst.msk [vmem:[#allocation3 + $0x90] sm:$0xff] %vm1313, %v4023
        %4056 = vst.msk [vmem:[#allocation3 + $0x98] sm:$0xff] %vm1313, %v4024
        %4057 = vst.msk [vmem:[#allocation3 + $0xa0] sm:$0xff] %vm1313, %v4025
        %4058 = vst.msk [vmem:[#allocation3 + $0xa8] sm:$0xff] %vm1313, %v4026
        %4059 = vst.msk [vmem:[#allocation3 + $0xb0] sm:$0xff] %vm1313, %v4027
        %4060 = vst.msk [vmem:[#allocation3 + $0xb8] sm:$0xff] %vm1313, %v4028
        %4061 = vst.msk [vmem:[#allocation3 + $0xc0] sm:$0xff] %vm1313, %v4029
        %4062 = vst.msk [vmem:[#allocation3 + $0xc8] sm:$0xff] %vm1313, %v4030
        %4063 = vst.msk [vmem:[#allocation3 + $0xd0] sm:$0xff] %vm1313, %v4031
        %4064 = vst.msk [vmem:[#allocation3 + $0xd8] sm:$0xff] %vm1313, %v4032
        %4065 = vst.msk [vmem:[#allocation3 + $0xe0] sm:$0xff] %vm1313, %v4033
        %4066 = vst.msk [vmem:[#allocation3 + $0xe8] sm:$0xff] %vm1313, %v4034
        %4067 = vst.msk [vmem:[#allocation3 + $0xf0] sm:$0xff] %vm1313, %v4035
        %4068 = vst.msk [vmem:[#allocation3 + $0xf8] sm:$0xff] %vm1313, %v4036
        %s4069 = scalar_lea.vmem [#allocation2], 48
        %v4070 = vld [vmem:[%s4069] sm:$0xff]
        %v4071 = vld [vmem:[%s4069 + $0x8] sm:$0xff]
        %v4072 = vld [vmem:[%s4069 + $0x18] sm:$0xff]
        %v4073 = vld [vmem:[%s4069 + $0x20] sm:$0xff]
        %v4074 = vld [vmem:[%s4069 + $0x30] sm:$0xff]
        %v4075 = vld [vmem:[%s4069 + $0x38] sm:$0xff]
        %v4076 = vld [vmem:[%s4069 + $0x48] sm:$0xff]
        %v4077 = vld [vmem:[%s4069 + $0x50] sm:$0xff]
        %v4078 = vld [vmem:[%s4069 + $0x60] sm:$0xff]
        %v4079 = vld [vmem:[%s4069 + $0x68] sm:$0xff]
        %v4080 = vld [vmem:[%s4069 + $0x78] sm:$0xff]
        %v4081 = vld [vmem:[%s4069 + $0x80] sm:$0xff]
        %v4082 = vld [vmem:[%s4069 + $0x90] sm:$0xff]
        %v4083 = vld [vmem:[%s4069 + $0x98] sm:$0xff]
        %v4084 = vld [vmem:[%s4069 + $0xa8] sm:$0xff]
        %v4085 = vld [vmem:[%s4069 + $0xb0] sm:$0xff]
        %v4086 = vld [vmem:[%s4069 + $0xc0] sm:$0xff]
        %v4087 = vld [vmem:[%s4069 + $0xc8] sm:$0xff]
        %v4088 = vld [vmem:[%s4069 + $0xd8] sm:$0xff]
        %v4089 = vld [vmem:[%s4069 + $0xe0] sm:$0xff]
        %v4090 = vld [vmem:[%s4069 + $0xf0] sm:$0xff]
        %v4091 = vld [vmem:[%s4069 + $0xf8] sm:$0xff]
        %v4092 = vld [vmem:[%s4069 + $0x108] sm:$0xff]
        %v4093 = vld [vmem:[%s4069 + $0x110] sm:$0xff]
        %v4094 = vld [vmem:[%s4069 + $0x120] sm:$0xff]
        %v4095 = vld [vmem:[%s4069 + $0x128] sm:$0xff]
        %v4096 = vld [vmem:[%s4069 + $0x138] sm:$0xff]
        %v4097 = vld [vmem:[%s4069 + $0x140] sm:$0xff]
        %v4098 = vld [vmem:[%s4069 + $0x150] sm:$0xff]
        %v4099 = vld [vmem:[%s4069 + $0x158] sm:$0xff]
        %v4100 = vld [vmem:[%s4069 + $0x168] sm:$0xff]
        %v4101 = vld [vmem:[%s4069 + $0x170] sm:$0xff]
        %v4102 = vld [vmem:[#allocation3] sm:$0xff]
        %v4103 = vld [vmem:[#allocation3 + $0x8] sm:$0xff]
        %v4104 = vld [vmem:[#allocation3 + $0x10] sm:$0xff]
        %v4105 = vld [vmem:[#allocation3 + $0x18] sm:$0xff]
        %v4106 = vld [vmem:[#allocation3 + $0x20] sm:$0xff]
        %v4107 = vld [vmem:[#allocation3 + $0x28] sm:$0xff]
        %v4108 = vld [vmem:[#allocation3 + $0x30] sm:$0xff]
        %v4109 = vld [vmem:[#allocation3 + $0x38] sm:$0xff]
        %v4110 = vld [vmem:[#allocation3 + $0x40] sm:$0xff]
        %v4111 = vld [vmem:[#allocation3 + $0x48] sm:$0xff]
        %v4112 = vld [vmem:[#allocation3 + $0x50] sm:$0xff]
        %v4113 = vld [vmem:[#allocation3 + $0x58] sm:$0xff]
        %v4114 = vld [vmem:[#allocation3 + $0x60] sm:$0xff]
        %v4115 = vld [vmem:[#allocation3 + $0x68] sm:$0xff]
        %v4116 = vld [vmem:[#allocation3 + $0x70] sm:$0xff]
        %v4117 = vld [vmem:[#allocation3 + $0x78] sm:$0xff]
        %v4118 = vld [vmem:[#allocation3 + $0x80] sm:$0xff]
        %v4119 = vld [vmem:[#allocation3 + $0x88] sm:$0xff]
        %v4120 = vld [vmem:[#allocation3 + $0x90] sm:$0xff]
        %v4121 = vld [vmem:[#allocation3 + $0x98] sm:$0xff]
        %v4122 = vld [vmem:[#allocation3 + $0xa0] sm:$0xff]
        %v4123 = vld [vmem:[#allocation3 + $0xa8] sm:$0xff]
        %v4124 = vld [vmem:[#allocation3 + $0xb0] sm:$0xff]
        %v4125 = vld [vmem:[#allocation3 + $0xb8] sm:$0xff]
        %v4126 = vld [vmem:[#allocation3 + $0xc0] sm:$0xff]
        %v4127 = vld [vmem:[#allocation3 + $0xc8] sm:$0xff]
        %v4128 = vld [vmem:[#allocation3 + $0xd0] sm:$0xff]
        %v4129 = vld [vmem:[#allocation3 + $0xd8] sm:$0xff]
        %v4130 = vld [vmem:[#allocation3 + $0xe0] sm:$0xff]
        %v4131 = vld [vmem:[#allocation3 + $0xe8] sm:$0xff]
        %v4132 = vld [vmem:[#allocation3 + $0xf0] sm:$0xff]
        %v4133 = vld [vmem:[#allocation3 + $0xf8] sm:$0xff]
        %s4134 = scalar_lea.vmem [#allocation10], 192
        %v4135 = vld [vmem:[%s4134] sm:$0xff]
        %v4136 = vld [vmem:[%s4134 + $0x8] sm:$0xff]
        %v4137 = vld [vmem:[%s4134 + $0x10] sm:$0xff]
        %v4138 = vld [vmem:[%s4134 + $0x18] sm:$0xff]
        %v4140 = vsel %vm373, %v4070, 0
        %v4143 = vsel %vm373, %v4071, 0
        %v4146 = vsel %vm373, %v4072, 0
        %v4149 = vsel %vm373, %v4073, 0
        %v4152 = vsel %vm373, %v4074, 0
        %v4155 = vsel %vm373, %v4075, 0
        %v4158 = vsel %vm373, %v4076, 0
        %v4161 = vsel %vm373, %v4077, 0
        %v4164 = vsel %vm373, %v4078, 0
        %v4167 = vsel %vm373, %v4079, 0
        %v4170 = vsel %vm373, %v4080, 0
        %v4173 = vsel %vm373, %v4081, 0
        %v4176 = vsel %vm373, %v4082, 0
        %v4179 = vsel %vm373, %v4083, 0
        %v4182 = vsel %vm373, %v4084, 0
        %v4185 = vsel %vm373, %v4085, 0
        %v4188 = vsel %vm373, %v4086, 0
        %v4191 = vsel %vm373, %v4087, 0
        %v4194 = vsel %vm373, %v4088, 0
        %v4197 = vsel %vm373, %v4089, 0
        %v4200 = vsel %vm373, %v4090, 0
        %v4203 = vsel %vm373, %v4091, 0
        %v4206 = vsel %vm373, %v4092, 0
        %v4209 = vsel %vm373, %v4093, 0
        %v4212 = vsel %vm373, %v4094, 0
        %v4215 = vsel %vm373, %v4095, 0
        %v4218 = vsel %vm373, %v4096, 0
        %v4221 = vsel %vm373, %v4097, 0
        %v4224 = vsel %vm373, %v4098, 0
        %v4227 = vsel %vm373, %v4099, 0
        %v4230 = vsel %vm373, %v4100, 0
        %v4233 = vsel %vm373, %v4101, 0
        %4235 = vmatprep.subr.mxu0 0.0
        %4236 = vmatpush1.msra.mxu0 %v4135
        %4237 = vmatprep.subr.mxu0 0.0
        %4238 = vmatpush1.msra.mxu0 %v4136
        %4239 = vmatprep.subr.mxu0 0.0
        %4240 = vmatpush1.msra.mxu0 %v4137
        %4241 = vmatprep.subr.mxu0 0.0
        %4242 = vmatpush1.msra.mxu0 %v4138
        %4243 = vmatprep.subr.mxu0 0.0
        %4244 = vmatpush1.msra.mxu0 0.0
        %4245 = vmatprep.subr.mxu0 0.0
        %4246 = vmatpush1.msra.mxu0 0.0
        %4247 = vmatprep.subr.mxu0 0.0
        %4248 = vmatpush1.msra.mxu0 0.0
        %4249 = vmatprep.subr.mxu0 0.0
        %4250 = vmatpush1.msra.mxu0 0.0
        %4251 = vmatprep.subr.mxu0 0.0
        %4252 = vmatpush1.msra.mxu0 0.0
        %4253 = vmatprep.subr.mxu0 0.0
        %4254 = vmatpush1.msra.mxu0 0.0
        %4255 = vmatprep.subr.mxu0 0.0
        %4256 = vmatpush1.msra.mxu0 0.0
        %4257 = vmatprep.subr.mxu0 0.0
        %4258 = vmatpush1.msra.mxu0 0.0
        %4259 = vmatprep.subr.mxu0 0.0
        %4260 = vmatpush1.msra.mxu0 0.0
        %4261 = vmatprep.subr.mxu0 0.0
        %4262 = vmatpush1.msra.mxu0 0.0
        %4263 = vmatprep.subr.mxu0 0.0
        %4264 = vmatpush1.msra.mxu0 0.0
        %4265 = vmatprep.subr.mxu0 0.0
        %4266 = vmatpush1.msra.mxu0 0.0
        %4267 = vmatprep.subr.mxu0 0.0
        %4268 = vmatpush1.msra.mxu0 0.0
        %4269 = vmatprep.subr.mxu0 0.0
        %4270 = vmatpush1.msra.mxu0 0.0
        %4271 = vmatprep.subr.mxu0 0.0
        %4272 = vmatpush1.msra.mxu0 0.0
        %4273 = vmatprep.subr.mxu0 0.0
        %4274 = vmatpush1.msra.mxu0 0.0
        %4275 = vmatprep.subr.mxu0 0.0
        %4276 = vmatpush1.msra.mxu0 0.0
        %4277 = vmatprep.subr.mxu0 0.0
        %4278 = vmatpush1.msra.mxu0 0.0
        %4279 = vmatprep.subr.mxu0 0.0
        %4280 = vmatpush1.msra.mxu0 0.0
        %4281 = vmatprep.subr.mxu0 0.0
        %4282 = vmatpush1.msra.mxu0 0.0
        %4283 = vmatprep.subr.mxu0 0.0
        %4284 = vmatpush1.msra.mxu0 0.0
        %4285 = vmatprep.subr.mxu0 0.0
        %4286 = vmatpush1.msra.mxu0 0.0
        %4287 = vmatprep.subr.mxu0 0.0
        %4288 = vmatpush1.msra.mxu0 0.0
        %4289 = vmatprep.subr.mxu0 0.0
        %4290 = vmatpush1.msra.mxu0 0.0
        %4291 = vmatprep.subr.mxu0 0.0
        %4292 = vmatpush1.msra.mxu0 0.0
        %4293 = vmatprep.subr.mxu0 0.0
        %4294 = vmatpush1.msra.mxu0 0.0
        %4295 = vmatprep.subr.mxu0 0.0
        %4296 = vmatpush1.msra.mxu0 0.0
        %4297 = vmatprep.subr.mxu0 0.0
        %4298 = vmatpush1.msra.mxu0 0.0
        %4299 = vmatprep.mubr.f32.mxu0 0.0
        %4300 = vmatmul.mubr.f32.gmra.mrb[0].mxu0 %v4140
        %v4301 = vpop.f32.mrb[0].mxu0
        %v4302 = vadd.f32 0.0, %v4301
        %v4303 = vpop.f32.mrb[0].mxu0
        %4304 = vmatprep.mubr.f32.mxu0 0.0
        %4305 = vmatmul.mubr.f32.gmra.mrb[0].mxu0 %v4143
        %v4306 = vpop.f32.mrb[0].mxu0
        %v4307 = vadd.f32 0.0, %v4306
        %v4308 = vpop.f32.mrb[0].mxu0
        %4309 = vmatprep.mubr.f32.mxu0 0.0
        %4310 = vmatmul.mubr.f32.gmra.mrb[0].mxu0 %v4146
        %v4311 = vpop.f32.mrb[0].mxu0
        %v4312 = vadd.f32 0.0, %v4311
        %v4313 = vpop.f32.mrb[0].mxu0
        %4314 = vmatprep.mubr.f32.mxu0 0.0
        %4315 = vmatmul.mubr.f32.gmra.mrb[0].mxu0 %v4149
        %v4316 = vpop.f32.mrb[0].mxu0
        %v4317 = vadd.f32 0.0, %v4316
        %v4318 = vpop.f32.mrb[0].mxu0
        %4319 = vmatprep.mubr.f32.mxu0 0.0
        %4320 = vmatmul.mubr.f32.gmra.mrb[0].mxu0 %v4152
        %v4321 = vpop.f32.mrb[0].mxu0
        %v4322 = vadd.f32 0.0, %v4321
        %v4323 = vpop.f32.mrb[0].mxu0
        %4324 = vmatprep.mubr.f32.mxu0 0.0
        %4325 = vmatmul.mubr.f32.gmra.mrb[0].mxu0 %v4155
        %v4326 = vpop.f32.mrb[0].mxu0
        %v4327 = vadd.f32 0.0, %v4326
        %v4328 = vpop.f32.mrb[0].mxu0
        %4329 = vmatprep.mubr.f32.mxu0 0.0
        %4330 = vmatmul.mubr.f32.gmra.mrb[0].mxu0 %v4158
        %v4331 = vpop.f32.mrb[0].mxu0
        %v4332 = vadd.f32 0.0, %v4331
        %v4333 = vpop.f32.mrb[0].mxu0
        %4334 = vmatprep.mubr.f32.mxu0 0.0
        %4335 = vmatmul.mubr.f32.gmra.mrb[0].mxu0 %v4161
        %v4336 = vpop.f32.mrb[0].mxu0
        %v4337 = vadd.f32 0.0, %v4336
        %v4338 = vpop.f32.mrb[0].mxu0
        %4339 = vmatprep.mubr.f32.mxu0 0.0
        %4340 = vmatmul.mubr.f32.gmra.mrb[0].mxu0 %v4164
        %v4341 = vpop.f32.mrb[0].mxu0
        %v4342 = vadd.f32 0.0, %v4341
        %v4343 = vpop.f32.mrb[0].mxu0
        %4344 = vmatprep.mubr.f32.mxu0 0.0
        %4345 = vmatmul.mubr.f32.gmra.mrb[0].mxu0 %v4167
        %v4346 = vpop.f32.mrb[0].mxu0
        %v4347 = vadd.f32 0.0, %v4346
        %v4348 = vpop.f32.mrb[0].mxu0
        %4349 = vmatprep.mubr.f32.mxu0 0.0
        %4350 = vmatmul.mubr.f32.gmra.mrb[0].mxu0 %v4170
        %v4351 = vpop.f32.mrb[0].mxu0
        %v4352 = vadd.f32 0.0, %v4351
        %v4353 = vpop.f32.mrb[0].mxu0
        %4354 = vmatprep.mubr.f32.mxu0 0.0
        %4355 = vmatmul.mubr.f32.gmra.mrb[0].mxu0 %v4173
        %v4356 = vpop.f32.mrb[0].mxu0
        %v4357 = vadd.f32 0.0, %v4356
        %v4358 = vpop.f32.mrb[0].mxu0
        %4359 = vmatprep.mubr.f32.mxu0 0.0
        %4360 = vmatmul.mubr.f32.gmra.mrb[0].mxu0 %v4176
        %v4361 = vpop.f32.mrb[0].mxu0
        %v4362 = vadd.f32 0.0, %v4361
        %v4363 = vpop.f32.mrb[0].mxu0
        %4364 = vmatprep.mubr.f32.mxu0 0.0
        %4365 = vmatmul.mubr.f32.gmra.mrb[0].mxu0 %v4179
        %v4366 = vpop.f32.mrb[0].mxu0
        %v4367 = vadd.f32 0.0, %v4366
        %v4368 = vpop.f32.mrb[0].mxu0
        %4369 = vmatprep.mubr.f32.mxu0 0.0
        %4370 = vmatmul.mubr.f32.gmra.mrb[0].mxu0 %v4182
        %v4371 = vpop.f32.mrb[0].mxu0
        %v4372 = vadd.f32 0.0, %v4371
        %v4373 = vpop.f32.mrb[0].mxu0
        %4374 = vmatprep.mubr.f32.mxu0 0.0
        %4375 = vmatmul.mubr.f32.gmra.mrb[0].mxu0 %v4185
        %v4376 = vpop.f32.mrb[0].mxu0
        %v4377 = vadd.f32 0.0, %v4376
        %v4378 = vpop.f32.mrb[0].mxu0
        %4379 = vmatprep.mubr.f32.mxu0 0.0
        %4380 = vmatmul.mubr.f32.gmra.mrb[0].mxu0 %v4188
        %v4381 = vpop.f32.mrb[0].mxu0
        %v4382 = vadd.f32 0.0, %v4381
        %v4383 = vpop.f32.mrb[0].mxu0
        %4384 = vmatprep.mubr.f32.mxu0 0.0
        %4385 = vmatmul.mubr.f32.gmra.mrb[0].mxu0 %v4191
        %v4386 = vpop.f32.mrb[0].mxu0
        %v4387 = vadd.f32 0.0, %v4386
        %v4388 = vpop.f32.mrb[0].mxu0
        %4389 = vmatprep.mubr.f32.mxu0 0.0
        %4390 = vmatmul.mubr.f32.gmra.mrb[0].mxu0 %v4194
        %v4391 = vpop.f32.mrb[0].mxu0
        %v4392 = vadd.f32 0.0, %v4391
        %v4393 = vpop.f32.mrb[0].mxu0
        %4394 = vmatprep.mubr.f32.mxu0 0.0
        %4395 = vmatmul.mubr.f32.gmra.mrb[0].mxu0 %v4197
        %v4396 = vpop.f32.mrb[0].mxu0
        %v4397 = vadd.f32 0.0, %v4396
        %v4398 = vpop.f32.mrb[0].mxu0
        %4399 = vmatprep.mubr.f32.mxu0 0.0
        %4400 = vmatmul.mubr.f32.gmra.mrb[0].mxu0 %v4200
        %v4401 = vpop.f32.mrb[0].mxu0
        %v4402 = vadd.f32 0.0, %v4401
        %v4403 = vpop.f32.mrb[0].mxu0
        %4404 = vmatprep.mubr.f32.mxu0 0.0
        %4405 = vmatmul.mubr.f32.gmra.mrb[0].mxu0 %v4203
        %v4406 = vpop.f32.mrb[0].mxu0
        %v4407 = vadd.f32 0.0, %v4406
        %v4408 = vpop.f32.mrb[0].mxu0
        %4409 = vmatprep.mubr.f32.mxu0 0.0
        %4410 = vmatmul.mubr.f32.gmra.mrb[0].mxu0 %v4206
        %v4411 = vpop.f32.mrb[0].mxu0
        %v4412 = vadd.f32 0.0, %v4411
        %v4413 = vpop.f32.mrb[0].mxu0
        %4414 = vmatprep.mubr.f32.mxu0 0.0
        %4415 = vmatmul.mubr.f32.gmra.mrb[0].mxu0 %v4209
        %v4416 = vpop.f32.mrb[0].mxu0
        %v4417 = vadd.f32 0.0, %v4416
        %v4418 = vpop.f32.mrb[0].mxu0
        %4419 = vmatprep.mubr.f32.mxu0 0.0
        %4420 = vmatmul.mubr.f32.gmra.mrb[0].mxu0 %v4212
        %v4421 = vpop.f32.mrb[0].mxu0
        %v4422 = vadd.f32 0.0, %v4421
        %v4423 = vpop.f32.mrb[0].mxu0
        %4424 = vmatprep.mubr.f32.mxu0 0.0
        %4425 = vmatmul.mubr.f32.gmra.mrb[0].mxu0 %v4215
        %v4426 = vpop.f32.mrb[0].mxu0
        %v4427 = vadd.f32 0.0, %v4426
        %v4428 = vpop.f32.mrb[0].mxu0
        %4429 = vmatprep.mubr.f32.mxu0 0.0
        %4430 = vmatmul.mubr.f32.gmra.mrb[0].mxu0 %v4218
        %v4431 = vpop.f32.mrb[0].mxu0
        %v4432 = vadd.f32 0.0, %v4431
        %v4433 = vpop.f32.mrb[0].mxu0
        %4434 = vmatprep.mubr.f32.mxu0 0.0
        %4435 = vmatmul.mubr.f32.gmra.mrb[0].mxu0 %v4221
        %v4436 = vpop.f32.mrb[0].mxu0
        %v4437 = vadd.f32 0.0, %v4436
        %v4438 = vpop.f32.mrb[0].mxu0
        %4439 = vmatprep.mubr.f32.mxu0 0.0
        %4440 = vmatmul.mubr.f32.gmra.mrb[0].mxu0 %v4224
        %v4441 = vpop.f32.mrb[0].mxu0
        %v4442 = vadd.f32 0.0, %v4441
        %v4443 = vpop.f32.mrb[0].mxu0
        %4444 = vmatprep.mubr.f32.mxu0 0.0
        %4445 = vmatmul.mubr.f32.gmra.mrb[0].mxu0 %v4227
        %v4446 = vpop.f32.mrb[0].mxu0
        %v4447 = vadd.f32 0.0, %v4446
        %v4448 = vpop.f32.mrb[0].mxu0
        %4449 = vmatprep.mubr.f32.mxu0 0.0
        %4450 = vmatmul.mubr.f32.gmra.mrb[0].mxu0 %v4230
        %v4451 = vpop.f32.mrb[0].mxu0
        %v4452 = vadd.f32 0.0, %v4451
        %v4453 = vpop.f32.mrb[0].mxu0
        %4454 = vmatprep.mubr.f32.mxu0 0.0
        %4455 = vmatmul.mubr.f32.gmra.mrb[0].mxu0 %v4233
        %v4456 = vpop.f32.mrb[0].mxu0
        %v4457 = vadd.f32 0.0, %v4456
        %v4458 = vpop.f32.mrb[0].mxu0
        %4459 = vdwg.mxu0
        %v4460 = vadd.f32 %v4102, %v4302
        %v4461 = vadd.f32 %v4103, %v4307
        %v4462 = vadd.f32 %v4104, %v4312
        %v4463 = vadd.f32 %v4105, %v4317
        %v4464 = vadd.f32 %v4106, %v4322
        %v4465 = vadd.f32 %v4107, %v4327
        %v4466 = vadd.f32 %v4108, %v4332
        %v4467 = vadd.f32 %v4109, %v4337
        %v4468 = vadd.f32 %v4110, %v4342
        %v4469 = vadd.f32 %v4111, %v4347
        %v4470 = vadd.f32 %v4112, %v4352
        %v4471 = vadd.f32 %v4113, %v4357
        %v4472 = vadd.f32 %v4114, %v4362
        %v4473 = vadd.f32 %v4115, %v4367
        %v4474 = vadd.f32 %v4116, %v4372
        %v4475 = vadd.f32 %v4117, %v4377
        %v4476 = vadd.f32 %v4118, %v4382
        %v4477 = vadd.f32 %v4119, %v4387
        %v4478 = vadd.f32 %v4120, %v4392
        %v4479 = vadd.f32 %v4121, %v4397
        %v4480 = vadd.f32 %v4122, %v4402
        %v4481 = vadd.f32 %v4123, %v4407
        %v4482 = vadd.f32 %v4124, %v4412
        %v4483 = vadd.f32 %v4125, %v4417
        %v4484 = vadd.f32 %v4126, %v4422
        %v4485 = vadd.f32 %v4127, %v4427
        %v4486 = vadd.f32 %v4128, %v4432
        %v4487 = vadd.f32 %v4129, %v4437
        %v4488 = vadd.f32 %v4130, %v4442
        %v4489 = vadd.f32 %v4131, %v4447
        %v4490 = vadd.f32 %v4132, %v4452
        %v4491 = vadd.f32 %v4133, %v4457
        %4492 = vst.msk [vmem:[#allocation3] sm:$0xff] %vm1313, %v4460
        %4493 = vst.msk [vmem:[#allocation3 + $0x8] sm:$0xff] %vm1313, %v4461
        %4494 = vst.msk [vmem:[#allocation3 + $0x10] sm:$0xff] %vm1313, %v4462
        %4495 = vst.msk [vmem:[#allocation3 + $0x18] sm:$0xff] %vm1313, %v4463
        %4496 = vst.msk [vmem:[#allocation3 + $0x20] sm:$0xff] %vm1313, %v4464
        %4497 = vst.msk [vmem:[#allocation3 + $0x28] sm:$0xff] %vm1313, %v4465
        %4498 = vst.msk [vmem:[#allocation3 + $0x30] sm:$0xff] %vm1313, %v4466
        %4499 = vst.msk [vmem:[#allocation3 + $0x38] sm:$0xff] %vm1313, %v4467
        %4500 = vst.msk [vmem:[#allocation3 + $0x40] sm:$0xff] %vm1313, %v4468
        %4501 = vst.msk [vmem:[#allocation3 + $0x48] sm:$0xff] %vm1313, %v4469
        %4502 = vst.msk [vmem:[#allocation3 + $0x50] sm:$0xff] %vm1313, %v4470
        %4503 = vst.msk [vmem:[#allocation3 + $0x58] sm:$0xff] %vm1313, %v4471
        %4504 = vst.msk [vmem:[#allocation3 + $0x60] sm:$0xff] %vm1313, %v4472
        %4505 = vst.msk [vmem:[#allocation3 + $0x68] sm:$0xff] %vm1313, %v4473
        %4506 = vst.msk [vmem:[#allocation3 + $0x70] sm:$0xff] %vm1313, %v4474
        %4507 = vst.msk [vmem:[#allocation3 + $0x78] sm:$0xff] %vm1313, %v4475
        %4508 = vst.msk [vmem:[#allocation3 + $0x80] sm:$0xff] %vm1313, %v4476
        %4509 = vst.msk [vmem:[#allocation3 + $0x88] sm:$0xff] %vm1313, %v4477
        %4510 = vst.msk [vmem:[#allocation3 + $0x90] sm:$0xff] %vm1313, %v4478
        %4511 = vst.msk [vmem:[#allocation3 + $0x98] sm:$0xff] %vm1313, %v4479
        %4512 = vst.msk [vmem:[#allocation3 + $0xa0] sm:$0xff] %vm1313, %v4480
        %4513 = vst.msk [vmem:[#allocation3 + $0xa8] sm:$0xff] %vm1313, %v4481
        %4514 = vst.msk [vmem:[#allocation3 + $0xb0] sm:$0xff] %vm1313, %v4482
        %4515 = vst.msk [vmem:[#allocation3 + $0xb8] sm:$0xff] %vm1313, %v4483
        %4516 = vst.msk [vmem:[#allocation3 + $0xc0] sm:$0xff] %vm1313, %v4484
        %4517 = vst.msk [vmem:[#allocation3 + $0xc8] sm:$0xff] %vm1313, %v4485
        %4518 = vst.msk [vmem:[#allocation3 + $0xd0] sm:$0xff] %vm1313, %v4486
        %4519 = vst.msk [vmem:[#allocation3 + $0xd8] sm:$0xff] %vm1313, %v4487
        %4520 = vst.msk [vmem:[#allocation3 + $0xe0] sm:$0xff] %vm1313, %v4488
        %4521 = vst.msk [vmem:[#allocation3 + $0xe8] sm:$0xff] %vm1313, %v4489
        %4522 = vst.msk [vmem:[#allocation3 + $0xf0] sm:$0xff] %vm1313, %v4490
        %4523 = vst.msk [vmem:[#allocation3 + $0xf8] sm:$0xff] %vm1313, %v4491
        %v4524 = vld [vmem:[%s4069 + $0x1] sm:$0xff]
        %v4525 = vld [vmem:[%s4069 + $0x9] sm:$0xff]
        %v4526 = vld [vmem:[%s4069 + $0x19] sm:$0xff]
        %v4527 = vld [vmem:[%s4069 + $0x21] sm:$0xff]
        %v4528 = vld [vmem:[%s4069 + $0x31] sm:$0xff]
        %v4529 = vld [vmem:[%s4069 + $0x39] sm:$0xff]
        %v4530 = vld [vmem:[%s4069 + $0x49] sm:$0xff]
        %v4531 = vld [vmem:[%s4069 + $0x51] sm:$0xff]
        %v4532 = vld [vmem:[%s4069 + $0x61] sm:$0xff]
        %v4533 = vld [vmem:[%s4069 + $0x69] sm:$0xff]
        %v4534 = vld [vmem:[%s4069 + $0x79] sm:$0xff]
        %v4535 = vld [vmem:[%s4069 + $0x81] sm:$0xff]
        %v4536 = vld [vmem:[%s4069 + $0x91] sm:$0xff]
        %v4537 = vld [vmem:[%s4069 + $0x99] sm:$0xff]
        %v4538 = vld [vmem:[%s4069 + $0xa9] sm:$0xff]
        %v4539 = vld [vmem:[%s4069 + $0xb1] sm:$0xff]
        %v4540 = vld [vmem:[%s4069 + $0xc1] sm:$0xff]
        %v4541 = vld [vmem:[%s4069 + $0xc9] sm:$0xff]
        %v4542 = vld [vmem:[%s4069 + $0xd9] sm:$0xff]
        %v4543 = vld [vmem:[%s4069 + $0xe1] sm:$0xff]
        %v4544 = vld [vmem:[%s4069 + $0xf1] sm:$0xff]
        %v4545 = vld [vmem:[%s4069 + $0xf9] sm:$0xff]
        %v4546 = vld [vmem:[%s4069 + $0x109] sm:$0xff]
        %v4547 = vld [vmem:[%s4069 + $0x111] sm:$0xff]
        %v4548 = vld [vmem:[%s4069 + $0x121] sm:$0xff]
        %v4549 = vld [vmem:[%s4069 + $0x129] sm:$0xff]
        %v4550 = vld [vmem:[%s4069 + $0x139] sm:$0xff]
        %v4551 = vld [vmem:[%s4069 + $0x141] sm:$0xff]
        %v4552 = vld [vmem:[%s4069 + $0x151] sm:$0xff]
        %v4553 = vld [vmem:[%s4069 + $0x159] sm:$0xff]
        %v4554 = vld [vmem:[%s4069 + $0x169] sm:$0xff]
        %v4555 = vld [vmem:[%s4069 + $0x171] sm:$0xff]
        %v4556 = vld [vmem:[#allocation3] sm:$0xff]
        %v4557 = vld [vmem:[#allocation3 + $0x8] sm:$0xff]
        %v4558 = vld [vmem:[#allocation3 + $0x10] sm:$0xff]
        %v4559 = vld [vmem:[#allocation3 + $0x18] sm:$0xff]
        %v4560 = vld [vmem:[#allocation3 + $0x20] sm:$0xff]
        %v4561 = vld [vmem:[#allocation3 + $0x28] sm:$0xff]
        %v4562 = vld [vmem:[#allocation3 + $0x30] sm:$0xff]
        %v4563 = vld [vmem:[#allocation3 + $0x38] sm:$0xff]
        %v4564 = vld [vmem:[#allocation3 + $0x40] sm:$0xff]
        %v4565 = vld [vmem:[#allocation3 + $0x48] sm:$0xff]
        %v4566 = vld [vmem:[#allocation3 + $0x50] sm:$0xff]
        %v4567 = vld [vmem:[#allocation3 + $0x58] sm:$0xff]
        %v4568 = vld [vmem:[#allocation3 + $0x60] sm:$0xff]
        %v4569 = vld [vmem:[#allocation3 + $0x68] sm:$0xff]
        %v4570 = vld [vmem:[#allocation3 + $0x70] sm:$0xff]
        %v4571 = vld [vmem:[#allocation3 + $0x78] sm:$0xff]
        %v4572 = vld [vmem:[#allocation3 + $0x80] sm:$0xff]
        %v4573 = vld [vmem:[#allocation3 + $0x88] sm:$0xff]
        %v4574 = vld [vmem:[#allocation3 + $0x90] sm:$0xff]
        %v4575 = vld [vmem:[#allocation3 + $0x98] sm:$0xff]
        %v4576 = vld [vmem:[#allocation3 + $0xa0] sm:$0xff]
        %v4577 = vld [vmem:[#allocation3 + $0xa8] sm:$0xff]
        %v4578 = vld [vmem:[#allocation3 + $0xb0] sm:$0xff]
        %v4579 = vld [vmem:[#allocation3 + $0xb8] sm:$0xff]
        %v4580 = vld [vmem:[#allocation3 + $0xc0] sm:$0xff]
        %v4581 = vld [vmem:[#allocation3 + $0xc8] sm:$0xff]
        %v4582 = vld [vmem:[#allocation3 + $0xd0] sm:$0xff]
        %v4583 = vld [vmem:[#allocation3 + $0xd8] sm:$0xff]
        %v4584 = vld [vmem:[#allocation3 + $0xe0] sm:$0xff]
        %v4585 = vld [vmem:[#allocation3 + $0xe8] sm:$0xff]
        %v4586 = vld [vmem:[#allocation3 + $0xf0] sm:$0xff]
        %v4587 = vld [vmem:[#allocation3 + $0xf8] sm:$0xff]
        %s4588 = scalar_lea.vmem [#allocation10], 224
        %v4589 = vld [vmem:[%s4588] sm:$0xff]
        %v4590 = vld [vmem:[%s4588 + $0x8] sm:$0xff]
        %v4591 = vld [vmem:[%s4588 + $0x10] sm:$0xff]
        %v4592 = vld [vmem:[%s4588 + $0x18] sm:$0xff]
        %v4594 = vsel %vm373, %v4524, 0
        %v4597 = vsel %vm373, %v4525, 0
        %v4600 = vsel %vm373, %v4526, 0
        %v4603 = vsel %vm373, %v4527, 0
        %v4606 = vsel %vm373, %v4528, 0
        %v4609 = vsel %vm373, %v4529, 0
        %v4612 = vsel %vm373, %v4530, 0
        %v4615 = vsel %vm373, %v4531, 0
        %v4618 = vsel %vm373, %v4532, 0
        %v4621 = vsel %vm373, %v4533, 0
        %v4624 = vsel %vm373, %v4534, 0
        %v4627 = vsel %vm373, %v4535, 0
        %v4630 = vsel %vm373, %v4536, 0
        %v4633 = vsel %vm373, %v4537, 0
        %v4636 = vsel %vm373, %v4538, 0
        %v4639 = vsel %vm373, %v4539, 0
        %v4642 = vsel %vm373, %v4540, 0
        %v4645 = vsel %vm373, %v4541, 0
        %v4648 = vsel %vm373, %v4542, 0
        %v4651 = vsel %vm373, %v4543, 0
        %v4654 = vsel %vm373, %v4544, 0
        %v4657 = vsel %vm373, %v4545, 0
        %v4660 = vsel %vm373, %v4546, 0
        %v4663 = vsel %vm373, %v4547, 0
        %v4666 = vsel %vm373, %v4548, 0
        %v4669 = vsel %vm373, %v4549, 0
        %v4672 = vsel %vm373, %v4550, 0
        %v4675 = vsel %vm373, %v4551, 0
        %v4678 = vsel %vm373, %v4552, 0
        %v4681 = vsel %vm373, %v4553, 0
        %v4684 = vsel %vm373, %v4554, 0
        %v4687 = vsel %vm373, %v4555, 0
        %4689 = vmatprep.subr.mxu0 0.0
        %4690 = vmatpush1.msra.mxu0 %v4589
        %4691 = vmatprep.subr.mxu0 0.0
        %4692 = vmatpush1.msra.mxu0 %v4590
        %4693 = vmatprep.subr.mxu0 0.0
        %4694 = vmatpush1.msra.mxu0 %v4591
        %4695 = vmatprep.subr.mxu0 0.0
        %4696 = vmatpush1.msra.mxu0 %v4592
        %4697 = vmatprep.subr.mxu0 0.0
        %4698 = vmatpush1.msra.mxu0 0.0
        %4699 = vmatprep.subr.mxu0 0.0
        %4700 = vmatpush1.msra.mxu0 0.0
        %4701 = vmatprep.subr.mxu0 0.0
        %4702 = vmatpush1.msra.mxu0 0.0
        %4703 = vmatprep.subr.mxu0 0.0
        %4704 = vmatpush1.msra.mxu0 0.0
        %4705 = vmatprep.subr.mxu0 0.0
        %4706 = vmatpush1.msra.mxu0 0.0
        %4707 = vmatprep.subr.mxu0 0.0
        %4708 = vmatpush1.msra.mxu0 0.0
        %4709 = vmatprep.subr.mxu0 0.0
        %4710 = vmatpush1.msra.mxu0 0.0
        %4711 = vmatprep.subr.mxu0 0.0
        %4712 = vmatpush1.msra.mxu0 0.0
        %4713 = vmatprep.subr.mxu0 0.0
        %4714 = vmatpush1.msra.mxu0 0.0
        %4715 = vmatprep.subr.mxu0 0.0
        %4716 = vmatpush1.msra.mxu0 0.0
        %4717 = vmatprep.subr.mxu0 0.0
        %4718 = vmatpush1.msra.mxu0 0.0
        %4719 = vmatprep.subr.mxu0 0.0
        %4720 = vmatpush1.msra.mxu0 0.0
        %4721 = vmatprep.subr.mxu0 0.0
        %4722 = vmatpush1.msra.mxu0 0.0
        %4723 = vmatprep.subr.mxu0 0.0
        %4724 = vmatpush1.msra.mxu0 0.0
        %4725 = vmatprep.subr.mxu0 0.0
        %4726 = vmatpush1.msra.mxu0 0.0
        %4727 = vmatprep.subr.mxu0 0.0
        %4728 = vmatpush1.msra.mxu0 0.0
        %4729 = vmatprep.subr.mxu0 0.0
        %4730 = vmatpush1.msra.mxu0 0.0
        %4731 = vmatprep.subr.mxu0 0.0
        %4732 = vmatpush1.msra.mxu0 0.0
        %4733 = vmatprep.subr.mxu0 0.0
        %4734 = vmatpush1.msra.mxu0 0.0
        %4735 = vmatprep.subr.mxu0 0.0
        %4736 = vmatpush1.msra.mxu0 0.0
        %4737 = vmatprep.subr.mxu0 0.0
        %4738 = vmatpush1.msra.mxu0 0.0
        %4739 = vmatprep.subr.mxu0 0.0
        %4740 = vmatpush1.msra.mxu0 0.0
        %4741 = vmatprep.subr.mxu0 0.0
        %4742 = vmatpush1.msra.mxu0 0.0
        %4743 = vmatprep.subr.mxu0 0.0
        %4744 = vmatpush1.msra.mxu0 0.0
        %4745 = vmatprep.subr.mxu0 0.0
        %4746 = vmatpush1.msra.mxu0 0.0
        %4747 = vmatprep.subr.mxu0 0.0
        %4748 = vmatpush1.msra.mxu0 0.0
        %4749 = vmatprep.subr.mxu0 0.0
        %4750 = vmatpush1.msra.mxu0 0.0
        %4751 = vmatprep.subr.mxu0 0.0
        %4752 = vmatpush1.msra.mxu0 0.0
        %4753 = vmatprep.mubr.f32.mxu0 0.0
        %4754 = vmatmul.mubr.f32.gmra.mrb[0].mxu0 %v4594
        %v4755 = vpop.f32.mrb[0].mxu0
        %v4756 = vadd.f32 0.0, %v4755
        %v4757 = vpop.f32.mrb[0].mxu0
        %4758 = vmatprep.mubr.f32.mxu0 0.0
        %4759 = vmatmul.mubr.f32.gmra.mrb[0].mxu0 %v4597
        %v4760 = vpop.f32.mrb[0].mxu0
        %v4761 = vadd.f32 0.0, %v4760
        %v4762 = vpop.f32.mrb[0].mxu0
        %4763 = vmatprep.mubr.f32.mxu0 0.0
        %4764 = vmatmul.mubr.f32.gmra.mrb[0].mxu0 %v4600
        %v4765 = vpop.f32.mrb[0].mxu0
        %v4766 = vadd.f32 0.0, %v4765
        %v4767 = vpop.f32.mrb[0].mxu0
        %4768 = vmatprep.mubr.f32.mxu0 0.0
        %4769 = vmatmul.mubr.f32.gmra.mrb[0].mxu0 %v4603
        %v4770 = vpop.f32.mrb[0].mxu0
        %v4771 = vadd.f32 0.0, %v4770
        %v4772 = vpop.f32.mrb[0].mxu0
        %4773 = vmatprep.mubr.f32.mxu0 0.0
        %4774 = vmatmul.mubr.f32.gmra.mrb[0].mxu0 %v4606
        %v4775 = vpop.f32.mrb[0].mxu0
        %v4776 = vadd.f32 0.0, %v4775
        %v4777 = vpop.f32.mrb[0].mxu0
        %4778 = vmatprep.mubr.f32.mxu0 0.0
        %4779 = vmatmul.mubr.f32.gmra.mrb[0].mxu0 %v4609
        %v4780 = vpop.f32.mrb[0].mxu0
        %v4781 = vadd.f32 0.0, %v4780
        %v4782 = vpop.f32.mrb[0].mxu0
        %4783 = vmatprep.mubr.f32.mxu0 0.0
        %4784 = vmatmul.mubr.f32.gmra.mrb[0].mxu0 %v4612
        %v4785 = vpop.f32.mrb[0].mxu0
        %v4786 = vadd.f32 0.0, %v4785
        %v4787 = vpop.f32.mrb[0].mxu0
        %4788 = vmatprep.mubr.f32.mxu0 0.0
        %4789 = vmatmul.mubr.f32.gmra.mrb[0].mxu0 %v4615
        %v4790 = vpop.f32.mrb[0].mxu0
        %v4791 = vadd.f32 0.0, %v4790
        %v4792 = vpop.f32.mrb[0].mxu0
        %4793 = vmatprep.mubr.f32.mxu0 0.0
        %4794 = vmatmul.mubr.f32.gmra.mrb[0].mxu0 %v4618
        %v4795 = vpop.f32.mrb[0].mxu0
        %v4796 = vadd.f32 0.0, %v4795
        %v4797 = vpop.f32.mrb[0].mxu0
        %4798 = vmatprep.mubr.f32.mxu0 0.0
        %4799 = vmatmul.mubr.f32.gmra.mrb[0].mxu0 %v4621
        %v4800 = vpop.f32.mrb[0].mxu0
        %v4801 = vadd.f32 0.0, %v4800
        %v4802 = vpop.f32.mrb[0].mxu0
        %4803 = vmatprep.mubr.f32.mxu0 0.0
        %4804 = vmatmul.mubr.f32.gmra.mrb[0].mxu0 %v4624
        %v4805 = vpop.f32.mrb[0].mxu0
        %v4806 = vadd.f32 0.0, %v4805
        %v4807 = vpop.f32.mrb[0].mxu0
        %4808 = vmatprep.mubr.f32.mxu0 0.0
        %4809 = vmatmul.mubr.f32.gmra.mrb[0].mxu0 %v4627
        %v4810 = vpop.f32.mrb[0].mxu0
        %v4811 = vadd.f32 0.0, %v4810
        %v4812 = vpop.f32.mrb[0].mxu0
        %4813 = vmatprep.mubr.f32.mxu0 0.0
        %4814 = vmatmul.mubr.f32.gmra.mrb[0].mxu0 %v4630
        %v4815 = vpop.f32.mrb[0].mxu0
        %v4816 = vadd.f32 0.0, %v4815
        %v4817 = vpop.f32.mrb[0].mxu0
        %4818 = vmatprep.mubr.f32.mxu0 0.0
        %4819 = vmatmul.mubr.f32.gmra.mrb[0].mxu0 %v4633
        %v4820 = vpop.f32.mrb[0].mxu0
        %v4821 = vadd.f32 0.0, %v4820
        %v4822 = vpop.f32.mrb[0].mxu0
        %4823 = vmatprep.mubr.f32.mxu0 0.0
        %4824 = vmatmul.mubr.f32.gmra.mrb[0].mxu0 %v4636
        %v4825 = vpop.f32.mrb[0].mxu0
        %v4826 = vadd.f32 0.0, %v4825
        %v4827 = vpop.f32.mrb[0].mxu0
        %4828 = vmatprep.mubr.f32.mxu0 0.0
        %4829 = vmatmul.mubr.f32.gmra.mrb[0].mxu0 %v4639
        %v4830 = vpop.f32.mrb[0].mxu0
        %v4831 = vadd.f32 0.0, %v4830
        %v4832 = vpop.f32.mrb[0].mxu0
        %4833 = vmatprep.mubr.f32.mxu0 0.0
        %4834 = vmatmul.mubr.f32.gmra.mrb[0].mxu0 %v4642
        %v4835 = vpop.f32.mrb[0].mxu0
        %v4836 = vadd.f32 0.0, %v4835
        %v4837 = vpop.f32.mrb[0].mxu0
        %4838 = vmatprep.mubr.f32.mxu0 0.0
        %4839 = vmatmul.mubr.f32.gmra.mrb[0].mxu0 %v4645
        %v4840 = vpop.f32.mrb[0].mxu0
        %v4841 = vadd.f32 0.0, %v4840
        %v4842 = vpop.f32.mrb[0].mxu0
        %4843 = vmatprep.mubr.f32.mxu0 0.0
        %4844 = vmatmul.mubr.f32.gmra.mrb[0].mxu0 %v4648
        %v4845 = vpop.f32.mrb[0].mxu0
        %v4846 = vadd.f32 0.0, %v4845
        %v4847 = vpop.f32.mrb[0].mxu0
        %4848 = vmatprep.mubr.f32.mxu0 0.0
        %4849 = vmatmul.mubr.f32.gmra.mrb[0].mxu0 %v4651
        %v4850 = vpop.f32.mrb[0].mxu0
        %v4851 = vadd.f32 0.0, %v4850
        %v4852 = vpop.f32.mrb[0].mxu0
        %4853 = vmatprep.mubr.f32.mxu0 0.0
        %4854 = vmatmul.mubr.f32.gmra.mrb[0].mxu0 %v4654
        %v4855 = vpop.f32.mrb[0].mxu0
        %v4856 = vadd.f32 0.0, %v4855
        %v4857 = vpop.f32.mrb[0].mxu0
        %4858 = vmatprep.mubr.f32.mxu0 0.0
        %4859 = vmatmul.mubr.f32.gmra.mrb[0].mxu0 %v4657
        %v4860 = vpop.f32.mrb[0].mxu0
        %v4861 = vadd.f32 0.0, %v4860
        %v4862 = vpop.f32.mrb[0].mxu0
        %4863 = vmatprep.mubr.f32.mxu0 0.0
        %4864 = vmatmul.mubr.f32.gmra.mrb[0].mxu0 %v4660
        %v4865 = vpop.f32.mrb[0].mxu0
        %v4866 = vadd.f32 0.0, %v4865
        %v4867 = vpop.f32.mrb[0].mxu0
        %4868 = vmatprep.mubr.f32.mxu0 0.0
        %4869 = vmatmul.mubr.f32.gmra.mrb[0].mxu0 %v4663
        %v4870 = vpop.f32.mrb[0].mxu0
        %v4871 = vadd.f32 0.0, %v4870
        %v4872 = vpop.f32.mrb[0].mxu0
        %4873 = vmatprep.mubr.f32.mxu0 0.0
        %4874 = vmatmul.mubr.f32.gmra.mrb[0].mxu0 %v4666
        %v4875 = vpop.f32.mrb[0].mxu0
        %v4876 = vadd.f32 0.0, %v4875
        %v4877 = vpop.f32.mrb[0].mxu0
        %4878 = vmatprep.mubr.f32.mxu0 0.0
        %4879 = vmatmul.mubr.f32.gmra.mrb[0].mxu0 %v4669
        %v4880 = vpop.f32.mrb[0].mxu0
        %v4881 = vadd.f32 0.0, %v4880
        %v4882 = vpop.f32.mrb[0].mxu0
        %4883 = vmatprep.mubr.f32.mxu0 0.0
        %4884 = vmatmul.mubr.f32.gmra.mrb[0].mxu0 %v4672
        %v4885 = vpop.f32.mrb[0].mxu0
        %v4886 = vadd.f32 0.0, %v4885
        %v4887 = vpop.f32.mrb[0].mxu0
        %4888 = vmatprep.mubr.f32.mxu0 0.0
        %4889 = vmatmul.mubr.f32.gmra.mrb[0].mxu0 %v4675
        %v4890 = vpop.f32.mrb[0].mxu0
        %v4891 = vadd.f32 0.0, %v4890
        %v4892 = vpop.f32.mrb[0].mxu0
        %4893 = vmatprep.mubr.f32.mxu0 0.0
        %4894 = vmatmul.mubr.f32.gmra.mrb[0].mxu0 %v4678
        %v4895 = vpop.f32.mrb[0].mxu0
        %v4896 = vadd.f32 0.0, %v4895
        %v4897 = vpop.f32.mrb[0].mxu0
        %4898 = vmatprep.mubr.f32.mxu0 0.0
        %4899 = vmatmul.mubr.f32.gmra.mrb[0].mxu0 %v4681
        %v4900 = vpop.f32.mrb[0].mxu0
        %v4901 = vadd.f32 0.0, %v4900
        %v4902 = vpop.f32.mrb[0].mxu0
        %4903 = vmatprep.mubr.f32.mxu0 0.0
        %4904 = vmatmul.mubr.f32.gmra.mrb[0].mxu0 %v4684
        %v4905 = vpop.f32.mrb[0].mxu0
        %v4906 = vadd.f32 0.0, %v4905
        %v4907 = vpop.f32.mrb[0].mxu0
        %4908 = vmatprep.mubr.f32.mxu0 0.0
        %4909 = vmatmul.mubr.f32.gmra.mrb[0].mxu0 %v4687
        %v4910 = vpop.f32.mrb[0].mxu0
        %v4911 = vadd.f32 0.0, %v4910
        %v4912 = vpop.f32.mrb[0].mxu0
        %4913 = vdwg.mxu0
        %v4914 = vadd.f32 %v4556, %v4756
        %v4915 = vadd.f32 %v4557, %v4761
        %v4916 = vadd.f32 %v4558, %v4766
        %v4917 = vadd.f32 %v4559, %v4771
        %v4918 = vadd.f32 %v4560, %v4776
        %v4919 = vadd.f32 %v4561, %v4781
        %v4920 = vadd.f32 %v4562, %v4786
        %v4921 = vadd.f32 %v4563, %v4791
        %v4922 = vadd.f32 %v4564, %v4796
        %v4923 = vadd.f32 %v4565, %v4801
        %v4924 = vadd.f32 %v4566, %v4806
        %v4925 = vadd.f32 %v4567, %v4811
        %v4926 = vadd.f32 %v4568, %v4816
        %v4927 = vadd.f32 %v4569, %v4821
        %v4928 = vadd.f32 %v4570, %v4826
        %v4929 = vadd.f32 %v4571, %v4831
        %v4930 = vadd.f32 %v4572, %v4836
        %v4931 = vadd.f32 %v4573, %v4841
        %v4932 = vadd.f32 %v4574, %v4846
        %v4933 = vadd.f32 %v4575, %v4851
        %v4934 = vadd.f32 %v4576, %v4856
        %v4935 = vadd.f32 %v4577, %v4861
        %v4936 = vadd.f32 %v4578, %v4866
        %v4937 = vadd.f32 %v4579, %v4871
        %v4938 = vadd.f32 %v4580, %v4876
        %v4939 = vadd.f32 %v4581, %v4881
        %v4940 = vadd.f32 %v4582, %v4886
        %v4941 = vadd.f32 %v4583, %v4891
        %v4942 = vadd.f32 %v4584, %v4896
        %v4943 = vadd.f32 %v4585, %v4901
        %v4944 = vadd.f32 %v4586, %v4906
        %v4945 = vadd.f32 %v4587, %v4911
        %4946 = vst.msk [vmem:[#allocation3] sm:$0xff] %vm1313, %v4914
        %4947 = vst.msk [vmem:[#allocation3 + $0x8] sm:$0xff] %vm1313, %v4915
        %4948 = vst.msk [vmem:[#allocation3 + $0x10] sm:$0xff] %vm1313, %v4916
        %4949 = vst.msk [vmem:[#allocation3 + $0x18] sm:$0xff] %vm1313, %v4917
        %4950 = vst.msk [vmem:[#allocation3 + $0x20] sm:$0xff] %vm1313, %v4918
        %4951 = vst.msk [vmem:[#allocation3 + $0x28] sm:$0xff] %vm1313, %v4919
        %4952 = vst.msk [vmem:[#allocation3 + $0x30] sm:$0xff] %vm1313, %v4920
        %4953 = vst.msk [vmem:[#allocation3 + $0x38] sm:$0xff] %vm1313, %v4921
        %4954 = vst.msk [vmem:[#allocation3 + $0x40] sm:$0xff] %vm1313, %v4922
        %4955 = vst.msk [vmem:[#allocation3 + $0x48] sm:$0xff] %vm1313, %v4923
        %4956 = vst.msk [vmem:[#allocation3 + $0x50] sm:$0xff] %vm1313, %v4924
        %4957 = vst.msk [vmem:[#allocation3 + $0x58] sm:$0xff] %vm1313, %v4925
        %4958 = vst.msk [vmem:[#allocation3 + $0x60] sm:$0xff] %vm1313, %v4926
        %4959 = vst.msk [vmem:[#allocation3 + $0x68] sm:$0xff] %vm1313, %v4927
        %4960 = vst.msk [vmem:[#allocation3 + $0x70] sm:$0xff] %vm1313, %v4928
        %4961 = vst.msk [vmem:[#allocation3 + $0x78] sm:$0xff] %vm1313, %v4929
        %4962 = vst.msk [vmem:[#allocation3 + $0x80] sm:$0xff] %vm1313, %v4930
        %4963 = vst.msk [vmem:[#allocation3 + $0x88] sm:$0xff] %vm1313, %v4931
        %4964 = vst.msk [vmem:[#allocation3 + $0x90] sm:$0xff] %vm1313, %v4932
        %4965 = vst.msk [vmem:[#allocation3 + $0x98] sm:$0xff] %vm1313, %v4933
        %4966 = vst.msk [vmem:[#allocation3 + $0xa0] sm:$0xff] %vm1313, %v4934
        %4967 = vst.msk [vmem:[#allocation3 + $0xa8] sm:$0xff] %vm1313, %v4935
        %4968 = vst.msk [vmem:[#allocation3 + $0xb0] sm:$0xff] %vm1313, %v4936
        %4969 = vst.msk [vmem:[#allocation3 + $0xb8] sm:$0xff] %vm1313, %v4937
        %4970 = vst.msk [vmem:[#allocation3 + $0xc0] sm:$0xff] %vm1313, %v4938
        %4971 = vst.msk [vmem:[#allocation3 + $0xc8] sm:$0xff] %vm1313, %v4939
        %4972 = vst.msk [vmem:[#allocation3 + $0xd0] sm:$0xff] %vm1313, %v4940
        %4973 = vst.msk [vmem:[#allocation3 + $0xd8] sm:$0xff] %vm1313, %v4941
        %4974 = vst.msk [vmem:[#allocation3 + $0xe0] sm:$0xff] %vm1313, %v4942
        %4975 = vst.msk [vmem:[#allocation3 + $0xe8] sm:$0xff] %vm1313, %v4943
        %4976 = vst.msk [vmem:[#allocation3 + $0xf0] sm:$0xff] %vm1313, %v4944
        %4977 = vst.msk [vmem:[#allocation3 + $0xf8] sm:$0xff] %vm1313, %v4945
        %v4978 = vld [vmem:[%s4069 + $0x2] sm:$0xff]
        %v4979 = vld [vmem:[%s4069 + $0xa] sm:$0xff]
        %v4980 = vld [vmem:[%s4069 + $0x1a] sm:$0xff]
        %v4981 = vld [vmem:[%s4069 + $0x22] sm:$0xff]
        %v4982 = vld [vmem:[%s4069 + $0x32] sm:$0xff]
        %v4983 = vld [vmem:[%s4069 + $0x3a] sm:$0xff]
        %v4984 = vld [vmem:[%s4069 + $0x4a] sm:$0xff]
        %v4985 = vld [vmem:[%s4069 + $0x52] sm:$0xff]
        %v4986 = vld [vmem:[%s4069 + $0x62] sm:$0xff]
        %v4987 = vld [vmem:[%s4069 + $0x6a] sm:$0xff]
        %v4988 = vld [vmem:[%s4069 + $0x7a] sm:$0xff]
        %v4989 = vld [vmem:[%s4069 + $0x82] sm:$0xff]
        %v4990 = vld [vmem:[%s4069 + $0x92] sm:$0xff]
        %v4991 = vld [vmem:[%s4069 + $0x9a] sm:$0xff]
        %v4992 = vld [vmem:[%s4069 + $0xaa] sm:$0xff]
        %v4993 = vld [vmem:[%s4069 + $0xb2] sm:$0xff]
        %v4994 = vld [vmem:[%s4069 + $0xc2] sm:$0xff]
        %v4995 = vld [vmem:[%s4069 + $0xca] sm:$0xff]
        %v4996 = vld [vmem:[%s4069 + $0xda] sm:$0xff]
        %v4997 = vld [vmem:[%s4069 + $0xe2] sm:$0xff]
        %v4998 = vld [vmem:[%s4069 + $0xf2] sm:$0xff]
        %v4999 = vld [vmem:[%s4069 + $0xfa] sm:$0xff]
        %v5000 = vld [vmem:[%s4069 + $0x10a] sm:$0xff]
        %v5001 = vld [vmem:[%s4069 + $0x112] sm:$0xff]
        %v5002 = vld [vmem:[%s4069 + $0x122] sm:$0xff]
        %v5003 = vld [vmem:[%s4069 + $0x12a] sm:$0xff]
        %v5004 = vld [vmem:[%s4069 + $0x13a] sm:$0xff]
        %v5005 = vld [vmem:[%s4069 + $0x142] sm:$0xff]
        %v5006 = vld [vmem:[%s4069 + $0x152] sm:$0xff]
        %v5007 = vld [vmem:[%s4069 + $0x15a] sm:$0xff]
        %v5008 = vld [vmem:[%s4069 + $0x16a] sm:$0xff]
        %v5009 = vld [vmem:[%s4069 + $0x172] sm:$0xff]
        %v5010 = vld [vmem:[#allocation3] sm:$0xff]
        %v5011 = vld [vmem:[#allocation3 + $0x8] sm:$0xff]
        %v5012 = vld [vmem:[#allocation3 + $0x10] sm:$0xff]
        %v5013 = vld [vmem:[#allocation3 + $0x18] sm:$0xff]
        %v5014 = vld [vmem:[#allocation3 + $0x20] sm:$0xff]
        %v5015 = vld [vmem:[#allocation3 + $0x28] sm:$0xff]
        %v5016 = vld [vmem:[#allocation3 + $0x30] sm:$0xff]
        %v5017 = vld [vmem:[#allocation3 + $0x38] sm:$0xff]
        %v5018 = vld [vmem:[#allocation3 + $0x40] sm:$0xff]
        %v5019 = vld [vmem:[#allocation3 + $0x48] sm:$0xff]
        %v5020 = vld [vmem:[#allocation3 + $0x50] sm:$0xff]
        %v5021 = vld [vmem:[#allocation3 + $0x58] sm:$0xff]
        %v5022 = vld [vmem:[#allocation3 + $0x60] sm:$0xff]
        %v5023 = vld [vmem:[#allocation3 + $0x68] sm:$0xff]
        %v5024 = vld [vmem:[#allocation3 + $0x70] sm:$0xff]
        %v5025 = vld [vmem:[#allocation3 + $0x78] sm:$0xff]
        %v5026 = vld [vmem:[#allocation3 + $0x80] sm:$0xff]
        %v5027 = vld [vmem:[#allocation3 + $0x88] sm:$0xff]
        %v5028 = vld [vmem:[#allocation3 + $0x90] sm:$0xff]
        %v5029 = vld [vmem:[#allocation3 + $0x98] sm:$0xff]
        %v5030 = vld [vmem:[#allocation3 + $0xa0] sm:$0xff]
        %v5031 = vld [vmem:[#allocation3 + $0xa8] sm:$0xff]
        %v5032 = vld [vmem:[#allocation3 + $0xb0] sm:$0xff]
        %v5033 = vld [vmem:[#allocation3 + $0xb8] sm:$0xff]
        %v5034 = vld [vmem:[#allocation3 + $0xc0] sm:$0xff]
        %v5035 = vld [vmem:[#allocation3 + $0xc8] sm:$0xff]
        %v5036 = vld [vmem:[#allocation3 + $0xd0] sm:$0xff]
        %v5037 = vld [vmem:[#allocation3 + $0xd8] sm:$0xff]
        %v5038 = vld [vmem:[#allocation3 + $0xe0] sm:$0xff]
        %v5039 = vld [vmem:[#allocation3 + $0xe8] sm:$0xff]
        %v5040 = vld [vmem:[#allocation3 + $0xf0] sm:$0xff]
        %v5041 = vld [vmem:[#allocation3 + $0xf8] sm:$0xff]
        %s5042 = scalar_lea.vmem [#allocation10], 256
        %v5043 = vld [vmem:[%s5042] sm:$0xff]
        %v5044 = vld [vmem:[%s5042 + $0x8] sm:$0xff]
        %v5045 = vld [vmem:[%s5042 + $0x10] sm:$0xff]
        %v5046 = vld [vmem:[%s5042 + $0x18] sm:$0xff]
        %v5048 = vsel %vm373, %v4978, 0
        %v5051 = vsel %vm373, %v4979, 0
        %v5054 = vsel %vm373, %v4980, 0
        %v5057 = vsel %vm373, %v4981, 0
        %v5060 = vsel %vm373, %v4982, 0
        %v5063 = vsel %vm373, %v4983, 0
        %v5066 = vsel %vm373, %v4984, 0
        %v5069 = vsel %vm373, %v4985, 0
        %v5072 = vsel %vm373, %v4986, 0
        %v5075 = vsel %vm373, %v4987, 0
        %v5078 = vsel %vm373, %v4988, 0
        %v5081 = vsel %vm373, %v4989, 0
        %v5084 = vsel %vm373, %v4990, 0
        %v5087 = vsel %vm373, %v4991, 0
        %v5090 = vsel %vm373, %v4992, 0
        %v5093 = vsel %vm373, %v4993, 0
        %v5096 = vsel %vm373, %v4994, 0
        %v5099 = vsel %vm373, %v4995, 0
        %v5102 = vsel %vm373, %v4996, 0
        %v5105 = vsel %vm373, %v4997, 0
        %v5108 = vsel %vm373, %v4998, 0
        %v5111 = vsel %vm373, %v4999, 0
        %v5114 = vsel %vm373, %v5000, 0
        %v5117 = vsel %vm373, %v5001, 0
        %v5120 = vsel %vm373, %v5002, 0
        %v5123 = vsel %vm373, %v5003, 0
        %v5126 = vsel %vm373, %v5004, 0
        %v5129 = vsel %vm373, %v5005, 0
        %v5132 = vsel %vm373, %v5006, 0
        %v5135 = vsel %vm373, %v5007, 0
        %v5138 = vsel %vm373, %v5008, 0
        %v5141 = vsel %vm373, %v5009, 0
        %5143 = vmatprep.subr.mxu0 0.0
        %5144 = vmatpush1.msra.mxu0 %v5043
        %5145 = vmatprep.subr.mxu0 0.0
        %5146 = vmatpush1.msra.mxu0 %v5044
        %5147 = vmatprep.subr.mxu0 0.0
        %5148 = vmatpush1.msra.mxu0 %v5045
        %5149 = vmatprep.subr.mxu0 0.0
        %5150 = vmatpush1.msra.mxu0 %v5046
        %5151 = vmatprep.subr.mxu0 0.0
        %5152 = vmatpush1.msra.mxu0 0.0
        %5153 = vmatprep.subr.mxu0 0.0
        %5154 = vmatpush1.msra.mxu0 0.0
        %5155 = vmatprep.subr.mxu0 0.0
        %5156 = vmatpush1.msra.mxu0 0.0
        %5157 = vmatprep.subr.mxu0 0.0
        %5158 = vmatpush1.msra.mxu0 0.0
        %5159 = vmatprep.subr.mxu0 0.0
        %5160 = vmatpush1.msra.mxu0 0.0
        %5161 = vmatprep.subr.mxu0 0.0
        %5162 = vmatpush1.msra.mxu0 0.0
        %5163 = vmatprep.subr.mxu0 0.0
        %5164 = vmatpush1.msra.mxu0 0.0
        %5165 = vmatprep.subr.mxu0 0.0
        %5166 = vmatpush1.msra.mxu0 0.0
        %5167 = vmatprep.subr.mxu0 0.0
        %5168 = vmatpush1.msra.mxu0 0.0
        %5169 = vmatprep.subr.mxu0 0.0
        %5170 = vmatpush1.msra.mxu0 0.0
        %5171 = vmatprep.subr.mxu0 0.0
        %5172 = vmatpush1.msra.mxu0 0.0
        %5173 = vmatprep.subr.mxu0 0.0
        %5174 = vmatpush1.msra.mxu0 0.0
        %5175 = vmatprep.subr.mxu0 0.0
        %5176 = vmatpush1.msra.mxu0 0.0
        %5177 = vmatprep.subr.mxu0 0.0
        %5178 = vmatpush1.msra.mxu0 0.0
        %5179 = vmatprep.subr.mxu0 0.0
        %5180 = vmatpush1.msra.mxu0 0.0
        %5181 = vmatprep.subr.mxu0 0.0
        %5182 = vmatpush1.msra.mxu0 0.0
        %5183 = vmatprep.subr.mxu0 0.0
        %5184 = vmatpush1.msra.mxu0 0.0
        %5185 = vmatprep.subr.mxu0 0.0
        %5186 = vmatpush1.msra.mxu0 0.0
        %5187 = vmatprep.subr.mxu0 0.0
        %5188 = vmatpush1.msra.mxu0 0.0
        %5189 = vmatprep.subr.mxu0 0.0
        %5190 = vmatpush1.msra.mxu0 0.0
        %5191 = vmatprep.subr.mxu0 0.0
        %5192 = vmatpush1.msra.mxu0 0.0
        %5193 = vmatprep.subr.mxu0 0.0
        %5194 = vmatpush1.msra.mxu0 0.0
        %5195 = vmatprep.subr.mxu0 0.0
        %5196 = vmatpush1.msra.mxu0 0.0
        %5197 = vmatprep.subr.mxu0 0.0
        %5198 = vmatpush1.msra.mxu0 0.0
        %5199 = vmatprep.subr.mxu0 0.0
        %5200 = vmatpush1.msra.mxu0 0.0
        %5201 = vmatprep.subr.mxu0 0.0
        %5202 = vmatpush1.msra.mxu0 0.0
        %5203 = vmatprep.subr.mxu0 0.0
        %5204 = vmatpush1.msra.mxu0 0.0
        %5205 = vmatprep.subr.mxu0 0.0
        %5206 = vmatpush1.msra.mxu0 0.0
        %5207 = vmatprep.mubr.f32.mxu0 0.0
        %5208 = vmatmul.mubr.f32.gmra.mrb[0].mxu0 %v5048
        %v5209 = vpop.f32.mrb[0].mxu0
        %v5210 = vadd.f32 0.0, %v5209
        %v5211 = vpop.f32.mrb[0].mxu0
        %5212 = vmatprep.mubr.f32.mxu0 0.0
        %5213 = vmatmul.mubr.f32.gmra.mrb[0].mxu0 %v5051
        %v5214 = vpop.f32.mrb[0].mxu0
        %v5215 = vadd.f32 0.0, %v5214
        %v5216 = vpop.f32.mrb[0].mxu0
        %5217 = vmatprep.mubr.f32.mxu0 0.0
        %5218 = vmatmul.mubr.f32.gmra.mrb[0].mxu0 %v5054
        %v5219 = vpop.f32.mrb[0].mxu0
        %v5220 = vadd.f32 0.0, %v5219
        %v5221 = vpop.f32.mrb[0].mxu0
        %5222 = vmatprep.mubr.f32.mxu0 0.0
        %5223 = vmatmul.mubr.f32.gmra.mrb[0].mxu0 %v5057
        %v5224 = vpop.f32.mrb[0].mxu0
        %v5225 = vadd.f32 0.0, %v5224
        %v5226 = vpop.f32.mrb[0].mxu0
        %5227 = vmatprep.mubr.f32.mxu0 0.0
        %5228 = vmatmul.mubr.f32.gmra.mrb[0].mxu0 %v5060
        %v5229 = vpop.f32.mrb[0].mxu0
        %v5230 = vadd.f32 0.0, %v5229
        %v5231 = vpop.f32.mrb[0].mxu0
        %5232 = vmatprep.mubr.f32.mxu0 0.0
        %5233 = vmatmul.mubr.f32.gmra.mrb[0].mxu0 %v5063
        %v5234 = vpop.f32.mrb[0].mxu0
        %v5235 = vadd.f32 0.0, %v5234
        %v5236 = vpop.f32.mrb[0].mxu0
        %5237 = vmatprep.mubr.f32.mxu0 0.0
        %5238 = vmatmul.mubr.f32.gmra.mrb[0].mxu0 %v5066
        %v5239 = vpop.f32.mrb[0].mxu0
        %v5240 = vadd.f32 0.0, %v5239
        %v5241 = vpop.f32.mrb[0].mxu0
        %5242 = vmatprep.mubr.f32.mxu0 0.0
        %5243 = vmatmul.mubr.f32.gmra.mrb[0].mxu0 %v5069
        %v5244 = vpop.f32.mrb[0].mxu0
        %v5245 = vadd.f32 0.0, %v5244
        %v5246 = vpop.f32.mrb[0].mxu0
        %5247 = vmatprep.mubr.f32.mxu0 0.0
        %5248 = vmatmul.mubr.f32.gmra.mrb[0].mxu0 %v5072
        %v5249 = vpop.f32.mrb[0].mxu0
        %v5250 = vadd.f32 0.0, %v5249
        %v5251 = vpop.f32.mrb[0].mxu0
        %5252 = vmatprep.mubr.f32.mxu0 0.0
        %5253 = vmatmul.mubr.f32.gmra.mrb[0].mxu0 %v5075
        %v5254 = vpop.f32.mrb[0].mxu0
        %v5255 = vadd.f32 0.0, %v5254
        %v5256 = vpop.f32.mrb[0].mxu0
        %5257 = vmatprep.mubr.f32.mxu0 0.0
        %5258 = vmatmul.mubr.f32.gmra.mrb[0].mxu0 %v5078
        %v5259 = vpop.f32.mrb[0].mxu0
        %v5260 = vadd.f32 0.0, %v5259
        %v5261 = vpop.f32.mrb[0].mxu0
        %5262 = vmatprep.mubr.f32.mxu0 0.0
        %5263 = vmatmul.mubr.f32.gmra.mrb[0].mxu0 %v5081
        %v5264 = vpop.f32.mrb[0].mxu0
        %v5265 = vadd.f32 0.0, %v5264
        %v5266 = vpop.f32.mrb[0].mxu0
        %5267 = vmatprep.mubr.f32.mxu0 0.0
        %5268 = vmatmul.mubr.f32.gmra.mrb[0].mxu0 %v5084
        %v5269 = vpop.f32.mrb[0].mxu0
        %v5270 = vadd.f32 0.0, %v5269
        %v5271 = vpop.f32.mrb[0].mxu0
        %5272 = vmatprep.mubr.f32.mxu0 0.0
        %5273 = vmatmul.mubr.f32.gmra.mrb[0].mxu0 %v5087
        %v5274 = vpop.f32.mrb[0].mxu0
        %v5275 = vadd.f32 0.0, %v5274
        %v5276 = vpop.f32.mrb[0].mxu0
        %5277 = vmatprep.mubr.f32.mxu0 0.0
        %5278 = vmatmul.mubr.f32.gmra.mrb[0].mxu0 %v5090
        %v5279 = vpop.f32.mrb[0].mxu0
        %v5280 = vadd.f32 0.0, %v5279
        %v5281 = vpop.f32.mrb[0].mxu0
        %5282 = vmatprep.mubr.f32.mxu0 0.0
        %5283 = vmatmul.mubr.f32.gmra.mrb[0].mxu0 %v5093
        %v5284 = vpop.f32.mrb[0].mxu0
        %v5285 = vadd.f32 0.0, %v5284
        %v5286 = vpop.f32.mrb[0].mxu0
        %5287 = vmatprep.mubr.f32.mxu0 0.0
        %5288 = vmatmul.mubr.f32.gmra.mrb[0].mxu0 %v5096
        %v5289 = vpop.f32.mrb[0].mxu0
        %v5290 = vadd.f32 0.0, %v5289
        %v5291 = vpop.f32.mrb[0].mxu0
        %5292 = vmatprep.mubr.f32.mxu0 0.0
        %5293 = vmatmul.mubr.f32.gmra.mrb[0].mxu0 %v5099
        %v5294 = vpop.f32.mrb[0].mxu0
        %v5295 = vadd.f32 0.0, %v5294
        %v5296 = vpop.f32.mrb[0].mxu0
        %5297 = vmatprep.mubr.f32.mxu0 0.0
        %5298 = vmatmul.mubr.f32.gmra.mrb[0].mxu0 %v5102
        %v5299 = vpop.f32.mrb[0].mxu0
        %v5300 = vadd.f32 0.0, %v5299
        %v5301 = vpop.f32.mrb[0].mxu0
        %5302 = vmatprep.mubr.f32.mxu0 0.0
        %5303 = vmatmul.mubr.f32.gmra.mrb[0].mxu0 %v5105
        %v5304 = vpop.f32.mrb[0].mxu0
        %v5305 = vadd.f32 0.0, %v5304
        %v5306 = vpop.f32.mrb[0].mxu0
        %5307 = vmatprep.mubr.f32.mxu0 0.0
        %5308 = vmatmul.mubr.f32.gmra.mrb[0].mxu0 %v5108
        %v5309 = vpop.f32.mrb[0].mxu0
        %v5310 = vadd.f32 0.0, %v5309
        %v5311 = vpop.f32.mrb[0].mxu0
        %5312 = vmatprep.mubr.f32.mxu0 0.0
        %5313 = vmatmul.mubr.f32.gmra.mrb[0].mxu0 %v5111
        %v5314 = vpop.f32.mrb[0].mxu0
        %v5315 = vadd.f32 0.0, %v5314
        %v5316 = vpop.f32.mrb[0].mxu0
        %5317 = vmatprep.mubr.f32.mxu0 0.0
        %5318 = vmatmul.mubr.f32.gmra.mrb[0].mxu0 %v5114
        %v5319 = vpop.f32.mrb[0].mxu0
        %v5320 = vadd.f32 0.0, %v5319
        %v5321 = vpop.f32.mrb[0].mxu0
        %5322 = vmatprep.mubr.f32.mxu0 0.0
        %5323 = vmatmul.mubr.f32.gmra.mrb[0].mxu0 %v5117
        %v5324 = vpop.f32.mrb[0].mxu0
        %v5325 = vadd.f32 0.0, %v5324
        %v5326 = vpop.f32.mrb[0].mxu0
        %5327 = vmatprep.mubr.f32.mxu0 0.0
        %5328 = vmatmul.mubr.f32.gmra.mrb[0].mxu0 %v5120
        %v5329 = vpop.f32.mrb[0].mxu0
        %v5330 = vadd.f32 0.0, %v5329
        %v5331 = vpop.f32.mrb[0].mxu0
        %5332 = vmatprep.mubr.f32.mxu0 0.0
        %5333 = vmatmul.mubr.f32.gmra.mrb[0].mxu0 %v5123
        %v5334 = vpop.f32.mrb[0].mxu0
        %v5335 = vadd.f32 0.0, %v5334
        %v5336 = vpop.f32.mrb[0].mxu0
        %5337 = vmatprep.mubr.f32.mxu0 0.0
        %5338 = vmatmul.mubr.f32.gmra.mrb[0].mxu0 %v5126
        %v5339 = vpop.f32.mrb[0].mxu0
        %v5340 = vadd.f32 0.0, %v5339
        %v5341 = vpop.f32.mrb[0].mxu0
        %5342 = vmatprep.mubr.f32.mxu0 0.0
        %5343 = vmatmul.mubr.f32.gmra.mrb[0].mxu0 %v5129
        %v5344 = vpop.f32.mrb[0].mxu0
        %v5345 = vadd.f32 0.0, %v5344
        %v5346 = vpop.f32.mrb[0].mxu0
        %5347 = vmatprep.mubr.f32.mxu0 0.0
        %5348 = vmatmul.mubr.f32.gmra.mrb[0].mxu0 %v5132
        %v5349 = vpop.f32.mrb[0].mxu0
        %v5350 = vadd.f32 0.0, %v5349
        %v5351 = vpop.f32.mrb[0].mxu0
        %5352 = vmatprep.mubr.f32.mxu0 0.0
        %5353 = vmatmul.mubr.f32.gmra.mrb[0].mxu0 %v5135
        %v5354 = vpop.f32.mrb[0].mxu0
        %v5355 = vadd.f32 0.0, %v5354
        %v5356 = vpop.f32.mrb[0].mxu0
        %5357 = vmatprep.mubr.f32.mxu0 0.0
        %5358 = vmatmul.mubr.f32.gmra.mrb[0].mxu0 %v5138
        %v5359 = vpop.f32.mrb[0].mxu0
        %v5360 = vadd.f32 0.0, %v5359
        %v5361 = vpop.f32.mrb[0].mxu0
        %5362 = vmatprep.mubr.f32.mxu0 0.0
        %5363 = vmatmul.mubr.f32.gmra.mrb[0].mxu0 %v5141
        %v5364 = vpop.f32.mrb[0].mxu0
        %v5365 = vadd.f32 0.0, %v5364
        %v5366 = vpop.f32.mrb[0].mxu0
        %5367 = vdwg.mxu0
        %v5368 = vadd.f32 %v5010, %v5210
        %v5369 = vadd.f32 %v5011, %v5215
        %v5370 = vadd.f32 %v5012, %v5220
        %v5371 = vadd.f32 %v5013, %v5225
        %v5372 = vadd.f32 %v5014, %v5230
        %v5373 = vadd.f32 %v5015, %v5235
        %v5374 = vadd.f32 %v5016, %v5240
        %v5375 = vadd.f32 %v5017, %v5245
        %v5376 = vadd.f32 %v5018, %v5250
        %v5377 = vadd.f32 %v5019, %v5255
        %v5378 = vadd.f32 %v5020, %v5260
        %v5379 = vadd.f32 %v5021, %v5265
        %v5380 = vadd.f32 %v5022, %v5270
        %v5381 = vadd.f32 %v5023, %v5275
        %v5382 = vadd.f32 %v5024, %v5280
        %v5383 = vadd.f32 %v5025, %v5285
        %v5384 = vadd.f32 %v5026, %v5290
        %v5385 = vadd.f32 %v5027, %v5295
        %v5386 = vadd.f32 %v5028, %v5300
        %v5387 = vadd.f32 %v5029, %v5305
        %v5388 = vadd.f32 %v5030, %v5310
        %v5389 = vadd.f32 %v5031, %v5315
        %v5390 = vadd.f32 %v5032, %v5320
        %v5391 = vadd.f32 %v5033, %v5325
        %v5392 = vadd.f32 %v5034, %v5330
        %v5393 = vadd.f32 %v5035, %v5335
        %v5394 = vadd.f32 %v5036, %v5340
        %v5395 = vadd.f32 %v5037, %v5345
        %v5396 = vadd.f32 %v5038, %v5350
        %v5397 = vadd.f32 %v5039, %v5355
        %v5398 = vadd.f32 %v5040, %v5360
        %v5399 = vadd.f32 %v5041, %v5365
        %5400 = vst.msk [vmem:[#allocation3] sm:$0xff] %vm1313, %v5368
        %5401 = vst.msk [vmem:[#allocation3 + $0x8] sm:$0xff] %vm1313, %v5369
        %5402 = vst.msk [vmem:[#allocation3 + $0x10] sm:$0xff] %vm1313, %v5370
        %5403 = vst.msk [vmem:[#allocation3 + $0x18] sm:$0xff] %vm1313, %v5371
        %5404 = vst.msk [vmem:[#allocation3 + $0x20] sm:$0xff] %vm1313, %v5372
        %5405 = vst.msk [vmem:[#allocation3 + $0x28] sm:$0xff] %vm1313, %v5373
        %5406 = vst.msk [vmem:[#allocation3 + $0x30] sm:$0xff] %vm1313, %v5374
        %5407 = vst.msk [vmem:[#allocation3 + $0x38] sm:$0xff] %vm1313, %v5375
        %5408 = vst.msk [vmem:[#allocation3 + $0x40] sm:$0xff] %vm1313, %v5376
        %5409 = vst.msk [vmem:[#allocation3 + $0x48] sm:$0xff] %vm1313, %v5377
        %5410 = vst.msk [vmem:[#allocation3 + $0x50] sm:$0xff] %vm1313, %v5378
        %5411 = vst.msk [vmem:[#allocation3 + $0x58] sm:$0xff] %vm1313, %v5379
        %5412 = vst.msk [vmem:[#allocation3 + $0x60] sm:$0xff] %vm1313, %v5380
        %5413 = vst.msk [vmem:[#allocation3 + $0x68] sm:$0xff] %vm1313, %v5381
        %5414 = vst.msk [vmem:[#allocation3 + $0x70] sm:$0xff] %vm1313, %v5382
        %5415 = vst.msk [vmem:[#allocation3 + $0x78] sm:$0xff] %vm1313, %v5383
        %5416 = vst.msk [vmem:[#allocation3 + $0x80] sm:$0xff] %vm1313, %v5384
        %5417 = vst.msk [vmem:[#allocation3 + $0x88] sm:$0xff] %vm1313, %v5385
        %5418 = vst.msk [vmem:[#allocation3 + $0x90] sm:$0xff] %vm1313, %v5386
        %5419 = vst.msk [vmem:[#allocation3 + $0x98] sm:$0xff] %vm1313, %v5387
        %5420 = vst.msk [vmem:[#allocation3 + $0xa0] sm:$0xff] %vm1313, %v5388
        %5421 = vst.msk [vmem:[#allocation3 + $0xa8] sm:$0xff] %vm1313, %v5389
        %5422 = vst.msk [vmem:[#allocation3 + $0xb0] sm:$0xff] %vm1313, %v5390
        %5423 = vst.msk [vmem:[#allocation3 + $0xb8] sm:$0xff] %vm1313, %v5391
        %5424 = vst.msk [vmem:[#allocation3 + $0xc0] sm:$0xff] %vm1313, %v5392
        %5425 = vst.msk [vmem:[#allocation3 + $0xc8] sm:$0xff] %vm1313, %v5393
        %5426 = vst.msk [vmem:[#allocation3 + $0xd0] sm:$0xff] %vm1313, %v5394
        %5427 = vst.msk [vmem:[#allocation3 + $0xd8] sm:$0xff] %vm1313, %v5395
        %5428 = vst.msk [vmem:[#allocation3 + $0xe0] sm:$0xff] %vm1313, %v5396
        %5429 = vst.msk [vmem:[#allocation3 + $0xe8] sm:$0xff] %vm1313, %v5397
        %5430 = vst.msk [vmem:[#allocation3 + $0xf0] sm:$0xff] %vm1313, %v5398
        %5431 = vst.msk [vmem:[#allocation3 + $0xf8] sm:$0xff] %vm1313, %v5399
        %v5432 = vld [vmem:[#allocation3] sm:$0xff]
        %v5433 = vld [vmem:[#allocation3 + $0x8] sm:$0xff]
        %v5434 = vld [vmem:[#allocation3 + $0x10] sm:$0xff]
        %v5435 = vld [vmem:[#allocation3 + $0x18] sm:$0xff]
        %v5436 = vld [vmem:[#allocation3 + $0x20] sm:$0xff]
        %v5437 = vld [vmem:[#allocation3 + $0x28] sm:$0xff]
        %v5438 = vld [vmem:[#allocation3 + $0x30] sm:$0xff]
        %v5439 = vld [vmem:[#allocation3 + $0x38] sm:$0xff]
        %v5440 = vld [vmem:[#allocation3 + $0x40] sm:$0xff]
        %v5441 = vld [vmem:[#allocation3 + $0x48] sm:$0xff]
        %v5442 = vld [vmem:[#allocation3 + $0x50] sm:$0xff]
        %v5443 = vld [vmem:[#allocation3 + $0x58] sm:$0xff]
        %v5444 = vld [vmem:[#allocation3 + $0x60] sm:$0xff]
        %v5445 = vld [vmem:[#allocation3 + $0x68] sm:$0xff]
        %v5446 = vld [vmem:[#allocation3 + $0x70] sm:$0xff]
        %v5447 = vld [vmem:[#allocation3 + $0x78] sm:$0xff]
        %v5448 = vld [vmem:[#allocation3 + $0x80] sm:$0xff]
        %v5449 = vld [vmem:[#allocation3 + $0x88] sm:$0xff]
        %v5450 = vld [vmem:[#allocation3 + $0x90] sm:$0xff]
        %v5451 = vld [vmem:[#allocation3 + $0x98] sm:$0xff]
        %v5452 = vld [vmem:[#allocation3 + $0xa0] sm:$0xff]
        %v5453 = vld [vmem:[#allocation3 + $0xa8] sm:$0xff]
        %v5454 = vld [vmem:[#allocation3 + $0xb0] sm:$0xff]
        %v5455 = vld [vmem:[#allocation3 + $0xb8] sm:$0xff]
        %v5456 = vld [vmem:[#allocation3 + $0xc0] sm:$0xff]
        %v5457 = vld [vmem:[#allocation3 + $0xc8] sm:$0xff]
        %v5458 = vld [vmem:[#allocation3 + $0xd0] sm:$0xff]
        %v5459 = vld [vmem:[#allocation3 + $0xd8] sm:$0xff]
        %v5460 = vld [vmem:[#allocation3 + $0xe0] sm:$0xff]
        %v5461 = vld [vmem:[#allocation3 + $0xe8] sm:$0xff]
        %v5462 = vld [vmem:[#allocation3 + $0xf0] sm:$0xff]
        %v5463 = vld [vmem:[#allocation3 + $0xf8] sm:$0xff]
        %v5464 = vld [vmem:[%s6] sm:$0x1]
        %v5466 = vlaneseq
        %v5467 = vshrl.u32 %v5466, 7
        %v5468 = vsub.s32 0, %v5467
        %v5469 = vrot.slane %v5464, %v5468
        %v5471 = vadd.f32 %v5432, %v5469
        %v5472 = vadd.f32 %v5433, %v5469
        %v5473 = vadd.f32 %v5434, %v5469
        %v5474 = vadd.f32 %v5435, %v5469
        %v5475 = vadd.f32 %v5436, %v5469
        %v5476 = vadd.f32 %v5437, %v5469
        %v5477 = vadd.f32 %v5438, %v5469
        %v5478 = vadd.f32 %v5439, %v5469
        %v5479 = vadd.f32 %v5440, %v5469
        %v5480 = vadd.f32 %v5441, %v5469
        %v5481 = vadd.f32 %v5442, %v5469
        %v5482 = vadd.f32 %v5443, %v5469
        %v5483 = vadd.f32 %v5444, %v5469
        %v5484 = vadd.f32 %v5445, %v5469
        %v5485 = vadd.f32 %v5446, %v5469
        %v5486 = vadd.f32 %v5447, %v5469
        %v5487 = vadd.f32 %v5448, %v5469
        %v5488 = vadd.f32 %v5449, %v5469
        %v5489 = vadd.f32 %v5450, %v5469
        %v5490 = vadd.f32 %v5451, %v5469
        %v5491 = vadd.f32 %v5452, %v5469
        %v5492 = vadd.f32 %v5453, %v5469
        %v5493 = vadd.f32 %v5454, %v5469
        %v5494 = vadd.f32 %v5455, %v5469
        %v5495 = vadd.f32 %v5456, %v5469
        %v5496 = vadd.f32 %v5457, %v5469
        %v5497 = vadd.f32 %v5458, %v5469
        %v5498 = vadd.f32 %v5459, %v5469
        %v5499 = vadd.f32 %v5460, %v5469
        %v5500 = vadd.f32 %v5461, %v5469
        %v5501 = vadd.f32 %v5462, %v5469
        %v5502 = vadd.f32 %v5463, %v5469
        %5503 = vst.msk [vmem:[%s340] sm:$0xff] %vm1313, %v5471
        %5504 = vst.msk [vmem:[%s340 + $0x8] sm:$0xff] %vm1313, %v5472
        %5505 = vst.msk [vmem:[%s340 + $0x10] sm:$0xff] %vm1313, %v5473
        %5506 = vst.msk [vmem:[%s340 + $0x18] sm:$0xff] %vm1313, %v5474
        %5507 = vst.msk [vmem:[%s340 + $0x20] sm:$0xff] %vm1313, %v5475
        %5508 = vst.msk [vmem:[%s340 + $0x28] sm:$0xff] %vm1313, %v5476
        %5509 = vst.msk [vmem:[%s340 + $0x30] sm:$0xff] %vm1313, %v5477
        %5510 = vst.msk [vmem:[%s340 + $0x38] sm:$0xff] %vm1313, %v5478
        %5511 = vst.msk [vmem:[%s340 + $0x40] sm:$0xff] %vm1313, %v5479
        %5512 = vst.msk [vmem:[%s340 + $0x48] sm:$0xff] %vm1313, %v5480
        %5513 = vst.msk [vmem:[%s340 + $0x50] sm:$0xff] %vm1313, %v5481
        %5514 = vst.msk [vmem:[%s340 + $0x58] sm:$0xff] %vm1313, %v5482
        %5515 = vst.msk [vmem:[%s340 + $0x60] sm:$0xff] %vm1313, %v5483
        %5516 = vst.msk [vmem:[%s340 + $0x68] sm:$0xff] %vm1313, %v5484
        %5517 = vst.msk [vmem:[%s340 + $0x70] sm:$0xff] %vm1313, %v5485
        %5518 = vst.msk [vmem:[%s340 + $0x78] sm:$0xff] %vm1313, %v5486
        %5519 = vst.msk [vmem:[%s340 + $0x80] sm:$0xff] %vm1313, %v5487
        %5520 = vst.msk [vmem:[%s340 + $0x88] sm:$0xff] %vm1313, %v5488
        %5521 = vst.msk [vmem:[%s340 + $0x90] sm:$0xff] %vm1313, %v5489
        %5522 = vst.msk [vmem:[%s340 + $0x98] sm:$0xff] %vm1313, %v5490
        %5523 = vst.msk [vmem:[%s340 + $0xa0] sm:$0xff] %vm1313, %v5491
        %5524 = vst.msk [vmem:[%s340 + $0xa8] sm:$0xff] %vm1313, %v5492
        %5525 = vst.msk [vmem:[%s340 + $0xb0] sm:$0xff] %vm1313, %v5493
        %5526 = vst.msk [vmem:[%s340 + $0xb8] sm:$0xff] %vm1313, %v5494
        %5527 = vst.msk [vmem:[%s340 + $0xc0] sm:$0xff] %vm1313, %v5495
        %5528 = vst.msk [vmem:[%s340 + $0xc8] sm:$0xff] %vm1313, %v5496
        %5529 = vst.msk [vmem:[%s340 + $0xd0] sm:$0xff] %vm1313, %v5497
        %5530 = vst.msk [vmem:[%s340 + $0xd8] sm:$0xff] %vm1313, %v5498
        %5531 = vst.msk [vmem:[%s340 + $0xe0] sm:$0xff] %vm1313, %v5499
        %5532 = vst.msk [vmem:[%s340 + $0xe8] sm:$0xff] %vm1313, %v5500
        %5533 = vst.msk [vmem:[%s340 + $0xf0] sm:$0xff] %vm1313, %v5501
        %5534 = vst.msk [vmem:[%s340 + $0xf8] sm:$0xff] %vm1313, %v5502
        %s5535 = sand.u32 %s186, 1
        %s5536 = scalar_lea.sflag [#allocation6], %s5535
        %s5537 = sand.u32 %s186, 1
        %s5538 = smul.addr %s5537, 256
        %s5539 = scalar_lea.vmem [#allocation12], %s5538
        // Predicated region
        $region65: #{tpu_custom_call.1} parent=47 // pred_check
          %p5540 = pneg %p196
        $region66: #{tpu_custom_call.1} parent=47 // pred_check_branch
          %5542 = sbr.rel (%p5540) target = $region68
        $region67: #{tpu_custom_call.1} parent=47 // pred_region
          %s5544 = ssub.s32 4096, 4096
          %5545 = vsyncadd %s5536, %s5544
          %s5546 = smul.addr %s26, 32
          %s5547 = smul.addr %s5546, 128
          %s5548 = scalar_lea.hbm %s7, %s5547
          %s5549 = sshll.u32 %s5539, 4
          %s5550 = int_to_ptr.vmem [resolvable:$true] %s5549
          %5555 = dma.vmem_to_hbm [thread:$0]  %s5550, 4096, %s5548, %s5536, 128, 128, 8
        $region68: #{tpu_custom_call.1} parent=47 // pred_fallthru
          _
      $region48: #{tpu_custom_call.1} parent=5 // pred_fallthru
        _
      %p5556 = scmp.le.s32.totalorder 2, %s21
      // Predicated region
      $region69: #{tpu_custom_call.1} parent=5 // pred_check
        %p5557 = pneg %p5556
      $region70: #{tpu_custom_call.1} parent=5 // pred_check_branch
        %5559 = sbr.rel (%p5557) target = $region72
      $region71: #{tpu_custom_call.1} parent=5 // pred_region
        %s5560 = ssub.s32 %s21, 2
        // Predicated region
        $region73: #{tpu_custom_call.1} parent=71 // pred_check
          %p5561 = pneg %p202
        $region74: #{tpu_custom_call.1} parent=71 // pred_check_branch
          %5563 = sbr.rel (%p5561) target = $region76
        $region75: #{tpu_custom_call.1} parent=71 // pred_region
          %s5564 = sand.u32 %s187, 1
          %s5565 = scalar_lea.sflag [#allocation6], %s5564
          %s5566 = sand.u32 %s187, 1
          %s5567 = smul.addr %s5566, 256
          %s5568 = scalar_lea.vmem [#allocation12], %s5567
          %5569 = dma.done %s5565, 4096
        $region76: #{tpu_custom_call.1} parent=71 // pred_fallthru
          _
      $region72: #{tpu_custom_call.1} parent=5 // pred_fallthru
        _
    $region6: #{tpu_custom_call.1} parent=1 // loop_footer
      %s25 = sadd.s32 1, %s21
    $region7: #{tpu_custom_call.1} parent=1 // loop_footer_branch
      %20 = sbr.rel target = $region3
    $region8: #{tpu_custom_call.1} parent=1 // loop_exit
      _
    %5570 = vsyncpa [#allocation5], 1
    %s5571 = scalar_lea.sflag [#allocation5], 1
    %5572 = vsyncpa %s5571, 1
    %5573 = vsyncpa [#allocation8], 1
    %5574 = vsyncpa [#allocation11], 1
    %5575 = vsyncpa [#allocation6], 1
    %s5576 = scalar_lea.sflag [#allocation6], 1
    %5577 = vsyncpa %s5576, 1

</llo_original>
